<compile_context>
chip_gen: v5e
topology: v5e:2x2
jax: 0.10.0
libtpu: 0.0.40
codegen_flags: <defaults>
</compile_context>

<pallas_src>
import functools

import jax
import jax.numpy as jnp
import numpy as np
from jax import lax
from jax.experimental import pallas as pl
from jax.experimental.pallas import tpu as pltpu


_ACTS = {
    "relu": lambda v: jnp.maximum(v, 0.0),
    "sigmoid": jax.nn.sigmoid,
}


def _im2col_slab(x, k, s, d, Ho, Wo):
    # x: (H, W, C) -> (Ho*Wo, k*k*C), tap-major / channel-minor column order.
    C = x.shape[-1]
    taps = []
    for dy in range(k):
        for dx in range(k):
            taps.append(
                lax.slice(
                    x,
                    (dy * d, dx * d, 0),
                    (dy * d + (Ho - 1) * s + 1, dx * d + (Wo - 1) * s + 1, C),
                    (s, s, 1),
                )
            )
    slab = jnp.concatenate(taps, axis=-1)            # (Ho, Wo, k*k*C)
    return slab.reshape(Ho * Wo, k * k * C)


def _make_conv_act_kernel(Ho, Wo, k, s, d, act_fn):
    def kernel(x_ref, w_ref, b_ref, o_ref):
        slab = _im2col_slab(x_ref[0], k, s, d, Ho, Wo)
        y = jnp.dot(slab, w_ref[...], preferred_element_type=jnp.float32)
        y = act_fn(y + b_ref[...])                   # (Ho*Wo, M*f_o)
        o_ref[0] = y.reshape(Ho, Wo, -1).astype(o_ref.dtype)
    return kernel


def _make_conv_act_pool_fc_kernel(Ho, Wo, k, s, d, act_fn):
    # Last conv layer fused with global avg-pool and ModularLinear fc.
    def kernel(x_ref, w_ref, b_ref, fcw_ref, fcb_ref, o_ref):
        slab = _im2col_slab(x_ref[0], k, s, d, Ho, Wo)
        y = jnp.dot(slab, w_ref[...], preferred_element_type=jnp.float32)
        y = act_fn(y + b_ref[...])                   # (Ho*Wo, M*f_last)
        pooled = jnp.mean(y, axis=0, keepdims=True)  # AvgPool2d over all spatial
        out = jnp.dot(pooled, fcw_ref[...], preferred_element_type=jnp.float32)
        o_ref[0] = (out + fcb_ref[...]).astype(o_ref.dtype)
    return kernel


def _fc_kernel(x_ref, w_ref, b_ref, o_ref):
    out = jnp.dot(x_ref[0], w_ref[...], preferred_element_type=jnp.float32)
    o_ref[0] = (out + b_ref[...]).astype(o_ref.dtype)


def _pack_conv_weight(Wc, M, first_layer):
    # Wc: (M, f_o, f_i, k, k) — PyTorch grouped-conv weight split per module.
    _, f_o, f_i, k, _ = Wc.shape
    if first_layer:
        # x.repeat(1, M, 1, 1): every group reads the ORIGINAL f_i channels,
        # so pack densely -> (k*k*f_i, M*f_o); no block-diag zeros, no input copy.
        Wt = jnp.transpose(Wc, (3, 4, 2, 0, 1))      # (k, k, f_i, M, f_o)
        return Wt.reshape(k * k * f_i, M * f_o)
    # Later layers: true grouped conv -> block-diagonal (k*k*M*f_i, M*f_o).
    Wt = jnp.transpose(Wc, (3, 4, 0, 2, 1))          # (k, k, M, f_i, f_o)
    eye = jnp.eye(M, dtype=Wc.dtype)
    Wbd = jnp.einsum("abgic,gh->abgihc", Wt, eye)    # (k, k, M, f_i, M, f_o)
    return Wbd.reshape(k * k * M * f_i, M * f_o)


def _pack_fc_weight(Wfc, M):
    # Wfc: (M, in_features, out) -> block-diagonal (M*in_features, M*out).
    eye = jnp.eye(M, dtype=Wfc.dtype)
    Wbd = jnp.einsum("gio,gh->giho", Wfc, eye)       # (M, in, M, out)
    return Wbd.reshape(Wfc.shape[0] * Wfc.shape[1], M * Wfc.shape[2])


def conv_model_forward(x, conv_params, fc_params, *, num_modules, kernel_sizes,
                       strides, dilations, activation, final_layer):
    M = num_modules
    act_fn = _ACTS[activation]
    B, _, H, W = x.shape

    # Single NCHW -> NHWC transpose; the channel-repeat is folded into weights.
    h = jnp.transpose(x, (0, 2, 3, 1))
    cur_H, cur_W = H, W
    n_layers = len(conv_params)

    for li, (Wc, bc) in enumerate(conv_params):
        k, s, d = kernel_sizes[li], strides[li], dilations[li]
        f_o = Wc.shape[1]
        Ho = (cur_H - d * (k - 1) - 1) // s + 1
        Wo = (cur_W - d * (k - 1) - 1) // s + 1
        Wp = _pack_conv_weight(Wc, M, first_layer=(li == 0))
        bp = bc.reshape(1, M * f_o)
        n_out = M * f_o
        last = li == n_layers - 1

        if last and final_layer == "avg":
            Wfc, bfc = fc_params
            out_dim = Wfc.shape[2]
            Wfc_p = _pack_fc_weight(Wfc, M)
            bfc_p = bfc.reshape(1, M * out_dim)
            out = pl.pallas_call(
                _make_conv_act_pool_fc_kernel(Ho, Wo, k, s, d, act_fn),
                out_shape=jax.ShapeDtypeStruct((B, 1, M * out_dim), jnp.float32),
                grid=(B,),
                in_specs=[
                    pl.BlockSpec((1, cur_H, cur_W, h.shape[-1]),
                                 lambda b: (b, 0, 0, 0)),
                    pl.BlockSpec(Wp.shape, lambda b: (0, 0)),
                    pl.BlockSpec(bp.shape, lambda b: (0, 0)),
                    pl.BlockSpec(Wfc_p.shape, lambda b: (0, 0)),
                    pl.BlockSpec(bfc_p.shape, lambda b: (0, 0)),
                ],
                out_specs=pl.BlockSpec((1, 1, M * out_dim), lambda b: (b, 0, 0)),
                compiler_params=pltpu.CompilerParams(
                    dimension_semantics=("parallel",)),
            )(h, Wp, bp, Wfc_p, bfc_p)
            return out.reshape(B, M, out_dim).transpose(1, 0, 2)   # (M, B, out)

        h = pl.pallas_call(
            _make_conv_act_kernel(Ho, Wo, k, s, d, act_fn),
            out_shape=jax.ShapeDtypeStruct((B, Ho, Wo, n_out), jnp.float32),
            grid=(B,),
            in_specs=[
                pl.BlockSpec((1, cur_H, cur_W, h.shape[-1]),
                             lambda b: (b, 0, 0, 0)),
                pl.BlockSpec(Wp.shape, lambda b: (0, 0)),
                pl.BlockSpec(bp.shape, lambda b: (0, 0)),
            ],
            out_specs=pl.BlockSpec((1, Ho, Wo, n_out), lambda b: (b, 0, 0, 0)),
            compiler_params=pltpu.CompilerParams(
                dimension_semantics=("parallel",)),
        )(h, Wp, bp)
        cur_H, cur_W = Ho, Wo

    # final_layer != 'avg': flatten per-module features in PyTorch channel-major
    # order, then ModularLinear as one packed block-diagonal matmul.
    # TODO(synk): the flatten/transpose below is plain-JAX glue (one extra HBM pass).
    f_last = h.shape[-1] // M
    feat = h.reshape(B, cur_H, cur_W, M, f_last)
    feat = feat.transpose(0, 3, 4, 1, 2).reshape(B, 1, M * f_last * cur_H * cur_W)
    Wfc, bfc = fc_params
    out_dim = Wfc.shape[2]
    Wfc_p = _pack_fc_weight(Wfc, M)
    bfc_p = bfc.reshape(1, M * out_dim)
    out = pl.pallas_call(
        _fc_kernel,
        out_shape=jax.ShapeDtypeStruct((B, 1, M * out_dim), jnp.float32),
        grid=(B,),
        in_specs=[
            pl.BlockSpec((1, 1, feat.shape[-1]), lambda b: (b, 0, 0)),
            pl.BlockSpec(Wfc_p.shape, lambda b: (0, 0)),
            pl.BlockSpec(bfc_p.shape, lambda b: (0, 0)),
        ],
        out_specs=pl.BlockSpec((1, 1, M * out_dim), lambda b: (b, 0, 0)),
        compiler_params=pltpu.CompilerParams(dimension_semantics=("parallel",)),
    )(feat, Wfc_p, bfc_p)
    return out.reshape(B, M, out_dim).transpose(1, 0, 2)


def ref_forward(x, conv_params, fc_params, *, num_modules, kernel_sizes,
                strides, dilations, activation, final_layer):
    # Pure-JAX/XLA mirror of ConvModel.forward (grouped convs in NCHW).
    M = num_modules
    act = _ACTS[activation]
    h = jnp.tile(x, (1, M, 1, 1))                    # x.repeat(1, M, 1, 1)
    for li, (Wc, bc) in enumerate(conv_params):
        k, s, d = kernel_sizes[li], strides[li], dilations[li]
        f_o = Wc.shape[1]
        h = lax.conv_general_dilated(
            h, Wc.reshape(M * f_o, Wc.shape[2], k, k),
            window_strides=(s, s), padding="VALID", rhs_dilation=(d, d),
            dimension_numbers=("NCHW", "OIHW", "NCHW"),
            feature_group_count=M, precision=lax.Precision.HIGHEST)
        h = act(h + bc.reshape(1, M * f_o, 1, 1))
    if final_layer == "avg":
        h = jnp.mean(h, axis=(2, 3), keepdims=True)
    B = x.shape[0]
    feat = h.reshape(B, M, -1).transpose(1, 0, 2)    # (M, B, F)
    Wfc, bfc = fc_params
    return jnp.matmul(feat, Wfc, precision=lax.Precision.HIGHEST) + bfc


if __name__ == "__main__":
    # ConvModel(input_shape=(4,16,16), output_dim=10, num_filters=[8,16],
    #           kernel_sizes=[3], strides=[1], dilations=[1], num_modules=2,
    #           activation='relu', final_layer='avg'), batch = 2.
    B, C_in, S = 2, 4, 16
    num_filters = [8, 16]
    kernel_sizes = (3, 3)
    strides = (1, 1)
    dilations = (1, 1)
    M = 2
    output_dim = 10
    activation = "relu"
    final_layer = "avg"

    key = jax.random.PRNGKey(0)
    keys = iter(jax.random.split(key, 16))
    x = jax.random.normal(next(keys), (B, C_in, S, S), jnp.float32)

    filters_list = [C_in] + num_filters
    conv_params = []
    for f_i, f_o, k in zip(filters_list[:-1], filters_list[1:], kernel_sizes):
        std = 1.0 / np.sqrt(k * k * f_i)
        Wc = jax.random.uniform(next(keys), (M, f_o, f_i, k, k), jnp.float32,
                                minval=-std, maxval=std)
        bc = jax.random.uniform(next(keys), (M, f_o), jnp.float32,
                                minval=-std, maxval=std)
        conv_params.append((Wc, bc))

    f_last = filters_list[-1]
    std = 1.0 / np.sqrt(f_last)
    Wfc = jax.random.uniform(next(keys), (M, f_last, output_dim), jnp.float32,
                             minval=-std, maxval=std)
    bfc = jax.random.uniform(next(keys), (M, 1, output_dim), jnp.float32,
                             minval=-std, maxval=std)
    fc_params = (Wfc, bfc)

    fwd = jax.jit(functools.partial(
        conv_model_forward, num_modules=M, kernel_sizes=kernel_sizes,
        strides=strides, dilations=dilations, activation=activation,
        final_layer=final_layer))
    out = jax.block_until_ready(fwd(x, conv_params, fc_params))
    assert out.shape == (M, B, output_dim), out.shape

    ref = jax.block_until_ready(ref_forward(
        x, conv_params, fc_params, num_modules=M, kernel_sizes=kernel_sizes,
        strides=strides, dilations=dilations, activation=activation,
        final_layer=final_layer))
    np.testing.assert_allclose(np.asarray(out), np.asarray(ref),
                               rtol=1e-4, atol=1e-4)
    print("KERNEL_OK")
</pallas_src>

<mosaic_0001>
module attributes {stable_mosaic.version = 11 : i64} {
  func.func @kernel(%arg0: i32, %arg1: memref<1x16x16x4xf32, #tpu.memory_space<vmem>>, %arg2: memref<36x16xf32, #tpu.memory_space<vmem>>, %arg3: memref<1x16xf32, #tpu.memory_space<vmem>>, %arg4: memref<1x14x14x16xf32, #tpu.memory_space<vmem>>) attributes {dimension_semantics = [#tpu.dimension_semantics<parallel>], iteration_bounds = array<i64: 2>, scalar_prefetch = 0 : i64, scratch_operands = 0 : i64, tpu.core_type = #tpu.core_type<tc>, window_params = [{transform_indices = @transform_0, window_bounds = array<i64: 1, 16, 16, 4>}, {pipeline_mode = #tpu.pipeline_mode<synchronous>, transform_indices = @transform_1, window_bounds = array<i64: 36, 16>}, {pipeline_mode = #tpu.pipeline_mode<synchronous>, transform_indices = @transform_2, window_bounds = array<i64: 1, 16>}, {transform_indices = @transform_3, window_bounds = array<i64: 1, 14, 14, 16>}]} {
    %c0 = arith.constant 0 : index
    %c0_0 = arith.constant 0 : index
    %c0_1 = arith.constant 0 : index
    %c0_2 = arith.constant 0 : index
    %0 = vector.load %arg1[%c0, %c0_0, %c0_1, %c0_2] : memref<1x16x16x4xf32, #tpu.memory_space<vmem>>, vector<1x16x16x4xf32>
    %1 = vector.shape_cast %0 : vector<1x16x16x4xf32> to vector<16x16x4xf32>
    %2 = vector.extract_strided_slice %1 {offsets = [0, 0, 0], sizes = [14, 14, 4], strides = [1, 1, 1]} : vector<16x16x4xf32> to vector<14x14x4xf32>
    %3 = vector.extract_strided_slice %1 {offsets = [0, 1, 0], sizes = [14, 14, 4], strides = [1, 1, 1]} : vector<16x16x4xf32> to vector<14x14x4xf32>
    %4 = vector.extract_strided_slice %1 {offsets = [0, 2, 0], sizes = [14, 14, 4], strides = [1, 1, 1]} : vector<16x16x4xf32> to vector<14x14x4xf32>
    %5 = vector.extract_strided_slice %1 {offsets = [1, 0, 0], sizes = [14, 14, 4], strides = [1, 1, 1]} : vector<16x16x4xf32> to vector<14x14x4xf32>
    %6 = vector.extract_strided_slice %1 {offsets = [1, 1, 0], sizes = [14, 14, 4], strides = [1, 1, 1]} : vector<16x16x4xf32> to vector<14x14x4xf32>
    %7 = vector.extract_strided_slice %1 {offsets = [1, 2, 0], sizes = [14, 14, 4], strides = [1, 1, 1]} : vector<16x16x4xf32> to vector<14x14x4xf32>
    %8 = vector.extract_strided_slice %1 {offsets = [2, 0, 0], sizes = [14, 14, 4], strides = [1, 1, 1]} : vector<16x16x4xf32> to vector<14x14x4xf32>
    %9 = vector.extract_strided_slice %1 {offsets = [2, 1, 0], sizes = [14, 14, 4], strides = [1, 1, 1]} : vector<16x16x4xf32> to vector<14x14x4xf32>
    %10 = vector.extract_strided_slice %1 {offsets = [2, 2, 0], sizes = [14, 14, 4], strides = [1, 1, 1]} : vector<16x16x4xf32> to vector<14x14x4xf32>
    %11 = tpu.concatenate %2, %3, %4, %5, %6, %7, %8, %9, %10 in 2 : vector<14x14x4xf32>, vector<14x14x4xf32>, vector<14x14x4xf32>, vector<14x14x4xf32>, vector<14x14x4xf32>, vector<14x14x4xf32>, vector<14x14x4xf32>, vector<14x14x4xf32>, vector<14x14x4xf32> -> vector<14x14x36xf32>
    %12 = vector.shape_cast %11 : vector<14x14x36xf32> to vector<196x36xf32>
    %c0_3 = arith.constant 0 : index
    %c0_4 = arith.constant 0 : index
    %13 = vector.load %arg2[%c0_3, %c0_4] : memref<36x16xf32, #tpu.memory_space<vmem>>, vector<36x16xf32>
    %cst = arith.constant dense<0.000000e+00> : vector<196x16xf32>
    %14 = tpu.matmul %12, %13, %cst {dimension_numbers = #tpu.dot_dimension_numbers<[1], [0], [0], [1], [0, 0, 1, 1], [], []>} : vector<196x36xf32>, vector<36x16xf32>, vector<196x16xf32> -> vector<196x16xf32>
    %c0_5 = arith.constant 0 : index
    %c0_6 = arith.constant 0 : index
    %15 = vector.load %arg3[%c0_5, %c0_6] : memref<1x16xf32, #tpu.memory_space<vmem>>, vector<1x16xf32>
    %16 = vector.broadcast %15 : vector<1x16xf32> to vector<196x16xf32>
    %17 = arith.addf %14, %16 : vector<196x16xf32>
    %cst_7 = arith.constant 0.000000e+00 : f32
    %18 = vector.broadcast %cst_7 : f32 to vector<196x16xf32>
    %19 = arith.maximumf %17, %18 : vector<196x16xf32>
    %20 = vector.shape_cast %19 : vector<196x16xf32> to vector<14x14x16xf32>
    %c0_8 = arith.constant 0 : index
    %c0_9 = arith.constant 0 : index
    %c0_10 = arith.constant 0 : index
    %c0_11 = arith.constant 0 : index
    %21 = vector.load %arg4[%c0_8, %c0_9, %c0_10, %c0_11] : memref<1x14x14x16xf32, #tpu.memory_space<vmem>>, vector<1x14x14x16xf32>
    %22 = vector.shape_cast %21 : vector<1x14x14x16xf32> to vector<14x14x16xf32>
    %23 = vector.shape_cast %20 : vector<14x14x16xf32> to vector<1x14x14x16xf32>
    tpu.vector_store %arg4[%c0_8, %c0_9, %c0_10, %c0_11], %23 {strides = array<i32>} : memref<1x14x14x16xf32, #tpu.memory_space<vmem>>, vector<1x14x14x16xf32>,
    return
  }
  func.func @transform_0(%arg0: i32) -> (i32, i32, i32, i32) {
    %c0_i32 = arith.constant 0 : i32
    %c0_i32_0 = arith.constant 0 : i32
    %c0_i32_1 = arith.constant 0 : i32
    %c0_i32_2 = arith.constant 0 : i32
    return %arg0, %c0_i32, %c0_i32_0, %c0_i32_1 : i32, i32, i32, i32
  }
  func.func @transform_1(%arg0: i32) -> (i32, i32) {
    %c0_i32 = arith.constant 0 : i32
    %c0_i32_0 = arith.constant 0 : i32
    %c0_i32_1 = arith.constant 0 : i32
    return %c0_i32, %c0_i32_0 : i32, i32
  }
  func.func @transform_2(%arg0: i32) -> (i32, i32) {
    %c0_i32 = arith.constant 0 : i32
    %c0_i32_0 = arith.constant 0 : i32
    %c0_i32_1 = arith.constant 0 : i32
    return %c0_i32, %c0_i32_0 : i32, i32
  }
  func.func @transform_3(%arg0: i32) -> (i32, i32, i32, i32) {
    %c0_i32 = arith.constant 0 : i32
    %c0_i32_0 = arith.constant 0 : i32
    %c0_i32_1 = arith.constant 0 : i32
    %c0_i32_2 = arith.constant 0 : i32
    return %arg0, %c0_i32, %c0_i32_0, %c0_i32_1 : i32, i32, i32, i32
  }
}

module attributes {stable_mosaic.version = 11 : i64} {
  func.func @kernel(%arg0: i32, %arg1: memref<1x14x14x16xf32, #tpu.memory_space<vmem>>, %arg2: memref<144x32xf32, #tpu.memory_space<vmem>>, %arg3: memref<1x32xf32, #tpu.memory_space<vmem>>, %arg4: memref<32x20xf32, #tpu.memory_space<vmem>>, %arg5: memref<1x20xf32, #tpu.memory_space<vmem>>, %arg6: memref<1x1x20xf32, #tpu.memory_space<vmem>>) attributes {dimension_semantics = [#tpu.dimension_semantics<parallel>], iteration_bounds = array<i64: 2>, scalar_prefetch = 0 : i64, scratch_operands = 0 : i64, tpu.core_type = #tpu.core_type<tc>, window_params = [{transform_indices = @transform_0, window_bounds = array<i64: 1, 14, 14, 16>}, {pipeline_mode = #tpu.pipeline_mode<synchronous>, transform_indices = @transform_1, window_bounds = array<i64: 144, 32>}, {pipeline_mode = #tpu.pipeline_mode<synchronous>, transform_indices = @transform_2, window_bounds = array<i64: 1, 32>}, {pipeline_mode = #tpu.pipeline_mode<synchronous>, transform_indices = @transform_3, window_bounds = array<i64: 32, 20>}, {pipeline_mode = #tpu.pipeline_mode<synchronous>, transform_indices = @transform_4, window_bounds = array<i64: 1, 20>}, {transform_indices = @transform_5, window_bounds = array<i64: 1, 1, 20>}]} {
    %c0 = arith.constant 0 : index
    %c0_0 = arith.constant 0 : index
    %c0_1 = arith.constant 0 : index
    %c0_2 = arith.constant 0 : index
    %0 = vector.load %arg1[%c0, %c0_0, %c0_1, %c0_2] : memref<1x14x14x16xf32, #tpu.memory_space<vmem>>, vector<1x14x14x16xf32>
    %1 = vector.shape_cast %0 : vector<1x14x14x16xf32> to vector<14x14x16xf32>
    %2 = vector.extract_strided_slice %1 {offsets = [0, 0, 0], sizes = [12, 12, 16], strides = [1, 1, 1]} : vector<14x14x16xf32> to vector<12x12x16xf32>
    %3 = vector.extract_strided_slice %1 {offsets = [0, 1, 0], sizes = [12, 12, 16], strides = [1, 1, 1]} : vector<14x14x16xf32> to vector<12x12x16xf32>
    %4 = vector.extract_strided_slice %1 {offsets = [0, 2, 0], sizes = [12, 12, 16], strides = [1, 1, 1]} : vector<14x14x16xf32> to vector<12x12x16xf32>
    %5 = vector.extract_strided_slice %1 {offsets = [1, 0, 0], sizes = [12, 12, 16], strides = [1, 1, 1]} : vector<14x14x16xf32> to vector<12x12x16xf32>
    %6 = vector.extract_strided_slice %1 {offsets = [1, 1, 0], sizes = [12, 12, 16], strides = [1, 1, 1]} : vector<14x14x16xf32> to vector<12x12x16xf32>
    %7 = vector.extract_strided_slice %1 {offsets = [1, 2, 0], sizes = [12, 12, 16], strides = [1, 1, 1]} : vector<14x14x16xf32> to vector<12x12x16xf32>
    %8 = vector.extract_strided_slice %1 {offsets = [2, 0, 0], sizes = [12, 12, 16], strides = [1, 1, 1]} : vector<14x14x16xf32> to vector<12x12x16xf32>
    %9 = vector.extract_strided_slice %1 {offsets = [2, 1, 0], sizes = [12, 12, 16], strides = [1, 1, 1]} : vector<14x14x16xf32> to vector<12x12x16xf32>
    %10 = vector.extract_strided_slice %1 {offsets = [2, 2, 0], sizes = [12, 12, 16], strides = [1, 1, 1]} : vector<14x14x16xf32> to vector<12x12x16xf32>
    %11 = tpu.concatenate %2, %3, %4, %5, %6, %7, %8, %9, %10 in 2 : vector<12x12x16xf32>, vector<12x12x16xf32>, vector<12x12x16xf32>, vector<12x12x16xf32>, vector<12x12x16xf32>, vector<12x12x16xf32>, vector<12x12x16xf32>, vector<12x12x16xf32>, vector<12x12x16xf32> -> vector<12x12x144xf32>
    %12 = vector.shape_cast %11 : vector<12x12x144xf32> to vector<144x144xf32>
    %c0_3 = arith.constant 0 : index
    %c0_4 = arith.constant 0 : index
    %13 = vector.load %arg2[%c0_3, %c0_4] : memref<144x32xf32, #tpu.memory_space<vmem>>, vector<144x32xf32>
    %cst = arith.constant dense<0.000000e+00> : vector<144x32xf32>
    %14 = tpu.matmul %12, %13, %cst {dimension_numbers = #tpu.dot_dimension_numbers<[1], [0], [0], [1], [0, 0, 1, 1], [], []>} : vector<144x144xf32>, vector<144x32xf32>, vector<144x32xf32> -> vector<144x32xf32>
    %c0_5 = arith.constant 0 : index
    %c0_6 = arith.constant 0 : index
    %15 = vector.load %arg3[%c0_5, %c0_6] : memref<1x32xf32, #tpu.memory_space<vmem>>, vector<1x32xf32>
    %16 = vector.broadcast %15 : vector<1x32xf32> to vector<144x32xf32>
    %17 = arith.addf %14, %16 : vector<144x32xf32>
    %cst_7 = arith.constant 0.000000e+00 : f32
    %18 = vector.broadcast %cst_7 : f32 to vector<144x32xf32>
    %19 = arith.maximumf %17, %18 : vector<144x32xf32>
    %cst_8 = arith.constant dense<0.000000e+00> : vector<32xf32>
    %20 = vector.multi_reduction <add>, %19, %cst_8 [0] : vector<144x32xf32> to vector<32xf32>
    %21 = vector.shape_cast %20 : vector<32xf32> to vector<1x32xf32>
    %cst_9 = arith.constant 1.440000e+02 : f32
    %22 = vector.broadcast %cst_9 : f32 to vector<1x32xf32>
    %23 = arith.divf %21, %22 : vector<1x32xf32>
    %c0_10 = arith.constant 0 : index
    %c0_11 = arith.constant 0 : index
    %24 = vector.load %arg4[%c0_10, %c0_11] : memref<32x20xf32, #tpu.memory_space<vmem>>, vector<32x20xf32>
    %cst_12 = arith.constant dense<0.000000e+00> : vector<1x20xf32>
    %25 = tpu.matmul %23, %24, %cst_12 {dimension_numbers = #tpu.dot_dimension_numbers<[1], [0], [0], [1], [0, 0, 1, 1], [], []>} : vector<1x32xf32>, vector<32x20xf32>, vector<1x20xf32> -> vector<1x20xf32>
    %c0_13 = arith.constant 0 : index
    %c0_14 = arith.constant 0 : index
    %26 = vector.load %arg5[%c0_13, %c0_14] : memref<1x20xf32, #tpu.memory_space<vmem>>, vector<1x20xf32>
    %27 = arith.addf %25, %26 : vector<1x20xf32>
    %c0_15 = arith.constant 0 : index
    %c0_16 = arith.constant 0 : index
    %c0_17 = arith.constant 0 : index
    %28 = vector.load %arg6[%c0_15, %c0_16, %c0_17] : memref<1x1x20xf32, #tpu.memory_space<vmem>>, vector<1x1x20xf32>
    %29 = vector.shape_cast %28 : vector<1x1x20xf32> to vector<1x20xf32>
    %30 = vector.shape_cast %27 : vector<1x20xf32> to vector<1x1x20xf32>
    tpu.vector_store %arg6[%c0_15, %c0_16, %c0_17], %30 {strides = array<i32>} : memref<1x1x20xf32, #tpu.memory_space<vmem>>, vector<1x1x20xf32>,
    return
  }
  func.func @transform_0(%arg0: i32) -> (i32, i32, i32, i32) {
    %c0_i32 = arith.constant 0 : i32
    %c0_i32_0 = arith.constant 0 : i32
    %c0_i32_1 = arith.constant 0 : i32
    %c0_i32_2 = arith.constant 0 : i32
    return %arg0, %c0_i32, %c0_i32_0, %c0_i32_1 : i32, i32, i32, i32
  }
  func.func @transform_1(%arg0: i32) -> (i32, i32) {
    %c0_i32 = arith.constant 0 : i32
    %c0_i32_0 = arith.constant 0 : i32
    %c0_i32_1 = arith.constant 0 : i32
    return %c0_i32, %c0_i32_0 : i32, i32
  }
  func.func @transform_2(%arg0: i32) -> (i32, i32) {
    %c0_i32 = arith.constant 0 : i32
    %c0_i32_0 = arith.constant 0 : i32
    %c0_i32_1 = arith.constant 0 : i32
    return %c0_i32, %c0_i32_0 : i32, i32
  }
  func.func @transform_3(%arg0: i32) -> (i32, i32) {
    %c0_i32 = arith.constant 0 : i32
    %c0_i32_0 = arith.constant 0 : i32
    %c0_i32_1 = arith.constant 0 : i32
    return %c0_i32, %c0_i32_0 : i32, i32
  }
  func.func @transform_4(%arg0: i32) -> (i32, i32) {
    %c0_i32 = arith.constant 0 : i32
    %c0_i32_0 = arith.constant 0 : i32
    %c0_i32_1 = arith.constant 0 : i32
    return %c0_i32, %c0_i32_0 : i32, i32
  }
  func.func @transform_5(%arg0: i32) -> (i32, i32, i32) {
    %c0_i32 = arith.constant 0 : i32
    %c0_i32_0 = arith.constant 0 : i32
    %c0_i32_1 = arith.constant 0 : i32
    return %arg0, %c0_i32, %c0_i32_0 : i32, i32, i32
  }
}

</mosaic_0001>

<llo_original>
// kernel: conv_model_forward.3
$region0: #{conv_model_forward.3}
  #allocation0 [shape = 'u32[]', space=smem, size = 0x4, offset = 0x4, fixed_abs, tag = 'smem constant byte address 0x4 - core index']
  #allocation1 [shape = 'u32[72,128]{1,0:T(1,128)}', space=vmem, size = 0x9000, scoped, tag = 'internal scratch']
  %s0 = inlined_call_operand.vmem [shape: f32[2,14,14,16], index: 0, kind: input, shape index: {}]
  %s1 = inlined_call_operand.vmem [shape: f32[144,32], index: 1, kind: input, shape index: {}]
  %s2 = inlined_call_operand.vmem [shape: f32[1,32], index: 2, kind: input, shape index: {}]
  %s3 = inlined_call_operand.vmem [shape: f32[32,20], index: 3, kind: input, shape index: {}]
  %s4 = inlined_call_operand.vmem [shape: f32[1,20], index: 4, kind: input, shape index: {}]
  %s5 = inlined_call_operand.vmem [shape: f32[2,1,20], index: 5, kind: output, shape index: {}]
  %s6 = sld [smem:[#allocation0]]
  $region53: #{conv_model_forward.3} parent=0
    _
  %s8 = ssub.s32 1, %s6
  %s9 = scalar_select 0, %s8, %s6
  loop: start=0, step=1, limit=4
  $region2: #{conv_model_forward.3} parent=0 // loop_pre_header
    _
  $region3: #{conv_model_forward.3} parent=0 // loop_header
    %s11 = sphi 0, %s15
    %p12 = scmp.ge.s32.totalorder %s11, 4
    %s21 = sphi 0, %s23
    %s24 = sphi 0, %s21
    %s25 = sphi 0, %s24
    %s41 = sphi 0, %s25
    %s45 = sphi 0, %s45
    %s47 = sphi 0, %s45
    %s48 = sphi 0, %s47
    %s62 = sphi 0, %s48
    %s66 = sphi 0, %s66
    %s68 = sphi 0, %s66
    %s69 = sphi 0, %s68
    %s83 = sphi 0, %s69
    %s87 = sphi 0, %s87
    %s89 = sphi 0, %s87
    %s90 = sphi 0, %s89
    %s104 = sphi 0, %s90
    %s108 = sphi 0, %s108
    %s110 = sphi 0, %s108
    %s111 = sphi 0, %s110
    %s125 = sphi 0, %s111
    %s131 = sphi 0, %s133
    %s134 = sphi 0, %s131
    %s135 = sphi 0, %s134
    %s151 = sphi 0, %s135
  $region4: #{conv_model_forward.3} parent=0 // loop_header_branch
    %14 = sbr.rel (%p12) target = $region8
  $region5: #{conv_model_forward.3} parent=0 // loop_body
    %s16 = ssub.s32 %s11, 1
    %s17 = ssub.s32 %s11, 2
    %s18 = sadd.s32 %s11, 1
    %s19 = ssub.s32 %s11, %s18
    %p20 = scmp.eq.s32.totalorder %s19, 0
    %s22 = sadd.s32 %s21, 1
    %s23 = scalar_select %p20, %s21, %s22
    %p26 = pneg %p20
    %p27 = scmp.eq.s32.totalorder %s11, 1
    %p28 = por %p26, %p27
    %p29 = scmp.ne.s32.totalorder %s21, %s24
    %p30 = scmp.eq.s32.totalorder %s11, 0
    %p31 = por %p29, %p30
    %p32 = scmp.ne.s32.totalorder %s21, %s24
    %p33 = scmp.eq.s32.totalorder %s16, 1
    %p34 = por %p32, %p33
    %p35 = scmp.ne.s32.totalorder %s24, %s25
    %p36 = scmp.eq.s32.totalorder %s16, 0
    %p37 = por %p35, %p36
    %p38 = scmp.ne.s32.totalorder %s24, %s25
    %p39 = scmp.eq.s32.totalorder %s17, 1
    %p40 = por %p38, %p39
    %p42 = scmp.ne.s32.totalorder %s25, %s41
    %p43 = scmp.eq.s32.totalorder %s17, 0
    %p44 = por %p42, %p43
    %s46 = sadd.s32 %s45, 1
    %p49 = scmp.eq.s32.totalorder %s11, 1
    %p50 = scmp.ne.s32.totalorder %s45, %s47
    %p51 = scmp.eq.s32.totalorder %s11, 0
    %p52 = por %p50, %p51
    %p53 = scmp.ne.s32.totalorder %s45, %s47
    %p54 = scmp.eq.s32.totalorder %s16, 1
    %p55 = por %p53, %p54
    %p56 = scmp.ne.s32.totalorder %s47, %s48
    %p57 = scmp.eq.s32.totalorder %s16, 0
    %p58 = por %p56, %p57
    %p59 = scmp.ne.s32.totalorder %s47, %s48
    %p60 = scmp.eq.s32.totalorder %s17, 1
    %p61 = por %p59, %p60
    %p63 = scmp.ne.s32.totalorder %s48, %s62
    %p64 = scmp.eq.s32.totalorder %s17, 0
    %p65 = por %p63, %p64
    %s67 = sadd.s32 %s66, 1
    %p70 = scmp.eq.s32.totalorder %s11, 1
    %p71 = scmp.ne.s32.totalorder %s66, %s68
    %p72 = scmp.eq.s32.totalorder %s11, 0
    %p73 = por %p71, %p72
    %p74 = scmp.ne.s32.totalorder %s66, %s68
    %p75 = scmp.eq.s32.totalorder %s16, 1
    %p76 = por %p74, %p75
    %p77 = scmp.ne.s32.totalorder %s68, %s69
    %p78 = scmp.eq.s32.totalorder %s16, 0
    %p79 = por %p77, %p78
    %p80 = scmp.ne.s32.totalorder %s68, %s69
    %p81 = scmp.eq.s32.totalorder %s17, 1
    %p82 = por %p80, %p81
    %p84 = scmp.ne.s32.totalorder %s69, %s83
    %p85 = scmp.eq.s32.totalorder %s17, 0
    %p86 = por %p84, %p85
    %s88 = sadd.s32 %s87, 1
    %p91 = scmp.eq.s32.totalorder %s11, 1
    %p92 = scmp.ne.s32.totalorder %s87, %s89
    %p93 = scmp.eq.s32.totalorder %s11, 0
    %p94 = por %p92, %p93
    %p95 = scmp.ne.s32.totalorder %s87, %s89
    %p96 = scmp.eq.s32.totalorder %s16, 1
    %p97 = por %p95, %p96
    %p98 = scmp.ne.s32.totalorder %s89, %s90
    %p99 = scmp.eq.s32.totalorder %s16, 0
    %p100 = por %p98, %p99
    %p101 = scmp.ne.s32.totalorder %s89, %s90
    %p102 = scmp.eq.s32.totalorder %s17, 1
    %p103 = por %p101, %p102
    %p105 = scmp.ne.s32.totalorder %s90, %s104
    %p106 = scmp.eq.s32.totalorder %s17, 0
    %p107 = por %p105, %p106
    %s109 = sadd.s32 %s108, 1
    %p112 = scmp.eq.s32.totalorder %s11, 1
    %p113 = scmp.ne.s32.totalorder %s108, %s110
    %p114 = scmp.eq.s32.totalorder %s11, 0
    %p115 = por %p113, %p114
    %p116 = scmp.ne.s32.totalorder %s108, %s110
    %p117 = scmp.eq.s32.totalorder %s16, 1
    %p118 = por %p116, %p117
    %p119 = scmp.ne.s32.totalorder %s110, %s111
    %p120 = scmp.eq.s32.totalorder %s16, 0
    %p121 = por %p119, %p120
    %p122 = scmp.ne.s32.totalorder %s110, %s111
    %p123 = scmp.eq.s32.totalorder %s17, 1
    %p124 = por %p122, %p123
    %p126 = scmp.ne.s32.totalorder %s111, %s125
    %p127 = scmp.eq.s32.totalorder %s17, 0
    %p128 = por %p126, %p127
    %s129 = ssub.s32 %s11, %s18
    %p130 = scmp.eq.s32.totalorder %s129, 0
    %s132 = sadd.s32 %s131, 1
    %s133 = scalar_select %p130, %s131, %s132
    %p136 = pneg %p130
    %p137 = scmp.eq.s32.totalorder %s11, 1
    %p138 = por %p136, %p137
    %p139 = scmp.ne.s32.totalorder %s131, %s134
    %p140 = scmp.eq.s32.totalorder %s11, 0
    %p141 = por %p139, %p140
    %p142 = scmp.ne.s32.totalorder %s131, %s134
    %p143 = scmp.eq.s32.totalorder %s16, 1
    %p144 = por %p142, %p143
    %p145 = scmp.ne.s32.totalorder %s134, %s135
    %p146 = scmp.eq.s32.totalorder %s16, 0
    %p147 = por %p145, %p146
    %p148 = scmp.ne.s32.totalorder %s134, %s135
    %p149 = scmp.eq.s32.totalorder %s17, 1
    %p150 = por %p148, %p149
    %p152 = scmp.ne.s32.totalorder %s135, %s151
    %p153 = scmp.eq.s32.totalorder %s17, 0
    %p154 = por %p152, %p153
    %p155 = scmp.le.s32.totalorder 1, %s11
    %p156 = scmp.lt.s32.totalorder %s11, 3
    %p157 = pnand %p155, %p156
    %p158 = pneg %p157
    // Predicated region
    $region9: #{conv_model_forward.3} parent=5 // pred_check
      _
    $region10: #{conv_model_forward.3} parent=5 // pred_check_branch
      %160 = sbr.rel (%p157) target = $region12
    $region11: #{conv_model_forward.3} parent=5 // pred_region
      %s161 = ssub.s32 %s11, 1
      // Predicated region
      $region13: #{conv_model_forward.3} parent=11 // pred_check
        %p162 = pneg %p58
      $region14: #{conv_model_forward.3} parent=11 // pred_check_branch
        %164 = sbr.rel (%p162) target = $region16
      $region15: #{conv_model_forward.3} parent=11 // pred_region
        _
      $region16: #{conv_model_forward.3} parent=11 // pred_fallthru
        _
      // Predicated region
      $region17: #{conv_model_forward.3} parent=11 // pred_check
        %p165 = pneg %p79
      $region18: #{conv_model_forward.3} parent=11 // pred_check_branch
        %167 = sbr.rel (%p165) target = $region20
      $region19: #{conv_model_forward.3} parent=11 // pred_region
        _
      $region20: #{conv_model_forward.3} parent=11 // pred_fallthru
        _
      // Predicated region
      $region21: #{conv_model_forward.3} parent=11 // pred_check
        %p168 = pneg %p100
      $region22: #{conv_model_forward.3} parent=11 // pred_check_branch
        %170 = sbr.rel (%p168) target = $region24
      $region23: #{conv_model_forward.3} parent=11 // pred_region
        _
      $region24: #{conv_model_forward.3} parent=11 // pred_fallthru
        _
      // Predicated region
      $region25: #{conv_model_forward.3} parent=11 // pred_check
        %p171 = pneg %p121
      $region26: #{conv_model_forward.3} parent=11 // pred_check_branch
        %173 = sbr.rel (%p171) target = $region28
      $region27: #{conv_model_forward.3} parent=11 // pred_region
        _
      $region28: #{conv_model_forward.3} parent=11 // pred_fallthru
        _
    $region12: #{conv_model_forward.3} parent=5 // pred_fallthru
      _
    %p174 = scmp.lt.s32.totalorder %s11, 2
    // Predicated region
    $region29: #{conv_model_forward.3} parent=5 // pred_check
      %p175 = pneg %p174
    $region30: #{conv_model_forward.3} parent=5 // pred_check_branch
      %177 = sbr.rel (%p175) target = $region32
    $region31: #{conv_model_forward.3} parent=5 // pred_region
      // Predicated region
      $region33: #{conv_model_forward.3} parent=31 // pred_check
        %p178 = pneg %p31
      $region34: #{conv_model_forward.3} parent=31 // pred_check_branch
        %180 = sbr.rel (%p178) target = $region36
      $region35: #{conv_model_forward.3} parent=31 // pred_region
        %p181 = scmp.lt.s32.totalorder %s11, 1
        %s182 = scalar_select %p181, %s11, 1
        %s183 = smul.addr %s182, 28
        %s184 = smul.addr %s183, 8
        %s185 = scalar_lea.vmem %s0, %s184
      $region36: #{conv_model_forward.3} parent=31 // pred_fallthru
        _
    $region32: #{conv_model_forward.3} parent=5 // pred_fallthru
      _
    %p186 = scmp.le.s32.totalorder 1, %s11
    %p187 = scmp.lt.s32.totalorder %s11, 3
    %p188 = pnand %p186, %p187
    %p189 = pneg %p188
    // Predicated region
    $region37: #{conv_model_forward.3} parent=5 // pred_check
      _
    $region38: #{conv_model_forward.3} parent=5 // pred_check_branch
      %191 = sbr.rel (%p188) target = $region40
    $region39: #{conv_model_forward.3} parent=5 // pred_region
      %s192 = ssub.s32 %s11, 1
      %p193 = scmp.lt.s32.totalorder %s16, 1
      %s194 = scalar_select %p193, %s16, 1
      %s195 = smul.addr %s194, 28
      %s196 = smul.addr %s195, 8
      %s197 = scalar_lea.vmem %s0, %s196
      %p198 = pneg %p37
      %p199 = pneg %p34
      %p200 = pneg %p58
      %p201 = pneg %p55
      %p202 = pneg %p79
      %p203 = pneg %p76
      %p204 = pneg %p100
      %p205 = pneg %p97
      %p206 = pneg %p121
      %p207 = pneg %p118
      %p208 = pneg %p147
      %p209 = pneg %p144
      %p210 = scmp.lt.s32.totalorder %s16, 1
      %s211 = scalar_select %p210, %s16, 1
      %s212 = scalar_lea.vmem %s5, %s211
      %p213 = scmp.lt.s32.totalorder %s16, 1
      %s214 = scalar_select %p213, %s16, 1
      %s215 = smul.addr %s214, 28
      %s216 = smul.addr %s215, 8
      %s217 = scalar_lea.vmem %s0, %s216
      %p218 = scmp.lt.s32.totalorder %s16, 1
      %s219 = scalar_select %p218, %s16, 1
      %s220 = scalar_lea.vmem %s5, %s219
      %v221 = vld [vmem:[%s217] sm:$0xff]
      %v222 = vld [vmem:[%s217 + $0x8] sm:$0x3f]
      %v223 = vld [vmem:[%s217 + $0x10] sm:$0xff]
      %v224 = vld [vmem:[%s217 + $0x18] sm:$0x3f]
      %v225 = vld [vmem:[%s217 + $0x20] sm:$0xff]
      %v226 = vld [vmem:[%s217 + $0x28] sm:$0x3f]
      %v227 = vld [vmem:[%s217 + $0x30] sm:$0xff]
      %v228 = vld [vmem:[%s217 + $0x38] sm:$0x3f]
      %v229 = vld [vmem:[%s217 + $0x40] sm:$0xff]
      %v230 = vld [vmem:[%s217 + $0x48] sm:$0x3f]
      %v231 = vld [vmem:[%s217 + $0x50] sm:$0xff]
      %v232 = vld [vmem:[%s217 + $0x58] sm:$0x3f]
      %v233 = vld [vmem:[%s217 + $0x60] sm:$0xff]
      %v234 = vld [vmem:[%s217 + $0x68] sm:$0x3f]
      %v235 = vld [vmem:[%s217 + $0x70] sm:$0xff]
      %v236 = vld [vmem:[%s217 + $0x78] sm:$0x3f]
      %v237 = vld [vmem:[%s217 + $0x80] sm:$0xff]
      %v238 = vld [vmem:[%s217 + $0x88] sm:$0x3f]
      %v239 = vld [vmem:[%s217 + $0x90] sm:$0xff]
      %v240 = vld [vmem:[%s217 + $0x98] sm:$0x3f]
      %v241 = vld [vmem:[%s217 + $0xa0] sm:$0xff]
      %v242 = vld [vmem:[%s217 + $0xa8] sm:$0x3f]
      %v243 = vld [vmem:[%s217 + $0xb0] sm:$0xff]
      %v244 = vld [vmem:[%s217 + $0xb8] sm:$0x3f]
      %v245 = vld [vmem:[%s217 + $0xc0] sm:$0xff]
      %v246 = vld [vmem:[%s217 + $0xc8] sm:$0x3f]
      %v247 = vld [vmem:[%s217 + $0xd0] sm:$0xff]
      %v248 = vld [vmem:[%s217 + $0xd8] sm:$0x3f]
      %vm273 = vcmask 1046528
      %v274 = vrot.slane %v221, 1
      %v275 = vrot.slane %v222, 1
      %v276 = vsel %vm273, %v274, %v275
      %v277 = vrot.slane %v223, 1
      %v278 = vrot.slane %v224, 1
      %v279 = vsel %vm273, %v277, %v278
      %v280 = vrot.slane %v225, 1
      %v281 = vrot.slane %v226, 1
      %v282 = vsel %vm273, %v280, %v281
      %v283 = vrot.slane %v227, 1
      %v284 = vrot.slane %v228, 1
      %v285 = vsel %vm273, %v283, %v284
      %v286 = vrot.slane %v229, 1
      %v287 = vrot.slane %v230, 1
      %v288 = vsel %vm273, %v286, %v287
      %v289 = vrot.slane %v231, 1
      %v290 = vrot.slane %v232, 1
      %v291 = vsel %vm273, %v289, %v290
      %v292 = vrot.slane %v233, 1
      %v293 = vrot.slane %v234, 1
      %v294 = vsel %vm273, %v292, %v293
      %v295 = vrot.slane %v235, 1
      %v296 = vrot.slane %v236, 1
      %v297 = vsel %vm273, %v295, %v296
      %v298 = vrot.slane %v237, 1
      %v299 = vrot.slane %v238, 1
      %v300 = vsel %vm273, %v298, %v299
      %v301 = vrot.slane %v239, 1
      %v302 = vrot.slane %v240, 1
      %v303 = vsel %vm273, %v301, %v302
      %v304 = vrot.slane %v241, 1
      %v305 = vrot.slane %v242, 1
      %v306 = vsel %vm273, %v304, %v305
      %v307 = vrot.slane %v243, 1
      %v308 = vrot.slane %v244, 1
      %v309 = vsel %vm273, %v307, %v308
      %310 = vrot.lane.b32.xlu0 %v276, 16
      %v311 = vpop.permute.xlu0 %310
      %312 = vrot.lane.b32.xlu0 %v275, 16
      %v313 = vpop.permute.xlu0 %312
      %314 = vrot.lane.b32.xlu0 %v279, 16
      %v315 = vpop.permute.xlu0 %314
      %316 = vrot.lane.b32.xlu0 %v278, 16
      %v317 = vpop.permute.xlu0 %316
      %318 = vrot.lane.b32.xlu0 %v282, 16
      %v319 = vpop.permute.xlu0 %318
      %320 = vrot.lane.b32.xlu0 %v281, 16
      %v321 = vpop.permute.xlu0 %320
      %322 = vrot.lane.b32.xlu0 %v285, 16
      %v323 = vpop.permute.xlu0 %322
      %324 = vrot.lane.b32.xlu0 %v284, 16
      %v325 = vpop.permute.xlu0 %324
      %326 = vrot.lane.b32.xlu0 %v288, 16
      %v327 = vpop.permute.xlu0 %326
      %328 = vrot.lane.b32.xlu0 %v287, 16
      %v329 = vpop.permute.xlu0 %328
      %330 = vrot.lane.b32.xlu0 %v291, 16
      %v331 = vpop.permute.xlu0 %330
      %332 = vrot.lane.b32.xlu0 %v290, 16
      %v333 = vpop.permute.xlu0 %332
      %334 = vrot.lane.b32.xlu0 %v294, 16
      %v335 = vpop.permute.xlu0 %334
      %336 = vrot.lane.b32.xlu0 %v293, 16
      %v337 = vpop.permute.xlu0 %336
      %338 = vrot.lane.b32.xlu0 %v297, 16
      %v339 = vpop.permute.xlu0 %338
      %340 = vrot.lane.b32.xlu0 %v296, 16
      %v341 = vpop.permute.xlu0 %340
      %342 = vrot.lane.b32.xlu0 %v300, 16
      %v343 = vpop.permute.xlu0 %342
      %344 = vrot.lane.b32.xlu0 %v299, 16
      %v345 = vpop.permute.xlu0 %344
      %346 = vrot.lane.b32.xlu0 %v303, 16
      %v347 = vpop.permute.xlu0 %346
      %348 = vrot.lane.b32.xlu0 %v302, 16
      %v349 = vpop.permute.xlu0 %348
      %350 = vrot.lane.b32.xlu0 %v306, 16
      %v351 = vpop.permute.xlu0 %350
      %352 = vrot.lane.b32.xlu0 %v305, 16
      %v353 = vpop.permute.xlu0 %352
      %354 = vrot.lane.b32.xlu0 %v309, 16
      %v355 = vpop.permute.xlu0 %354
      %356 = vrot.lane.b32.xlu0 %v308, 16
      %v357 = vpop.permute.xlu0 %356
      %vm382 = vcmask 1045504
      %v383 = vrot.slane %v221, 2
      %v384 = vrot.slane %v222, 2
      %v385 = vsel %vm382, %v383, %v384
      %v386 = vrot.slane %v223, 2
      %v387 = vrot.slane %v224, 2
      %v388 = vsel %vm382, %v386, %v387
      %v389 = vrot.slane %v225, 2
      %v390 = vrot.slane %v226, 2
      %v391 = vsel %vm382, %v389, %v390
      %v392 = vrot.slane %v227, 2
      %v393 = vrot.slane %v228, 2
      %v394 = vsel %vm382, %v392, %v393
      %v395 = vrot.slane %v229, 2
      %v396 = vrot.slane %v230, 2
      %v397 = vsel %vm382, %v395, %v396
      %v398 = vrot.slane %v231, 2
      %v399 = vrot.slane %v232, 2
      %v400 = vsel %vm382, %v398, %v399
      %v401 = vrot.slane %v233, 2
      %v402 = vrot.slane %v234, 2
      %v403 = vsel %vm382, %v401, %v402
      %v404 = vrot.slane %v235, 2
      %v405 = vrot.slane %v236, 2
      %v406 = vsel %vm382, %v404, %v405
      %v407 = vrot.slane %v237, 2
      %v408 = vrot.slane %v238, 2
      %v409 = vsel %vm382, %v407, %v408
      %v410 = vrot.slane %v239, 2
      %v411 = vrot.slane %v240, 2
      %v412 = vsel %vm382, %v410, %v411
      %v413 = vrot.slane %v241, 2
      %v414 = vrot.slane %v242, 2
      %v415 = vsel %vm382, %v413, %v414
      %v416 = vrot.slane %v243, 2
      %v417 = vrot.slane %v244, 2
      %v418 = vsel %vm382, %v416, %v417
      %419 = vrot.lane.b32.xlu0 %v385, 32
      %v420 = vpop.permute.xlu0 %419
      %421 = vrot.lane.b32.xlu0 %v384, 32
      %v422 = vpop.permute.xlu0 %421
      %423 = vrot.lane.b32.xlu0 %v388, 32
      %v424 = vpop.permute.xlu0 %423
      %425 = vrot.lane.b32.xlu0 %v387, 32
      %v426 = vpop.permute.xlu0 %425
      %427 = vrot.lane.b32.xlu0 %v391, 32
      %v428 = vpop.permute.xlu0 %427
      %429 = vrot.lane.b32.xlu0 %v390, 32
      %v430 = vpop.permute.xlu0 %429
      %431 = vrot.lane.b32.xlu0 %v394, 32
      %v432 = vpop.permute.xlu0 %431
      %433 = vrot.lane.b32.xlu0 %v393, 32
      %v434 = vpop.permute.xlu0 %433
      %435 = vrot.lane.b32.xlu0 %v397, 32
      %v436 = vpop.permute.xlu0 %435
      %437 = vrot.lane.b32.xlu0 %v396, 32
      %v438 = vpop.permute.xlu0 %437
      %439 = vrot.lane.b32.xlu0 %v400, 32
      %v440 = vpop.permute.xlu0 %439
      %441 = vrot.lane.b32.xlu0 %v399, 32
      %v442 = vpop.permute.xlu0 %441
      %443 = vrot.lane.b32.xlu0 %v403, 32
      %v444 = vpop.permute.xlu0 %443
      %445 = vrot.lane.b32.xlu0 %v402, 32
      %v446 = vpop.permute.xlu0 %445
      %447 = vrot.lane.b32.xlu0 %v406, 32
      %v448 = vpop.permute.xlu0 %447
      %449 = vrot.lane.b32.xlu0 %v405, 32
      %v450 = vpop.permute.xlu0 %449
      %451 = vrot.lane.b32.xlu0 %v409, 32
      %v452 = vpop.permute.xlu0 %451
      %453 = vrot.lane.b32.xlu0 %v408, 32
      %v454 = vpop.permute.xlu0 %453
      %455 = vrot.lane.b32.xlu0 %v412, 32
      %v456 = vpop.permute.xlu0 %455
      %457 = vrot.lane.b32.xlu0 %v411, 32
      %v458 = vpop.permute.xlu0 %457
      %459 = vrot.lane.b32.xlu0 %v415, 32
      %v460 = vpop.permute.xlu0 %459
      %461 = vrot.lane.b32.xlu0 %v414, 32
      %v462 = vpop.permute.xlu0 %461
      %463 = vrot.lane.b32.xlu0 %v418, 32
      %v464 = vpop.permute.xlu0 %463
      %465 = vrot.lane.b32.xlu0 %v417, 32
      %v466 = vpop.permute.xlu0 %465
      %493 = vrot.lane.b32.xlu0 %v223, 48
      %v494 = vpop.permute.xlu0 %493
      %495 = vrot.lane.b32.xlu0 %v224, 48
      %v496 = vpop.permute.xlu0 %495
      %497 = vrot.lane.b32.xlu0 %v225, 48
      %v498 = vpop.permute.xlu0 %497
      %499 = vrot.lane.b32.xlu0 %v226, 48
      %v500 = vpop.permute.xlu0 %499
      %501 = vrot.lane.b32.xlu0 %v227, 48
      %v502 = vpop.permute.xlu0 %501
      %503 = vrot.lane.b32.xlu0 %v228, 48
      %v504 = vpop.permute.xlu0 %503
      %505 = vrot.lane.b32.xlu0 %v229, 48
      %v506 = vpop.permute.xlu0 %505
      %507 = vrot.lane.b32.xlu0 %v230, 48
      %v508 = vpop.permute.xlu0 %507
      %509 = vrot.lane.b32.xlu0 %v231, 48
      %v510 = vpop.permute.xlu0 %509
      %511 = vrot.lane.b32.xlu0 %v232, 48
      %v512 = vpop.permute.xlu0 %511
      %513 = vrot.lane.b32.xlu0 %v233, 48
      %v514 = vpop.permute.xlu0 %513
      %515 = vrot.lane.b32.xlu0 %v234, 48
      %v516 = vpop.permute.xlu0 %515
      %517 = vrot.lane.b32.xlu0 %v235, 48
      %v518 = vpop.permute.xlu0 %517
      %519 = vrot.lane.b32.xlu0 %v236, 48
      %v520 = vpop.permute.xlu0 %519
      %521 = vrot.lane.b32.xlu0 %v237, 48
      %v522 = vpop.permute.xlu0 %521
      %523 = vrot.lane.b32.xlu0 %v238, 48
      %v524 = vpop.permute.xlu0 %523
      %525 = vrot.lane.b32.xlu0 %v239, 48
      %v526 = vpop.permute.xlu0 %525
      %527 = vrot.lane.b32.xlu0 %v240, 48
      %v528 = vpop.permute.xlu0 %527
      %529 = vrot.lane.b32.xlu0 %v241, 48
      %v530 = vpop.permute.xlu0 %529
      %531 = vrot.lane.b32.xlu0 %v242, 48
      %v532 = vpop.permute.xlu0 %531
      %533 = vrot.lane.b32.xlu0 %v243, 48
      %v534 = vpop.permute.xlu0 %533
      %535 = vrot.lane.b32.xlu0 %v244, 48
      %v536 = vpop.permute.xlu0 %535
      %537 = vrot.lane.b32.xlu0 %v245, 48
      %v538 = vpop.permute.xlu0 %537
      %539 = vrot.lane.b32.xlu0 %v246, 48
      %v540 = vpop.permute.xlu0 %539
      %v565 = vrot.slane %v245, 1
      %v566 = vrot.slane %v246, 1
      %v567 = vsel %vm273, %v565, %v566
      %568 = vrot.lane.b32.xlu0 %v279, 64
      %v569 = vpop.permute.xlu0 %568
      %570 = vrot.lane.b32.xlu0 %v278, 64
      %v571 = vpop.permute.xlu0 %570
      %572 = vrot.lane.b32.xlu0 %v282, 64
      %v573 = vpop.permute.xlu0 %572
      %574 = vrot.lane.b32.xlu0 %v281, 64
      %v575 = vpop.permute.xlu0 %574
      %576 = vrot.lane.b32.xlu0 %v285, 64
      %v577 = vpop.permute.xlu0 %576
      %578 = vrot.lane.b32.xlu0 %v284, 64
      %v579 = vpop.permute.xlu0 %578
      %580 = vrot.lane.b32.xlu0 %v288, 64
      %v581 = vpop.permute.xlu0 %580
      %582 = vrot.lane.b32.xlu0 %v287, 64
      %v583 = vpop.permute.xlu0 %582
      %584 = vrot.lane.b32.xlu0 %v291, 64
      %v585 = vpop.permute.xlu0 %584
      %586 = vrot.lane.b32.xlu0 %v290, 64
      %v587 = vpop.permute.xlu0 %586
      %588 = vrot.lane.b32.xlu0 %v294, 64
      %v589 = vpop.permute.xlu0 %588
      %590 = vrot.lane.b32.xlu0 %v293, 64
      %v591 = vpop.permute.xlu0 %590
      %592 = vrot.lane.b32.xlu0 %v297, 64
      %v593 = vpop.permute.xlu0 %592
      %594 = vrot.lane.b32.xlu0 %v296, 64
      %v595 = vpop.permute.xlu0 %594
      %596 = vrot.lane.b32.xlu0 %v300, 64
      %v597 = vpop.permute.xlu0 %596
      %598 = vrot.lane.b32.xlu0 %v299, 64
      %v599 = vpop.permute.xlu0 %598
      %600 = vrot.lane.b32.xlu0 %v303, 64
      %v601 = vpop.permute.xlu0 %600
      %602 = vrot.lane.b32.xlu0 %v302, 64
      %v603 = vpop.permute.xlu0 %602
      %604 = vrot.lane.b32.xlu0 %v306, 64
      %v605 = vpop.permute.xlu0 %604
      %606 = vrot.lane.b32.xlu0 %v305, 64
      %v607 = vpop.permute.xlu0 %606
      %608 = vrot.lane.b32.xlu0 %v309, 64
      %v609 = vpop.permute.xlu0 %608
      %610 = vrot.lane.b32.xlu0 %v308, 64
      %v611 = vpop.permute.xlu0 %610
      %612 = vrot.lane.b32.xlu0 %v567, 64
      %v613 = vpop.permute.xlu0 %612
      %614 = vrot.lane.b32.xlu0 %v566, 64
      %v615 = vpop.permute.xlu0 %614
      %v640 = vrot.slane %v245, 2
      %v641 = vrot.slane %v246, 2
      %v642 = vsel %vm382, %v640, %v641
      %643 = vrot.lane.b32.xlu0 %v388, 80
      %v644 = vpop.permute.xlu0 %643
      %645 = vrot.lane.b32.xlu0 %v387, 80
      %v646 = vpop.permute.xlu0 %645
      %647 = vrot.lane.b32.xlu0 %v391, 80
      %v648 = vpop.permute.xlu0 %647
      %649 = vrot.lane.b32.xlu0 %v390, 80
      %v650 = vpop.permute.xlu0 %649
      %651 = vrot.lane.b32.xlu0 %v394, 80
      %v652 = vpop.permute.xlu0 %651
      %653 = vrot.lane.b32.xlu0 %v393, 80
      %v654 = vpop.permute.xlu0 %653
      %655 = vrot.lane.b32.xlu0 %v397, 80
      %v656 = vpop.permute.xlu0 %655
      %657 = vrot.lane.b32.xlu0 %v396, 80
      %v658 = vpop.permute.xlu0 %657
      %659 = vrot.lane.b32.xlu0 %v400, 80
      %v660 = vpop.permute.xlu0 %659
      %661 = vrot.lane.b32.xlu0 %v399, 80
      %v662 = vpop.permute.xlu0 %661
      %663 = vrot.lane.b32.xlu0 %v403, 80
      %v664 = vpop.permute.xlu0 %663
      %665 = vrot.lane.b32.xlu0 %v402, 80
      %v666 = vpop.permute.xlu0 %665
      %667 = vrot.lane.b32.xlu0 %v406, 80
      %v668 = vpop.permute.xlu0 %667
      %669 = vrot.lane.b32.xlu0 %v405, 80
      %v670 = vpop.permute.xlu0 %669
      %671 = vrot.lane.b32.xlu0 %v409, 80
      %v672 = vpop.permute.xlu0 %671
      %673 = vrot.lane.b32.xlu0 %v408, 80
      %v674 = vpop.permute.xlu0 %673
      %675 = vrot.lane.b32.xlu0 %v412, 80
      %v676 = vpop.permute.xlu0 %675
      %677 = vrot.lane.b32.xlu0 %v411, 80
      %v678 = vpop.permute.xlu0 %677
      %679 = vrot.lane.b32.xlu0 %v415, 80
      %v680 = vpop.permute.xlu0 %679
      %681 = vrot.lane.b32.xlu0 %v414, 80
      %v682 = vpop.permute.xlu0 %681
      %683 = vrot.lane.b32.xlu0 %v418, 80
      %v684 = vpop.permute.xlu0 %683
      %685 = vrot.lane.b32.xlu0 %v417, 80
      %v686 = vpop.permute.xlu0 %685
      %687 = vrot.lane.b32.xlu0 %v642, 80
      %v688 = vpop.permute.xlu0 %687
      %689 = vrot.lane.b32.xlu0 %v641, 80
      %v690 = vpop.permute.xlu0 %689
      %717 = vrot.lane.b32.xlu0 %v225, 96
      %v718 = vpop.permute.xlu0 %717
      %719 = vrot.lane.b32.xlu0 %v226, 96
      %v720 = vpop.permute.xlu0 %719
      %721 = vrot.lane.b32.xlu0 %v227, 96
      %v722 = vpop.permute.xlu0 %721
      %723 = vrot.lane.b32.xlu0 %v228, 96
      %v724 = vpop.permute.xlu0 %723
      %725 = vrot.lane.b32.xlu0 %v229, 96
      %v726 = vpop.permute.xlu0 %725
      %727 = vrot.lane.b32.xlu0 %v230, 96
      %v728 = vpop.permute.xlu0 %727
      %729 = vrot.lane.b32.xlu0 %v231, 96
      %v730 = vpop.permute.xlu0 %729
      %731 = vrot.lane.b32.xlu0 %v232, 96
      %v732 = vpop.permute.xlu0 %731
      %733 = vrot.lane.b32.xlu0 %v233, 96
      %v734 = vpop.permute.xlu0 %733
      %735 = vrot.lane.b32.xlu0 %v234, 96
      %v736 = vpop.permute.xlu0 %735
      %737 = vrot.lane.b32.xlu0 %v235, 96
      %v738 = vpop.permute.xlu0 %737
      %739 = vrot.lane.b32.xlu0 %v236, 96
      %v740 = vpop.permute.xlu0 %739
      %741 = vrot.lane.b32.xlu0 %v237, 96
      %v742 = vpop.permute.xlu0 %741
      %743 = vrot.lane.b32.xlu0 %v238, 96
      %v744 = vpop.permute.xlu0 %743
      %745 = vrot.lane.b32.xlu0 %v239, 96
      %v746 = vpop.permute.xlu0 %745
      %747 = vrot.lane.b32.xlu0 %v240, 96
      %v748 = vpop.permute.xlu0 %747
      %749 = vrot.lane.b32.xlu0 %v241, 96
      %v750 = vpop.permute.xlu0 %749
      %751 = vrot.lane.b32.xlu0 %v242, 96
      %v752 = vpop.permute.xlu0 %751
      %753 = vrot.lane.b32.xlu0 %v243, 96
      %v754 = vpop.permute.xlu0 %753
      %755 = vrot.lane.b32.xlu0 %v244, 96
      %v756 = vpop.permute.xlu0 %755
      %757 = vrot.lane.b32.xlu0 %v245, 96
      %v758 = vpop.permute.xlu0 %757
      %759 = vrot.lane.b32.xlu0 %v246, 96
      %v760 = vpop.permute.xlu0 %759
      %761 = vrot.lane.b32.xlu0 %v247, 96
      %v762 = vpop.permute.xlu0 %761
      %763 = vrot.lane.b32.xlu0 %v248, 96
      %v764 = vpop.permute.xlu0 %763
      %v789 = vrot.slane %v247, 1
      %v790 = vrot.slane %v248, 1
      %v791 = vsel %vm273, %v789, %v790
      %792 = vrot.lane.b32.xlu0 %v282, 112
      %v793 = vpop.permute.xlu0 %792
      %794 = vrot.lane.b32.xlu0 %v281, 112
      %v795 = vpop.permute.xlu0 %794
      %796 = vrot.lane.b32.xlu0 %v285, 112
      %v797 = vpop.permute.xlu0 %796
      %798 = vrot.lane.b32.xlu0 %v284, 112
      %v799 = vpop.permute.xlu0 %798
      %800 = vrot.lane.b32.xlu0 %v288, 112
      %v801 = vpop.permute.xlu0 %800
      %802 = vrot.lane.b32.xlu0 %v287, 112
      %v803 = vpop.permute.xlu0 %802
      %804 = vrot.lane.b32.xlu0 %v291, 112
      %v805 = vpop.permute.xlu0 %804
      %806 = vrot.lane.b32.xlu0 %v290, 112
      %v807 = vpop.permute.xlu0 %806
      %808 = vrot.lane.b32.xlu0 %v294, 112
      %v809 = vpop.permute.xlu0 %808
      %810 = vrot.lane.b32.xlu0 %v293, 112
      %v811 = vpop.permute.xlu0 %810
      %812 = vrot.lane.b32.xlu0 %v297, 112
      %v813 = vpop.permute.xlu0 %812
      %814 = vrot.lane.b32.xlu0 %v296, 112
      %v815 = vpop.permute.xlu0 %814
      %816 = vrot.lane.b32.xlu0 %v300, 112
      %v817 = vpop.permute.xlu0 %816
      %818 = vrot.lane.b32.xlu0 %v299, 112
      %v819 = vpop.permute.xlu0 %818
      %820 = vrot.lane.b32.xlu0 %v303, 112
      %v821 = vpop.permute.xlu0 %820
      %822 = vrot.lane.b32.xlu0 %v302, 112
      %v823 = vpop.permute.xlu0 %822
      %824 = vrot.lane.b32.xlu0 %v306, 112
      %v825 = vpop.permute.xlu0 %824
      %826 = vrot.lane.b32.xlu0 %v305, 112
      %v827 = vpop.permute.xlu0 %826
      %828 = vrot.lane.b32.xlu0 %v309, 112
      %v829 = vpop.permute.xlu0 %828
      %830 = vrot.lane.b32.xlu0 %v308, 112
      %v831 = vpop.permute.xlu0 %830
      %832 = vrot.lane.b32.xlu0 %v567, 112
      %v833 = vpop.permute.xlu0 %832
      %834 = vrot.lane.b32.xlu0 %v566, 112
      %v835 = vpop.permute.xlu0 %834
      %836 = vrot.lane.b32.xlu0 %v791, 112
      %v837 = vpop.permute.xlu0 %836
      %838 = vrot.lane.b32.xlu0 %v790, 112
      %v839 = vpop.permute.xlu0 %838
      %v864 = vrot.slane %v247, 2
      %v865 = vrot.slane %v248, 2
      %v866 = vsel %vm382, %v864, %v865
      %vm867 = vcmask 130048
      %v868 = vsel %vm867, %v221, %v311
      %v869 = vsel %vm867, %v222, %v313
      %v870 = vsel %vm867, %v223, %v315
      %v871 = vsel %vm867, %v224, %v317
      %v872 = vsel %vm867, %v225, %v319
      %v873 = vsel %vm867, %v226, %v321
      %v874 = vsel %vm867, %v227, %v323
      %v875 = vsel %vm867, %v228, %v325
      %v876 = vsel %vm867, %v229, %v327
      %v877 = vsel %vm867, %v230, %v329
      %v878 = vsel %vm867, %v231, %v331
      %v879 = vsel %vm867, %v232, %v333
      %v880 = vsel %vm867, %v233, %v335
      %v881 = vsel %vm867, %v234, %v337
      %v882 = vsel %vm867, %v235, %v339
      %v883 = vsel %vm867, %v236, %v341
      %v884 = vsel %vm867, %v237, %v343
      %v885 = vsel %vm867, %v238, %v345
      %v886 = vsel %vm867, %v239, %v347
      %v887 = vsel %vm867, %v240, %v349
      %v888 = vsel %vm867, %v241, %v351
      %v889 = vsel %vm867, %v242, %v353
      %v890 = vsel %vm867, %v243, %v355
      %v891 = vsel %vm867, %v244, %v357
      %vm892 = vcmask 261120
      %v893 = vsel %vm892, %v868, %v420
      %v894 = vsel %vm892, %v869, %v422
      %v895 = vsel %vm892, %v870, %v424
      %v896 = vsel %vm892, %v871, %v426
      %v897 = vsel %vm892, %v872, %v428
      %v898 = vsel %vm892, %v873, %v430
      %v899 = vsel %vm892, %v874, %v432
      %v900 = vsel %vm892, %v875, %v434
      %v901 = vsel %vm892, %v876, %v436
      %v902 = vsel %vm892, %v877, %v438
      %v903 = vsel %vm892, %v878, %v440
      %v904 = vsel %vm892, %v879, %v442
      %v905 = vsel %vm892, %v880, %v444
      %v906 = vsel %vm892, %v881, %v446
      %v907 = vsel %vm892, %v882, %v448
      %v908 = vsel %vm892, %v883, %v450
      %v909 = vsel %vm892, %v884, %v452
      %v910 = vsel %vm892, %v885, %v454
      %v911 = vsel %vm892, %v886, %v456
      %v912 = vsel %vm892, %v887, %v458
      %v913 = vsel %vm892, %v888, %v460
      %v914 = vsel %vm892, %v889, %v462
      %v915 = vsel %vm892, %v890, %v464
      %v916 = vsel %vm892, %v891, %v466
      %vm917 = vcmask 392192
      %v918 = vsel %vm917, %v893, %v494
      %v919 = vsel %vm917, %v894, %v496
      %v920 = vsel %vm917, %v895, %v498
      %v921 = vsel %vm917, %v896, %v500
      %v922 = vsel %vm917, %v897, %v502
      %v923 = vsel %vm917, %v898, %v504
      %v924 = vsel %vm917, %v899, %v506
      %v925 = vsel %vm917, %v900, %v508
      %v926 = vsel %vm917, %v901, %v510
      %v927 = vsel %vm917, %v902, %v512
      %v928 = vsel %vm917, %v903, %v514
      %v929 = vsel %vm917, %v904, %v516
      %v930 = vsel %vm917, %v905, %v518
      %v931 = vsel %vm917, %v906, %v520
      %v932 = vsel %vm917, %v907, %v522
      %v933 = vsel %vm917, %v908, %v524
      %v934 = vsel %vm917, %v909, %v526
      %v935 = vsel %vm917, %v910, %v528
      %v936 = vsel %vm917, %v911, %v530
      %v937 = vsel %vm917, %v912, %v532
      %v938 = vsel %vm917, %v913, %v534
      %v939 = vsel %vm917, %v914, %v536
      %v940 = vsel %vm917, %v915, %v538
      %v941 = vsel %vm917, %v916, %v540
      %vm942 = vcmask 523264
      %v943 = vsel %vm942, %v918, %v569
      %v944 = vsel %vm942, %v919, %v571
      %v945 = vsel %vm942, %v920, %v573
      %v946 = vsel %vm942, %v921, %v575
      %v947 = vsel %vm942, %v922, %v577
      %v948 = vsel %vm942, %v923, %v579
      %v949 = vsel %vm942, %v924, %v581
      %v950 = vsel %vm942, %v925, %v583
      %v951 = vsel %vm942, %v926, %v585
      %v952 = vsel %vm942, %v927, %v587
      %v953 = vsel %vm942, %v928, %v589
      %v954 = vsel %vm942, %v929, %v591
      %v955 = vsel %vm942, %v930, %v593
      %v956 = vsel %vm942, %v931, %v595
      %v957 = vsel %vm942, %v932, %v597
      %v958 = vsel %vm942, %v933, %v599
      %v959 = vsel %vm942, %v934, %v601
      %v960 = vsel %vm942, %v935, %v603
      %v961 = vsel %vm942, %v936, %v605
      %v962 = vsel %vm942, %v937, %v607
      %v963 = vsel %vm942, %v938, %v609
      %v964 = vsel %vm942, %v939, %v611
      %v965 = vsel %vm942, %v940, %v613
      %v966 = vsel %vm942, %v941, %v615
      %vm967 = vcmask 654336
      %v968 = vsel %vm967, %v943, %v644
      %v969 = vsel %vm967, %v944, %v646
      %v970 = vsel %vm967, %v945, %v648
      %v971 = vsel %vm967, %v946, %v650
      %v972 = vsel %vm967, %v947, %v652
      %v973 = vsel %vm967, %v948, %v654
      %v974 = vsel %vm967, %v949, %v656
      %v975 = vsel %vm967, %v950, %v658
      %v976 = vsel %vm967, %v951, %v660
      %v977 = vsel %vm967, %v952, %v662
      %v978 = vsel %vm967, %v953, %v664
      %v979 = vsel %vm967, %v954, %v666
      %v980 = vsel %vm967, %v955, %v668
      %v981 = vsel %vm967, %v956, %v670
      %v982 = vsel %vm967, %v957, %v672
      %v983 = vsel %vm967, %v958, %v674
      %v984 = vsel %vm967, %v959, %v676
      %v985 = vsel %vm967, %v960, %v678
      %v986 = vsel %vm967, %v961, %v680
      %v987 = vsel %vm967, %v962, %v682
      %v988 = vsel %vm967, %v963, %v684
      %v989 = vsel %vm967, %v964, %v686
      %v990 = vsel %vm967, %v965, %v688
      %v991 = vsel %vm967, %v966, %v690
      %vm992 = vcmask 785408
      %v993 = vsel %vm992, %v968, %v718
      %v994 = vsel %vm992, %v969, %v720
      %v995 = vsel %vm992, %v970, %v722
      %v996 = vsel %vm992, %v971, %v724
      %v997 = vsel %vm992, %v972, %v726
      %v998 = vsel %vm992, %v973, %v728
      %v999 = vsel %vm992, %v974, %v730
      %v1000 = vsel %vm992, %v975, %v732
      %v1001 = vsel %vm992, %v976, %v734
      %v1002 = vsel %vm992, %v977, %v736
      %v1003 = vsel %vm992, %v978, %v738
      %v1004 = vsel %vm992, %v979, %v740
      %v1005 = vsel %vm992, %v980, %v742
      %v1006 = vsel %vm992, %v981, %v744
      %v1007 = vsel %vm992, %v982, %v746
      %v1008 = vsel %vm992, %v983, %v748
      %v1009 = vsel %vm992, %v984, %v750
      %v1010 = vsel %vm992, %v985, %v752
      %v1011 = vsel %vm992, %v986, %v754
      %v1012 = vsel %vm992, %v987, %v756
      %v1013 = vsel %vm992, %v988, %v758
      %v1014 = vsel %vm992, %v989, %v760
      %v1015 = vsel %vm992, %v990, %v762
      %v1016 = vsel %vm992, %v991, %v764
      %vm1017 = vcmask 916480
      %v1018 = vsel %vm1017, %v993, %v793
      %v1019 = vsel %vm1017, %v994, %v795
      %v1020 = vsel %vm1017, %v995, %v797
      %v1021 = vsel %vm1017, %v996, %v799
      %v1022 = vsel %vm1017, %v997, %v801
      %v1023 = vsel %vm1017, %v998, %v803
      %v1024 = vsel %vm1017, %v999, %v805
      %v1025 = vsel %vm1017, %v1000, %v807
      %v1026 = vsel %vm1017, %v1001, %v809
      %v1027 = vsel %vm1017, %v1002, %v811
      %v1028 = vsel %vm1017, %v1003, %v813
      %v1029 = vsel %vm1017, %v1004, %v815
      %v1030 = vsel %vm1017, %v1005, %v817
      %v1031 = vsel %vm1017, %v1006, %v819
      %v1032 = vsel %vm1017, %v1007, %v821
      %v1033 = vsel %vm1017, %v1008, %v823
      %v1034 = vsel %vm1017, %v1009, %v825
      %v1035 = vsel %vm1017, %v1010, %v827
      %v1036 = vsel %vm1017, %v1011, %v829
      %v1037 = vsel %vm1017, %v1012, %v831
      %v1038 = vsel %vm1017, %v1013, %v833
      %v1039 = vsel %vm1017, %v1014, %v835
      %v1040 = vsel %vm1017, %v1015, %v837
      %v1041 = vsel %vm1017, %v1016, %v839
      %v1066 = vrot.slane %v391, 4
      %v1067 = vrot.slane %v390, 4
      %v1068 = vrot.slane %v394, 4
      %v1069 = vrot.slane %v393, 4
      %v1070 = vrot.slane %v397, 4
      %v1071 = vrot.slane %v396, 4
      %v1072 = vrot.slane %v400, 4
      %v1073 = vrot.slane %v399, 4
      %v1074 = vrot.slane %v403, 4
      %v1075 = vrot.slane %v402, 4
      %v1076 = vrot.slane %v406, 4
      %v1077 = vrot.slane %v405, 4
      %v1078 = vrot.slane %v409, 4
      %v1079 = vrot.slane %v408, 4
      %v1080 = vrot.slane %v412, 4
      %v1081 = vrot.slane %v411, 4
      %v1082 = vrot.slane %v415, 4
      %v1083 = vrot.slane %v414, 4
      %v1084 = vrot.slane %v418, 4
      %v1085 = vrot.slane %v417, 4
      %v1086 = vrot.slane %v642, 4
      %v1087 = vrot.slane %v641, 4
      %v1088 = vrot.slane %v866, 4
      %v1089 = vrot.slane %v865, 4
      %vm1090 = vcmask 1043456
      %v1091 = vsel %vm1090, %v1018, %v1066
      %v1092 = vsel %vm1090, %v1066, %v1018
      %v1093 = vrot.slane %v1092, 4
      %v1094 = vsel %vm1090, %v1019, %v1067
      %v1095 = vsel %vm1090, %v1020, %v1068
      %v1096 = vsel %vm1090, %v1068, %v1020
      %v1097 = vrot.slane %v1096, 4
      %v1098 = vsel %vm1090, %v1021, %v1069
      %v1099 = vsel %vm1090, %v1022, %v1070
      %v1100 = vsel %vm1090, %v1070, %v1022
      %v1101 = vrot.slane %v1100, 4
      %v1102 = vsel %vm1090, %v1023, %v1071
      %v1103 = vsel %vm1090, %v1024, %v1072
      %v1104 = vsel %vm1090, %v1072, %v1024
      %v1105 = vrot.slane %v1104, 4
      %v1106 = vsel %vm1090, %v1025, %v1073
      %v1107 = vsel %vm1090, %v1026, %v1074
      %v1108 = vsel %vm1090, %v1074, %v1026
      %v1109 = vrot.slane %v1108, 4
      %v1110 = vsel %vm1090, %v1027, %v1075
      %v1111 = vsel %vm1090, %v1028, %v1076
      %v1112 = vsel %vm1090, %v1076, %v1028
      %v1113 = vrot.slane %v1112, 4
      %v1114 = vsel %vm1090, %v1029, %v1077
      %v1115 = vsel %vm1090, %v1030, %v1078
      %v1116 = vsel %vm1090, %v1078, %v1030
      %v1117 = vrot.slane %v1116, 4
      %v1118 = vsel %vm1090, %v1031, %v1079
      %v1119 = vsel %vm1090, %v1032, %v1080
      %v1120 = vsel %vm1090, %v1080, %v1032
      %v1121 = vrot.slane %v1120, 4
      %v1122 = vsel %vm1090, %v1033, %v1081
      %v1123 = vsel %vm1090, %v1034, %v1082
      %v1124 = vsel %vm1090, %v1082, %v1034
      %v1125 = vrot.slane %v1124, 4
      %v1126 = vsel %vm1090, %v1035, %v1083
      %v1127 = vsel %vm1090, %v1036, %v1084
      %v1128 = vsel %vm1090, %v1084, %v1036
      %v1129 = vrot.slane %v1128, 4
      %v1130 = vsel %vm1090, %v1037, %v1085
      %v1131 = vsel %vm1090, %v1038, %v1086
      %v1132 = vsel %vm1090, %v1086, %v1038
      %v1133 = vrot.slane %v1132, 4
      %v1134 = vsel %vm1090, %v1039, %v1087
      %v1135 = vsel %vm1090, %v1040, %v1088
      %v1136 = vsel %vm1090, %v1088, %v1040
      %v1137 = vrot.slane %v1136, 4
      %v1138 = vsel %vm1090, %v1041, %v1089
      %v1139 = vld [vmem:[%s1] sm:$0xff]
      %v1140 = vld [vmem:[%s1 + $0x8] sm:$0xff]
      %v1141 = vld [vmem:[%s1 + $0x10] sm:$0xff]
      %v1142 = vld [vmem:[%s1 + $0x18] sm:$0xff]
      %v1143 = vld [vmem:[%s1 + $0x20] sm:$0xff]
      %v1144 = vld [vmem:[%s1 + $0x28] sm:$0xff]
      %v1145 = vld [vmem:[%s1 + $0x30] sm:$0xff]
      %v1146 = vld [vmem:[%s1 + $0x38] sm:$0xff]
      %v1147 = vld [vmem:[%s1 + $0x40] sm:$0xff]
      %v1148 = vld [vmem:[%s1 + $0x48] sm:$0xff]
      %v1149 = vld [vmem:[%s1 + $0x50] sm:$0xff]
      %v1150 = vld [vmem:[%s1 + $0x58] sm:$0xff]
      %v1151 = vld [vmem:[%s1 + $0x60] sm:$0xff]
      %v1152 = vld [vmem:[%s1 + $0x68] sm:$0xff]
      %v1153 = vld [vmem:[%s1 + $0x70] sm:$0xff]
      %v1154 = vld [vmem:[%s1 + $0x78] sm:$0xff]
      %v1155 = vld [vmem:[%s1 + $0x80] sm:$0xff]
      %v1156 = vld [vmem:[%s1 + $0x88] sm:$0xff]
      %v1157 = vld [vmem:[%s2] sm:$0x1]
      %v1159 = vperm.slane %v1157, 0
      %1161 = vst [vmem:[#allocation1] ss:$2 sm:$0xff] %v1091
      %s1162 = scalar_lea.vmem [#allocation1], 1
      %1163 = vst [vmem:[%s1162] ss:$2 sm:$0xff] %v1093
      %s1164 = scalar_lea.vmem [#allocation1], 16
      %1165 = vst [vmem:[%s1164] ss:$2 sm:$0xff] %v1094
      %s1166 = scalar_lea.vmem [#allocation1], 17
      %1167 = vst [vmem:[%s1166] ss:$2 sm:$0xff] %v1095
      %s1168 = scalar_lea.vmem [#allocation1], 32
      %1169 = vst [vmem:[%s1168] ss:$2 sm:$0xff] %v1097
      %s1170 = scalar_lea.vmem [#allocation1], 33
      %1171 = vst [vmem:[%s1170] ss:$2 sm:$0xff] %v1098
      %s1172 = scalar_lea.vmem [#allocation1], 48
      %1173 = vst [vmem:[%s1172] ss:$2 sm:$0xff] %v1099
      %s1174 = scalar_lea.vmem [#allocation1], 49
      %1175 = vst [vmem:[%s1174] ss:$2 sm:$0xff] %v1101
      %v1176 = vld.sshfl [vmem:[#allocation1] sm:$0xff pattern:$0x75316420]
      %v1177 = vld.sshfl [vmem:[#allocation1 + $0x8] sm:$0xff pattern:$0x75316420]
      %v1178 = vld.sshfl [vmem:[#allocation1 + $0x10] sm:$0xff pattern:$0x75316420]
      %v1179 = vld.sshfl [vmem:[#allocation1 + $0x18] sm:$0xff pattern:$0x75316420]
      %v1180 = vld.sshfl [vmem:[#allocation1 + $0x20] sm:$0xff pattern:$0x75316420]
      %v1181 = vld.sshfl [vmem:[#allocation1 + $0x28] sm:$0xff pattern:$0x75316420]
      %v1182 = vld.sshfl [vmem:[#allocation1 + $0x30] sm:$0xff pattern:$0x75316420]
      %v1183 = vld.sshfl [vmem:[#allocation1 + $0x38] sm:$0xff pattern:$0x75316420]
      %1184 = vst [vmem:[#allocation1] ss:$2 sm:$0xff] %v1102
      %1185 = vst [vmem:[%s1162] ss:$2 sm:$0xff] %v1103
      %1186 = vst [vmem:[%s1164] ss:$2 sm:$0xff] %v1105
      %1187 = vst [vmem:[%s1166] ss:$2 sm:$0xff] %v1106
      %1188 = vst [vmem:[%s1168] ss:$2 sm:$0xff] %v1107
      %1189 = vst [vmem:[%s1170] ss:$2 sm:$0xff] %v1109
      %1190 = vst [vmem:[%s1172] ss:$2 sm:$0xff] %v1110
      %1191 = vst [vmem:[%s1174] ss:$2 sm:$0xff] %v1111
      %v1192 = vld.sshfl [vmem:[#allocation1] sm:$0xff pattern:$0x75316420]
      %v1193 = vld.sshfl [vmem:[#allocation1 + $0x8] sm:$0xff pattern:$0x75316420]
      %v1194 = vld.sshfl [vmem:[#allocation1 + $0x10] sm:$0xff pattern:$0x75316420]
      %v1195 = vld.sshfl [vmem:[#allocation1 + $0x18] sm:$0xff pattern:$0x75316420]
      %v1196 = vld.sshfl [vmem:[#allocation1 + $0x20] sm:$0xff pattern:$0x75316420]
      %v1197 = vld.sshfl [vmem:[#allocation1 + $0x28] sm:$0xff pattern:$0x75316420]
      %v1198 = vld.sshfl [vmem:[#allocation1 + $0x30] sm:$0xff pattern:$0x75316420]
      %v1199 = vld.sshfl [vmem:[#allocation1 + $0x38] sm:$0xff pattern:$0x75316420]
      %1200 = vst [vmem:[#allocation1] ss:$2 sm:$0xff] %v1113
      %1201 = vst [vmem:[%s1162] ss:$2 sm:$0xff] %v1114
      %1202 = vst [vmem:[%s1164] ss:$2 sm:$0xff] %v1115
      %1203 = vst [vmem:[%s1166] ss:$2 sm:$0xff] %v1117
      %1204 = vst [vmem:[%s1168] ss:$2 sm:$0xff] %v1118
      %1205 = vst [vmem:[%s1170] ss:$2 sm:$0xff] %v1119
      %1206 = vst [vmem:[%s1172] ss:$2 sm:$0xff] %v1121
      %1207 = vst [vmem:[%s1174] ss:$2 sm:$0xff] %v1122
      %v1208 = vld.sshfl [vmem:[#allocation1] sm:$0xff pattern:$0x75316420]
      %v1209 = vld.sshfl [vmem:[#allocation1 + $0x8] sm:$0xff pattern:$0x75316420]
      %v1210 = vld.sshfl [vmem:[#allocation1 + $0x10] sm:$0xff pattern:$0x75316420]
      %v1211 = vld.sshfl [vmem:[#allocation1 + $0x18] sm:$0xff pattern:$0x75316420]
      %v1212 = vld.sshfl [vmem:[#allocation1 + $0x20] sm:$0xff pattern:$0x75316420]
      %v1213 = vld.sshfl [vmem:[#allocation1 + $0x28] sm:$0xff pattern:$0x75316420]
      %v1214 = vld.sshfl [vmem:[#allocation1 + $0x30] sm:$0xff pattern:$0x75316420]
      %v1215 = vld.sshfl [vmem:[#allocation1 + $0x38] sm:$0xff pattern:$0x75316420]
      %1216 = vst [vmem:[#allocation1] ss:$2 sm:$0xff] %v1123
      %1217 = vst [vmem:[%s1162] ss:$2 sm:$0xff] %v1125
      %1218 = vst [vmem:[%s1164] ss:$2 sm:$0xff] %v1126
      %1219 = vst [vmem:[%s1166] ss:$2 sm:$0xff] %v1127
      %1220 = vst [vmem:[%s1168] ss:$2 sm:$0xff] %v1129
      %1221 = vst [vmem:[%s1170] ss:$2 sm:$0xff] %v1130
      %1222 = vst [vmem:[%s1172] ss:$2 sm:$0xff] %v1131
      %1223 = vst [vmem:[%s1174] ss:$2 sm:$0xff] %v1133
      %v1224 = vld.sshfl [vmem:[#allocation1] sm:$0xff pattern:$0x75316420]
      %v1225 = vld.sshfl [vmem:[#allocation1 + $0x8] sm:$0xff pattern:$0x75316420]
      %v1226 = vld.sshfl [vmem:[#allocation1 + $0x10] sm:$0xff pattern:$0x75316420]
      %v1227 = vld.sshfl [vmem:[#allocation1 + $0x18] sm:$0xff pattern:$0x75316420]
      %v1228 = vld.sshfl [vmem:[#allocation1 + $0x20] sm:$0xff pattern:$0x75316420]
      %v1229 = vld.sshfl [vmem:[#allocation1 + $0x28] sm:$0xff pattern:$0x75316420]
      %v1230 = vld.sshfl [vmem:[#allocation1 + $0x30] sm:$0xff pattern:$0x75316420]
      %v1231 = vld.sshfl [vmem:[#allocation1 + $0x38] sm:$0xff pattern:$0x75316420]
      %1232 = vst [vmem:[#allocation1] ss:$2 sm:$0xff] %v1134
      %1233 = vst [vmem:[%s1162] ss:$2 sm:$0xff] %v1135
      %1234 = vst [vmem:[%s1164] ss:$2 sm:$0xff] %v1137
      %1235 = vst [vmem:[%s1166] ss:$2 sm:$0xff] %v1138
      %v1236 = vld.sshfl [vmem:[#allocation1] sm:$0xff pattern:$0x75316420]
      %v1237 = vld.sshfl [vmem:[#allocation1 + $0x8] sm:$0xff pattern:$0x75316420]
      %v1238 = vld.sshfl [vmem:[#allocation1 + $0x10] sm:$0xff pattern:$0x75316420]
      %v1239 = vld.sshfl [vmem:[#allocation1 + $0x18] sm:$0xff pattern:$0x75316420]
      %v1258 = vsel %vm867, %v1177, 0
      %v1260 = vsel %vm867, %v1179, 0
      %v1262 = vsel %vm867, %v1181, 0
      %v1264 = vsel %vm867, %v1183, 0
      %v1266 = vsel %vm867, %v1193, 0
      %v1268 = vsel %vm867, %v1195, 0
      %v1270 = vsel %vm867, %v1197, 0
      %v1272 = vsel %vm867, %v1199, 0
      %v1274 = vsel %vm867, %v1209, 0
      %v1276 = vsel %vm867, %v1211, 0
      %v1278 = vsel %vm867, %v1213, 0
      %v1280 = vsel %vm867, %v1215, 0
      %v1282 = vsel %vm867, %v1225, 0
      %v1284 = vsel %vm867, %v1227, 0
      %v1286 = vsel %vm867, %v1229, 0
      %v1288 = vsel %vm867, %v1231, 0
      %v1290 = vsel %vm867, %v1237, 0
      %v1292 = vsel %vm867, %v1239, 0
      %1294 = vmatpush.msra.mxu0 %v1154
      %1295 = vmatpush.msra.mxu0 %v1153
      %1296 = vmatpush.msra.mxu0 %v1152
      %1297 = vmatpush.msra.mxu0 %v1151
      %1298 = vmatpush.msra.mxu0 %v1150
      %1299 = vmatpush.msra.mxu0 %v1149
      %1300 = vmatpush.msra.mxu0 %v1148
      %1301 = vmatpush.msra.mxu0 %v1147
      %1302 = vmatpush.msra.mxu0 %v1146
      %1303 = vmatpush.msra.mxu0 %v1145
      %1304 = vmatpush.msra.mxu0 %v1144
      %1305 = vmatpush.msra.mxu0 %v1143
      %1306 = vmatpush.msra.mxu0 %v1142
      %1307 = vmatpush.msra.mxu0 %v1141
      %1308 = vmatpush.msra.mxu0 %v1140
      %1309 = vmatpush.msra.mxu0 %v1139
      %1310 = vmatmul.f32.gmra.mxu0 %v1176
      %v1311 = vpop.f32.mrf.mxu0
      %v1312 = vadd.f32 %v1159, %v1311
      %1313 = vmatmul.f32.gmra.mxu0 %v1178
      %v1314 = vpop.f32.mrf.mxu0
      %v1315 = vadd.f32 %v1159, %v1314
      %1316 = vmatmul.f32.gmra.mxu0 %v1180
      %v1317 = vpop.f32.mrf.mxu0
      %v1318 = vadd.f32 %v1159, %v1317
      %1319 = vmatmul.f32.gmra.mxu0 %v1182
      %v1320 = vpop.f32.mrf.mxu0
      %v1321 = vadd.f32 %v1159, %v1320
      %1322 = vmatmul.f32.gmra.mxu0 %v1192
      %v1323 = vpop.f32.mrf.mxu0
      %v1324 = vadd.f32 %v1159, %v1323
      %1325 = vmatmul.f32.gmra.mxu0 %v1194
      %v1326 = vpop.f32.mrf.mxu0
      %v1327 = vadd.f32 %v1159, %v1326
      %1328 = vmatmul.f32.gmra.mxu0 %v1196
      %v1329 = vpop.f32.mrf.mxu0
      %v1330 = vadd.f32 %v1159, %v1329
      %1331 = vmatmul.f32.gmra.mxu0 %v1198
      %v1332 = vpop.f32.mrf.mxu0
      %v1333 = vadd.f32 %v1159, %v1332
      %1334 = vmatmul.f32.gmra.mxu0 %v1208
      %v1335 = vpop.f32.mrf.mxu0
      %v1336 = vadd.f32 %v1159, %v1335
      %1337 = vmatmul.f32.gmra.mxu0 %v1210
      %v1338 = vpop.f32.mrf.mxu0
      %v1339 = vadd.f32 %v1159, %v1338
      %1340 = vmatmul.f32.gmra.mxu0 %v1212
      %v1341 = vpop.f32.mrf.mxu0
      %v1342 = vadd.f32 %v1159, %v1341
      %1343 = vmatmul.f32.gmra.mxu0 %v1214
      %v1344 = vpop.f32.mrf.mxu0
      %v1345 = vadd.f32 %v1159, %v1344
      %1346 = vmatmul.f32.gmra.mxu0 %v1224
      %v1347 = vpop.f32.mrf.mxu0
      %v1348 = vadd.f32 %v1159, %v1347
      %1349 = vmatmul.f32.gmra.mxu0 %v1226
      %v1350 = vpop.f32.mrf.mxu0
      %v1351 = vadd.f32 %v1159, %v1350
      %1352 = vmatmul.f32.gmra.mxu0 %v1228
      %v1353 = vpop.f32.mrf.mxu0
      %v1354 = vadd.f32 %v1159, %v1353
      %1355 = vmatmul.f32.gmra.mxu0 %v1230
      %v1356 = vpop.f32.mrf.mxu0
      %v1357 = vadd.f32 %v1159, %v1356
      %1358 = vmatmul.f32.gmra.mxu0 %v1236
      %v1359 = vpop.f32.mrf.mxu0
      %v1360 = vadd.f32 %v1159, %v1359
      %1361 = vmatmul.f32.gmra.mxu0 %v1238
      %v1362 = vpop.f32.mrf.mxu0
      %v1363 = vadd.f32 %v1159, %v1362
      %1364 = vdwg.mxu0
      %1365 = vmatpush.msra.mxu0 0.0
      %1366 = vmatpush.msra.mxu0 0.0
      %1367 = vmatpush.msra.mxu0 0.0
      %1368 = vmatpush.msra.mxu0 0.0
      %1369 = vmatpush.msra.mxu0 0.0
      %1370 = vmatpush.msra.mxu0 0.0
      %1371 = vmatpush.msra.mxu0 0.0
      %1372 = vmatpush.msra.mxu0 0.0
      %1373 = vmatpush.msra.mxu0 0.0
      %1374 = vmatpush.msra.mxu0 0.0
      %1375 = vmatpush.msra.mxu0 0.0
      %1376 = vmatpush.msra.mxu0 0.0
      %1377 = vmatpush.msra.mxu0 0.0
      %1378 = vmatpush.msra.mxu0 0.0
      %1379 = vmatpush.msra.mxu0 %v1156
      %1380 = vmatpush.msra.mxu0 %v1155
      %1381 = vmatmul.f32.gmra.mxu0 %v1258
      %v1382 = vpop.f32.mrf.mxu0
      %v1383 = vadd.f32 %v1312, %v1382
      %1384 = vmatmul.f32.gmra.mxu0 %v1260
      %v1385 = vpop.f32.mrf.mxu0
      %v1386 = vadd.f32 %v1315, %v1385
      %1387 = vmatmul.f32.gmra.mxu0 %v1262
      %v1388 = vpop.f32.mrf.mxu0
      %v1389 = vadd.f32 %v1318, %v1388
      %1390 = vmatmul.f32.gmra.mxu0 %v1264
      %v1391 = vpop.f32.mrf.mxu0
      %v1392 = vadd.f32 %v1321, %v1391
      %1393 = vmatmul.f32.gmra.mxu0 %v1266
      %v1394 = vpop.f32.mrf.mxu0
      %v1395 = vadd.f32 %v1324, %v1394
      %1396 = vmatmul.f32.gmra.mxu0 %v1268
      %v1397 = vpop.f32.mrf.mxu0
      %v1398 = vadd.f32 %v1327, %v1397
      %1399 = vmatmul.f32.gmra.mxu0 %v1270
      %v1400 = vpop.f32.mrf.mxu0
      %v1401 = vadd.f32 %v1330, %v1400
      %1402 = vmatmul.f32.gmra.mxu0 %v1272
      %v1403 = vpop.f32.mrf.mxu0
      %v1404 = vadd.f32 %v1333, %v1403
      %1405 = vmatmul.f32.gmra.mxu0 %v1274
      %v1406 = vpop.f32.mrf.mxu0
      %v1407 = vadd.f32 %v1336, %v1406
      %1408 = vmatmul.f32.gmra.mxu0 %v1276
      %v1409 = vpop.f32.mrf.mxu0
      %v1410 = vadd.f32 %v1339, %v1409
      %1411 = vmatmul.f32.gmra.mxu0 %v1278
      %v1412 = vpop.f32.mrf.mxu0
      %v1413 = vadd.f32 %v1342, %v1412
      %1414 = vmatmul.f32.gmra.mxu0 %v1280
      %v1415 = vpop.f32.mrf.mxu0
      %v1416 = vadd.f32 %v1345, %v1415
      %1417 = vmatmul.f32.gmra.mxu0 %v1282
      %v1418 = vpop.f32.mrf.mxu0
      %v1419 = vadd.f32 %v1348, %v1418
      %1420 = vmatmul.f32.gmra.mxu0 %v1284
      %v1421 = vpop.f32.mrf.mxu0
      %v1422 = vadd.f32 %v1351, %v1421
      %1423 = vmatmul.f32.gmra.mxu0 %v1286
      %v1424 = vpop.f32.mrf.mxu0
      %v1425 = vadd.f32 %v1354, %v1424
      %1426 = vmatmul.f32.gmra.mxu0 %v1288
      %v1427 = vpop.f32.mrf.mxu0
      %v1428 = vadd.f32 %v1357, %v1427
      %1429 = vmatmul.f32.gmra.mxu0 %v1290
      %v1430 = vpop.f32.mrf.mxu0
      %v1431 = vadd.f32 %v1360, %v1430
      %1432 = vmatmul.f32.gmra.mxu0 %v1292
      %v1433 = vpop.f32.mrf.mxu0
      %v1434 = vadd.f32 %v1363, %v1433
      %1435 = vdwg.mxu0
      %v1436 = vmax.f32 %v1383, 0.0
      %v1437 = vmax.f32 %v1386, 0.0
      %v1438 = vmax.f32 %v1389, 0.0
      %v1439 = vmax.f32 %v1392, 0.0
      %v1440 = vmax.f32 %v1395, 0.0
      %v1441 = vmax.f32 %v1398, 0.0
      %v1442 = vmax.f32 %v1401, 0.0
      %v1443 = vmax.f32 %v1404, 0.0
      %v1444 = vmax.f32 %v1407, 0.0
      %v1445 = vmax.f32 %v1410, 0.0
      %v1446 = vmax.f32 %v1413, 0.0
      %v1447 = vmax.f32 %v1416, 0.0
      %v1448 = vmax.f32 %v1419, 0.0
      %v1449 = vmax.f32 %v1422, 0.0
      %v1450 = vmax.f32 %v1425, 0.0
      %v1451 = vmax.f32 %v1428, 0.0
      %v1452 = vmax.f32 %v1431, 0.0
      %v1453 = vmax.f32 %v1434, 0.0
      %v1454 = vsel %vm892, %v1436, 0.0
      %v1455 = vsel %vm892, %v1437, 0.0
      %v1456 = vadd.f32 %v1454, %v1455
      %v1457 = vsel %vm892, %v1438, 0.0
      %v1458 = vadd.f32 %v1456, %v1457
      %v1459 = vsel %vm892, %v1439, 0.0
      %v1460 = vadd.f32 %v1458, %v1459
      %v1461 = vsel %vm892, %v1440, 0.0
      %v1462 = vadd.f32 %v1460, %v1461
      %v1463 = vsel %vm892, %v1441, 0.0
      %v1464 = vadd.f32 %v1462, %v1463
      %v1465 = vsel %vm892, %v1442, 0.0
      %v1466 = vadd.f32 %v1464, %v1465
      %v1467 = vsel %vm892, %v1443, 0.0
      %v1468 = vadd.f32 %v1466, %v1467
      %v1469 = vsel %vm892, %v1444, 0.0
      %v1470 = vadd.f32 %v1468, %v1469
      %v1471 = vsel %vm892, %v1445, 0.0
      %v1472 = vadd.f32 %v1470, %v1471
      %v1473 = vsel %vm892, %v1446, 0.0
      %v1474 = vadd.f32 %v1472, %v1473
      %v1475 = vsel %vm892, %v1447, 0.0
      %v1476 = vadd.f32 %v1474, %v1475
      %v1477 = vsel %vm892, %v1448, 0.0
      %v1478 = vadd.f32 %v1476, %v1477
      %v1479 = vsel %vm892, %v1449, 0.0
      %v1480 = vadd.f32 %v1478, %v1479
      %v1481 = vsel %vm892, %v1450, 0.0
      %v1482 = vadd.f32 %v1480, %v1481
      %v1483 = vsel %vm892, %v1451, 0.0
      %v1484 = vadd.f32 %v1482, %v1483
      %v1485 = vsel %vm892, %v1452, 0.0
      %v1486 = vadd.f32 %v1484, %v1485
      %v1487 = vsel %vm892, %v1453, 0.0
      %v1488 = vadd.f32 %v1486, %v1487
      %v1489 = vrot.slane %v1488, 4
      %v1490 = vadd.f32 %v1488, %v1489
      %v1491 = vrot.slane %v1490, 2
      %v1492 = vadd.f32 %v1490, %v1491
      %v1493 = vrot.slane %v1492, 1
      %v1494 = vadd.f32 %v1492, %v1493
      %v1495 = vrcp.pop 144.0
      %v1496 = vmul.f32 144.0, %v1495
      %v1497 = vsub.f32 1.0, %v1496
      %v1498 = vmul.f32 %v1495, %v1497
      %v1499 = vadd.f32 %v1495, %v1498
      %vm1500 = vweird.f32 %v1495
      %v1501 = vsel %vm1500, %v1495, %v1499
      %v1502 = vmul.f32 %v1494, %v1501
      %v1503 = vld [vmem:[%s3] sm:$0xff]
      %v1504 = vld [vmem:[%s3 + $0x8] sm:$0xff]
      %v1505 = vld [vmem:[%s3 + $0x10] sm:$0xff]
      %v1506 = vld [vmem:[%s3 + $0x18] sm:$0xff]
      %v1507 = vld [vmem:[%s4] sm:$0x1]
      %v1509 = vsel %vm892, %v1502, 0
      %1511 = vmatpush.msra.mxu0 0.0
      %1512 = vmatpush.msra.mxu0 0.0
      %1513 = vmatpush.msra.mxu0 0.0
      %1514 = vmatpush.msra.mxu0 0.0
      %1515 = vmatpush.msra.mxu0 0.0
      %1516 = vmatpush.msra.mxu0 0.0
      %1517 = vmatpush.msra.mxu0 0.0
      %1518 = vmatpush.msra.mxu0 0.0
      %1519 = vmatpush.msra.mxu0 0.0
      %1520 = vmatpush.msra.mxu0 0.0
      %1521 = vmatpush.msra.mxu0 0.0
      %1522 = vmatpush.msra.mxu0 0.0
      %1523 = vmatpush.msra.mxu0 %v1506
      %1524 = vmatpush.msra.mxu0 %v1505
      %1525 = vmatpush.msra.mxu0 %v1504
      %1526 = vmatpush.msra.mxu0 %v1503
      %1527 = vmatmul.f32.gmra.mxu0 %v1509
      %v1528 = vpop.f32.mrf.mxu0
      %v1529 = vadd.f32 %v1507, %v1528
      %1530 = vdwg.mxu0
      %vm1531 = vcmask 155648
      %1532 = vst.msk [vmem:[%s220] sm:$0x1] %vm1531, %v1529
      %p1533 = scmp.lt.s32.totalorder %s16, 1
      %s1534 = scalar_select %p1533, %s16, 1
      %s1535 = scalar_lea.vmem %s5, %s1534
      // Predicated region
      $region41: #{conv_model_forward.3} parent=39 // pred_check
        %p1536 = pneg %p144
      $region42: #{conv_model_forward.3} parent=39 // pred_check_branch
        %1538 = sbr.rel (%p1536) target = $region44
      $region43: #{conv_model_forward.3} parent=39 // pred_region
        _
      $region44: #{conv_model_forward.3} parent=39 // pred_fallthru
        _
    $region40: #{conv_model_forward.3} parent=5 // pred_fallthru
      _
    %p1539 = scmp.le.s32.totalorder 2, %s11
    // Predicated region
    $region45: #{conv_model_forward.3} parent=5 // pred_check
      %p1540 = pneg %p1539
    $region46: #{conv_model_forward.3} parent=5 // pred_check_branch
      %1542 = sbr.rel (%p1540) target = $region48
    $region47: #{conv_model_forward.3} parent=5 // pred_region
      %s1543 = ssub.s32 %s11, 2
      // Predicated region
      $region49: #{conv_model_forward.3} parent=47 // pred_check
        %p1544 = pneg %p150
      $region50: #{conv_model_forward.3} parent=47 // pred_check_branch
        %1546 = sbr.rel (%p1544) target = $region52
      $region51: #{conv_model_forward.3} parent=47 // pred_region
        %p1547 = scmp.lt.s32.totalorder %s17, 1
        %s1548 = scalar_select %p1547, %s17, 1
        %s1549 = scalar_lea.vmem %s5, %s1548
      $region52: #{conv_model_forward.3} parent=47 // pred_fallthru
        _
    $region48: #{conv_model_forward.3} parent=5 // pred_fallthru
      _
  $region6: #{conv_model_forward.3} parent=0 // loop_footer
    %s15 = sadd.s32 1, %s11
  $region7: #{conv_model_forward.3} parent=0 // loop_footer_branch
    %10 = sbr.rel target = $region3
  $region8: #{conv_model_forward.3} parent=0 // loop_exit
    _

// kernel: conv_model_forward.2
$region0: #{conv_model_forward.2}
  #allocation0 [shape = 'u32[]', space=smem, size = 0x4, offset = 0x4, fixed_abs, tag = 'smem constant byte address 0x4 - core index']
  #allocation1 [shape = 'u32[72,128]{1,0:T(1,128)}', space=vmem, size = 0x9000, scoped, tag = 'internal scratch']
  %s0 = inlined_call_operand.vmem [shape: f32[2,16,16,4], index: 0, kind: input, shape index: {}]
  %s1 = inlined_call_operand.vmem [shape: f32[36,16], index: 1, kind: input, shape index: {}]
  %s2 = inlined_call_operand.vmem [shape: f32[1,16], index: 2, kind: input, shape index: {}]
  %s3 = inlined_call_operand.vmem [shape: f32[2,14,14,16], index: 3, kind: output, shape index: {}]
  %s4 = sld [smem:[#allocation0]]
  $region45: #{conv_model_forward.2} parent=0
    _
  %s6 = ssub.s32 1, %s4
  %s7 = scalar_select 0, %s6, %s4
  loop: start=0, step=1, limit=4
  $region2: #{conv_model_forward.2} parent=0 // loop_pre_header
    _
  $region3: #{conv_model_forward.2} parent=0 // loop_header
    %s9 = sphi 0, %s13
    %p10 = scmp.ge.s32.totalorder %s9, 4
    %s19 = sphi 0, %s21
    %s22 = sphi 0, %s19
    %s23 = sphi 0, %s22
    %s39 = sphi 0, %s23
    %s43 = sphi 0, %s43
    %s45 = sphi 0, %s43
    %s46 = sphi 0, %s45
    %s60 = sphi 0, %s46
    %s64 = sphi 0, %s64
    %s66 = sphi 0, %s64
    %s67 = sphi 0, %s66
    %s81 = sphi 0, %s67
    %s87 = sphi 0, %s89
    %s90 = sphi 0, %s87
    %s91 = sphi 0, %s90
    %s107 = sphi 0, %s91
  $region4: #{conv_model_forward.2} parent=0 // loop_header_branch
    %12 = sbr.rel (%p10) target = $region8
  $region5: #{conv_model_forward.2} parent=0 // loop_body
    %s14 = ssub.s32 %s9, 1
    %s15 = ssub.s32 %s9, 2
    %s16 = sadd.s32 %s9, 1
    %s17 = ssub.s32 %s9, %s16
    %p18 = scmp.eq.s32.totalorder %s17, 0
    %s20 = sadd.s32 %s19, 1
    %s21 = scalar_select %p18, %s19, %s20
    %p24 = pneg %p18
    %p25 = scmp.eq.s32.totalorder %s9, 1
    %p26 = por %p24, %p25
    %p27 = scmp.ne.s32.totalorder %s19, %s22
    %p28 = scmp.eq.s32.totalorder %s9, 0
    %p29 = por %p27, %p28
    %p30 = scmp.ne.s32.totalorder %s19, %s22
    %p31 = scmp.eq.s32.totalorder %s14, 1
    %p32 = por %p30, %p31
    %p33 = scmp.ne.s32.totalorder %s22, %s23
    %p34 = scmp.eq.s32.totalorder %s14, 0
    %p35 = por %p33, %p34
    %p36 = scmp.ne.s32.totalorder %s22, %s23
    %p37 = scmp.eq.s32.totalorder %s15, 1
    %p38 = por %p36, %p37
    %p40 = scmp.ne.s32.totalorder %s23, %s39
    %p41 = scmp.eq.s32.totalorder %s15, 0
    %p42 = por %p40, %p41
    %s44 = sadd.s32 %s43, 1
    %p47 = scmp.eq.s32.totalorder %s9, 1
    %p48 = scmp.ne.s32.totalorder %s43, %s45
    %p49 = scmp.eq.s32.totalorder %s9, 0
    %p50 = por %p48, %p49
    %p51 = scmp.ne.s32.totalorder %s43, %s45
    %p52 = scmp.eq.s32.totalorder %s14, 1
    %p53 = por %p51, %p52
    %p54 = scmp.ne.s32.totalorder %s45, %s46
    %p55 = scmp.eq.s32.totalorder %s14, 0
    %p56 = por %p54, %p55
    %p57 = scmp.ne.s32.totalorder %s45, %s46
    %p58 = scmp.eq.s32.totalorder %s15, 1
    %p59 = por %p57, %p58
    %p61 = scmp.ne.s32.totalorder %s46, %s60
    %p62 = scmp.eq.s32.totalorder %s15, 0
    %p63 = por %p61, %p62
    %s65 = sadd.s32 %s64, 1
    %p68 = scmp.eq.s32.totalorder %s9, 1
    %p69 = scmp.ne.s32.totalorder %s64, %s66
    %p70 = scmp.eq.s32.totalorder %s9, 0
    %p71 = por %p69, %p70
    %p72 = scmp.ne.s32.totalorder %s64, %s66
    %p73 = scmp.eq.s32.totalorder %s14, 1
    %p74 = por %p72, %p73
    %p75 = scmp.ne.s32.totalorder %s66, %s67
    %p76 = scmp.eq.s32.totalorder %s14, 0
    %p77 = por %p75, %p76
    %p78 = scmp.ne.s32.totalorder %s66, %s67
    %p79 = scmp.eq.s32.totalorder %s15, 1
    %p80 = por %p78, %p79
    %p82 = scmp.ne.s32.totalorder %s67, %s81
    %p83 = scmp.eq.s32.totalorder %s15, 0
    %p84 = por %p82, %p83
    %s85 = ssub.s32 %s9, %s16
    %p86 = scmp.eq.s32.totalorder %s85, 0
    %s88 = sadd.s32 %s87, 1
    %s89 = scalar_select %p86, %s87, %s88
    %p92 = pneg %p86
    %p93 = scmp.eq.s32.totalorder %s9, 1
    %p94 = por %p92, %p93
    %p95 = scmp.ne.s32.totalorder %s87, %s90
    %p96 = scmp.eq.s32.totalorder %s9, 0
    %p97 = por %p95, %p96
    %p98 = scmp.ne.s32.totalorder %s87, %s90
    %p99 = scmp.eq.s32.totalorder %s14, 1
    %p100 = por %p98, %p99
    %p101 = scmp.ne.s32.totalorder %s90, %s91
    %p102 = scmp.eq.s32.totalorder %s14, 0
    %p103 = por %p101, %p102
    %p104 = scmp.ne.s32.totalorder %s90, %s91
    %p105 = scmp.eq.s32.totalorder %s15, 1
    %p106 = por %p104, %p105
    %p108 = scmp.ne.s32.totalorder %s91, %s107
    %p109 = scmp.eq.s32.totalorder %s15, 0
    %p110 = por %p108, %p109
    %p111 = scmp.le.s32.totalorder 1, %s9
    %p112 = scmp.lt.s32.totalorder %s9, 3
    %p113 = pnand %p111, %p112
    %p114 = pneg %p113
    // Predicated region
    $region9: #{conv_model_forward.2} parent=5 // pred_check
      _
    $region10: #{conv_model_forward.2} parent=5 // pred_check_branch
      %116 = sbr.rel (%p113) target = $region12
    $region11: #{conv_model_forward.2} parent=5 // pred_region
      %s117 = ssub.s32 %s9, 1
      // Predicated region
      $region13: #{conv_model_forward.2} parent=11 // pred_check
        %p118 = pneg %p56
      $region14: #{conv_model_forward.2} parent=11 // pred_check_branch
        %120 = sbr.rel (%p118) target = $region16
      $region15: #{conv_model_forward.2} parent=11 // pred_region
        _
      $region16: #{conv_model_forward.2} parent=11 // pred_fallthru
        _
      // Predicated region
      $region17: #{conv_model_forward.2} parent=11 // pred_check
        %p121 = pneg %p77
      $region18: #{conv_model_forward.2} parent=11 // pred_check_branch
        %123 = sbr.rel (%p121) target = $region20
      $region19: #{conv_model_forward.2} parent=11 // pred_region
        _
      $region20: #{conv_model_forward.2} parent=11 // pred_fallthru
        _
    $region12: #{conv_model_forward.2} parent=5 // pred_fallthru
      _
    %p124 = scmp.lt.s32.totalorder %s9, 2
    // Predicated region
    $region21: #{conv_model_forward.2} parent=5 // pred_check
      %p125 = pneg %p124
    $region22: #{conv_model_forward.2} parent=5 // pred_check_branch
      %127 = sbr.rel (%p125) target = $region24
    $region23: #{conv_model_forward.2} parent=5 // pred_region
      // Predicated region
      $region25: #{conv_model_forward.2} parent=23 // pred_check
        %p128 = pneg %p29
      $region26: #{conv_model_forward.2} parent=23 // pred_check_branch
        %130 = sbr.rel (%p128) target = $region28
      $region27: #{conv_model_forward.2} parent=23 // pred_region
        %p131 = scmp.lt.s32.totalorder %s9, 1
        %s132 = scalar_select %p131, %s9, 1
        %s133 = smul.addr %s132, 32
        %s134 = smul.addr %s133, 8
        %s135 = scalar_lea.vmem %s0, %s134
      $region28: #{conv_model_forward.2} parent=23 // pred_fallthru
        _
    $region24: #{conv_model_forward.2} parent=5 // pred_fallthru
      _
    %p136 = scmp.le.s32.totalorder 1, %s9
    %p137 = scmp.lt.s32.totalorder %s9, 3
    %p138 = pnand %p136, %p137
    %p139 = pneg %p138
    // Predicated region
    $region29: #{conv_model_forward.2} parent=5 // pred_check
      _
    $region30: #{conv_model_forward.2} parent=5 // pred_check_branch
      %141 = sbr.rel (%p138) target = $region32
    $region31: #{conv_model_forward.2} parent=5 // pred_region
      %s142 = ssub.s32 %s9, 1
      %p143 = scmp.lt.s32.totalorder %s14, 1
      %s144 = scalar_select %p143, %s14, 1
      %s145 = smul.addr %s144, 32
      %s146 = smul.addr %s145, 8
      %s147 = scalar_lea.vmem %s0, %s146
      %p148 = pneg %p35
      %p149 = pneg %p32
      %p150 = pneg %p56
      %p151 = pneg %p53
      %p152 = pneg %p77
      %p153 = pneg %p74
      %p154 = pneg %p103
      %p155 = pneg %p100
      %p156 = scmp.lt.s32.totalorder %s14, 1
      %s157 = scalar_select %p156, %s14, 1
      %s158 = smul.addr %s157, 28
      %s159 = smul.addr %s158, 8
      %s160 = scalar_lea.vmem %s3, %s159
      %p161 = scmp.lt.s32.totalorder %s14, 1
      %s162 = scalar_select %p161, %s14, 1
      %s163 = smul.addr %s162, 32
      %s164 = smul.addr %s163, 8
      %s165 = scalar_lea.vmem %s0, %s164
      %p166 = scmp.lt.s32.totalorder %s14, 1
      %s167 = scalar_select %p166, %s14, 1
      %s168 = smul.addr %s167, 28
      %s169 = smul.addr %s168, 8
      %s170 = scalar_lea.vmem %s3, %s169
      %v171 = vld [vmem:[%s165] sm:$0xff]
      %v172 = vld [vmem:[%s165 + $0x8] sm:$0xff]
      %v173 = vld [vmem:[%s165 + $0x10] sm:$0xff]
      %v174 = vld [vmem:[%s165 + $0x18] sm:$0xff]
      %v175 = vld [vmem:[%s165 + $0x20] sm:$0xff]
      %v176 = vld [vmem:[%s165 + $0x28] sm:$0xff]
      %v177 = vld [vmem:[%s165 + $0x30] sm:$0xff]
      %v178 = vld [vmem:[%s165 + $0x38] sm:$0xff]
      %v179 = vld [vmem:[%s165 + $0x40] sm:$0xff]
      %v180 = vld [vmem:[%s165 + $0x48] sm:$0xff]
      %v181 = vld [vmem:[%s165 + $0x50] sm:$0xff]
      %v182 = vld [vmem:[%s165 + $0x58] sm:$0xff]
      %v183 = vld [vmem:[%s165 + $0x60] sm:$0xff]
      %v184 = vld [vmem:[%s165 + $0x68] sm:$0xff]
      %v185 = vld [vmem:[%s165 + $0x70] sm:$0xff]
      %v186 = vld [vmem:[%s165 + $0x78] sm:$0xff]
      %v187 = vld [vmem:[%s165 + $0x80] sm:$0xff]
      %v188 = vld [vmem:[%s165 + $0x88] sm:$0xff]
      %v189 = vld [vmem:[%s165 + $0x90] sm:$0xff]
      %v190 = vld [vmem:[%s165 + $0x98] sm:$0xff]
      %v191 = vld [vmem:[%s165 + $0xa0] sm:$0xff]
      %v192 = vld [vmem:[%s165 + $0xa8] sm:$0xff]
      %v193 = vld [vmem:[%s165 + $0xb0] sm:$0xff]
      %v194 = vld [vmem:[%s165 + $0xb8] sm:$0xff]
      %v195 = vld [vmem:[%s165 + $0xc0] sm:$0xff]
      %v196 = vld [vmem:[%s165 + $0xc8] sm:$0xff]
      %v197 = vld [vmem:[%s165 + $0xd0] sm:$0xff]
      %v198 = vld [vmem:[%s165 + $0xd8] sm:$0xff]
      %v199 = vld [vmem:[%s165 + $0xe0] sm:$0xff]
      %v200 = vld [vmem:[%s165 + $0xe8] sm:$0xff]
      %v201 = vld [vmem:[%s165 + $0xf0] sm:$0xff]
      %v202 = vld [vmem:[%s165 + $0xf8] sm:$0xff]
      %vm231 = vcmask 1046528
      %v232 = vrot.slane %v171, 1
      %v233 = vrot.slane %v172, 1
      %v234 = vsel %vm231, %v232, %v233
      %v235 = vrot.slane %v173, 1
      %v236 = vrot.slane %v174, 1
      %v237 = vsel %vm231, %v235, %v236
      %v238 = vrot.slane %v175, 1
      %v239 = vrot.slane %v176, 1
      %v240 = vsel %vm231, %v238, %v239
      %v241 = vrot.slane %v177, 1
      %v242 = vrot.slane %v178, 1
      %v243 = vsel %vm231, %v241, %v242
      %v244 = vrot.slane %v179, 1
      %v245 = vrot.slane %v180, 1
      %v246 = vsel %vm231, %v244, %v245
      %v247 = vrot.slane %v181, 1
      %v248 = vrot.slane %v182, 1
      %v249 = vsel %vm231, %v247, %v248
      %v250 = vrot.slane %v183, 1
      %v251 = vrot.slane %v184, 1
      %v252 = vsel %vm231, %v250, %v251
      %v253 = vrot.slane %v185, 1
      %v254 = vrot.slane %v186, 1
      %v255 = vsel %vm231, %v253, %v254
      %v256 = vrot.slane %v187, 1
      %v257 = vrot.slane %v188, 1
      %v258 = vsel %vm231, %v256, %v257
      %v259 = vrot.slane %v189, 1
      %v260 = vrot.slane %v190, 1
      %v261 = vsel %vm231, %v259, %v260
      %v262 = vrot.slane %v191, 1
      %v263 = vrot.slane %v192, 1
      %v264 = vsel %vm231, %v262, %v263
      %v265 = vrot.slane %v193, 1
      %v266 = vrot.slane %v194, 1
      %v267 = vsel %vm231, %v265, %v266
      %v268 = vrot.slane %v195, 1
      %v269 = vrot.slane %v196, 1
      %v270 = vsel %vm231, %v268, %v269
      %v271 = vrot.slane %v197, 1
      %v272 = vrot.slane %v198, 1
      %v273 = vsel %vm231, %v271, %v272
      %274 = vrot.lane.b32.xlu0 %v234, 4
      %v275 = vpop.permute.xlu0 %274
      %276 = vrot.lane.b32.xlu0 %v233, 4
      %v277 = vpop.permute.xlu0 %276
      %278 = vrot.lane.b32.xlu0 %v237, 4
      %v279 = vpop.permute.xlu0 %278
      %280 = vrot.lane.b32.xlu0 %v236, 4
      %v281 = vpop.permute.xlu0 %280
      %282 = vrot.lane.b32.xlu0 %v240, 4
      %v283 = vpop.permute.xlu0 %282
      %284 = vrot.lane.b32.xlu0 %v239, 4
      %v285 = vpop.permute.xlu0 %284
      %286 = vrot.lane.b32.xlu0 %v243, 4
      %v287 = vpop.permute.xlu0 %286
      %288 = vrot.lane.b32.xlu0 %v242, 4
      %v289 = vpop.permute.xlu0 %288
      %290 = vrot.lane.b32.xlu0 %v246, 4
      %v291 = vpop.permute.xlu0 %290
      %292 = vrot.lane.b32.xlu0 %v245, 4
      %v293 = vpop.permute.xlu0 %292
      %294 = vrot.lane.b32.xlu0 %v249, 4
      %v295 = vpop.permute.xlu0 %294
      %296 = vrot.lane.b32.xlu0 %v248, 4
      %v297 = vpop.permute.xlu0 %296
      %298 = vrot.lane.b32.xlu0 %v252, 4
      %v299 = vpop.permute.xlu0 %298
      %300 = vrot.lane.b32.xlu0 %v251, 4
      %v301 = vpop.permute.xlu0 %300
      %302 = vrot.lane.b32.xlu0 %v255, 4
      %v303 = vpop.permute.xlu0 %302
      %304 = vrot.lane.b32.xlu0 %v254, 4
      %v305 = vpop.permute.xlu0 %304
      %306 = vrot.lane.b32.xlu0 %v258, 4
      %v307 = vpop.permute.xlu0 %306
      %308 = vrot.lane.b32.xlu0 %v257, 4
      %v309 = vpop.permute.xlu0 %308
      %310 = vrot.lane.b32.xlu0 %v261, 4
      %v311 = vpop.permute.xlu0 %310
      %312 = vrot.lane.b32.xlu0 %v260, 4
      %v313 = vpop.permute.xlu0 %312
      %314 = vrot.lane.b32.xlu0 %v264, 4
      %v315 = vpop.permute.xlu0 %314
      %316 = vrot.lane.b32.xlu0 %v263, 4
      %v317 = vpop.permute.xlu0 %316
      %318 = vrot.lane.b32.xlu0 %v267, 4
      %v319 = vpop.permute.xlu0 %318
      %320 = vrot.lane.b32.xlu0 %v266, 4
      %v321 = vpop.permute.xlu0 %320
      %322 = vrot.lane.b32.xlu0 %v270, 4
      %v323 = vpop.permute.xlu0 %322
      %324 = vrot.lane.b32.xlu0 %v269, 4
      %v325 = vpop.permute.xlu0 %324
      %326 = vrot.lane.b32.xlu0 %v273, 4
      %v327 = vpop.permute.xlu0 %326
      %328 = vrot.lane.b32.xlu0 %v272, 4
      %v329 = vpop.permute.xlu0 %328
      %vm358 = vcmask 1045504
      %v359 = vrot.slane %v171, 2
      %v360 = vrot.slane %v172, 2
      %v361 = vsel %vm358, %v359, %v360
      %v362 = vrot.slane %v173, 2
      %v363 = vrot.slane %v174, 2
      %v364 = vsel %vm358, %v362, %v363
      %v365 = vrot.slane %v175, 2
      %v366 = vrot.slane %v176, 2
      %v367 = vsel %vm358, %v365, %v366
      %v368 = vrot.slane %v177, 2
      %v369 = vrot.slane %v178, 2
      %v370 = vsel %vm358, %v368, %v369
      %v371 = vrot.slane %v179, 2
      %v372 = vrot.slane %v180, 2
      %v373 = vsel %vm358, %v371, %v372
      %v374 = vrot.slane %v181, 2
      %v375 = vrot.slane %v182, 2
      %v376 = vsel %vm358, %v374, %v375
      %v377 = vrot.slane %v183, 2
      %v378 = vrot.slane %v184, 2
      %v379 = vsel %vm358, %v377, %v378
      %v380 = vrot.slane %v185, 2
      %v381 = vrot.slane %v186, 2
      %v382 = vsel %vm358, %v380, %v381
      %v383 = vrot.slane %v187, 2
      %v384 = vrot.slane %v188, 2
      %v385 = vsel %vm358, %v383, %v384
      %v386 = vrot.slane %v189, 2
      %v387 = vrot.slane %v190, 2
      %v388 = vsel %vm358, %v386, %v387
      %v389 = vrot.slane %v191, 2
      %v390 = vrot.slane %v192, 2
      %v391 = vsel %vm358, %v389, %v390
      %v392 = vrot.slane %v193, 2
      %v393 = vrot.slane %v194, 2
      %v394 = vsel %vm358, %v392, %v393
      %v395 = vrot.slane %v195, 2
      %v396 = vrot.slane %v196, 2
      %v397 = vsel %vm358, %v395, %v396
      %v398 = vrot.slane %v197, 2
      %v399 = vrot.slane %v198, 2
      %v400 = vsel %vm358, %v398, %v399
      %401 = vrot.lane.b32.xlu0 %v361, 8
      %v402 = vpop.permute.xlu0 %401
      %403 = vrot.lane.b32.xlu0 %v360, 8
      %v404 = vpop.permute.xlu0 %403
      %405 = vrot.lane.b32.xlu0 %v364, 8
      %v406 = vpop.permute.xlu0 %405
      %407 = vrot.lane.b32.xlu0 %v363, 8
      %v408 = vpop.permute.xlu0 %407
      %409 = vrot.lane.b32.xlu0 %v367, 8
      %v410 = vpop.permute.xlu0 %409
      %411 = vrot.lane.b32.xlu0 %v366, 8
      %v412 = vpop.permute.xlu0 %411
      %413 = vrot.lane.b32.xlu0 %v370, 8
      %v414 = vpop.permute.xlu0 %413
      %415 = vrot.lane.b32.xlu0 %v369, 8
      %v416 = vpop.permute.xlu0 %415
      %417 = vrot.lane.b32.xlu0 %v373, 8
      %v418 = vpop.permute.xlu0 %417
      %419 = vrot.lane.b32.xlu0 %v372, 8
      %v420 = vpop.permute.xlu0 %419
      %421 = vrot.lane.b32.xlu0 %v376, 8
      %v422 = vpop.permute.xlu0 %421
      %423 = vrot.lane.b32.xlu0 %v375, 8
      %v424 = vpop.permute.xlu0 %423
      %425 = vrot.lane.b32.xlu0 %v379, 8
      %v426 = vpop.permute.xlu0 %425
      %427 = vrot.lane.b32.xlu0 %v378, 8
      %v428 = vpop.permute.xlu0 %427
      %429 = vrot.lane.b32.xlu0 %v382, 8
      %v430 = vpop.permute.xlu0 %429
      %431 = vrot.lane.b32.xlu0 %v381, 8
      %v432 = vpop.permute.xlu0 %431
      %433 = vrot.lane.b32.xlu0 %v385, 8
      %v434 = vpop.permute.xlu0 %433
      %435 = vrot.lane.b32.xlu0 %v384, 8
      %v436 = vpop.permute.xlu0 %435
      %437 = vrot.lane.b32.xlu0 %v388, 8
      %v438 = vpop.permute.xlu0 %437
      %439 = vrot.lane.b32.xlu0 %v387, 8
      %v440 = vpop.permute.xlu0 %439
      %441 = vrot.lane.b32.xlu0 %v391, 8
      %v442 = vpop.permute.xlu0 %441
      %443 = vrot.lane.b32.xlu0 %v390, 8
      %v444 = vpop.permute.xlu0 %443
      %445 = vrot.lane.b32.xlu0 %v394, 8
      %v446 = vpop.permute.xlu0 %445
      %447 = vrot.lane.b32.xlu0 %v393, 8
      %v448 = vpop.permute.xlu0 %447
      %449 = vrot.lane.b32.xlu0 %v397, 8
      %v450 = vpop.permute.xlu0 %449
      %451 = vrot.lane.b32.xlu0 %v396, 8
      %v452 = vpop.permute.xlu0 %451
      %453 = vrot.lane.b32.xlu0 %v400, 8
      %v454 = vpop.permute.xlu0 %453
      %455 = vrot.lane.b32.xlu0 %v399, 8
      %v456 = vpop.permute.xlu0 %455
      %487 = vrot.lane.b32.xlu0 %v173, 12
      %v488 = vpop.permute.xlu0 %487
      %489 = vrot.lane.b32.xlu0 %v174, 12
      %v490 = vpop.permute.xlu0 %489
      %491 = vrot.lane.b32.xlu0 %v175, 12
      %v492 = vpop.permute.xlu0 %491
      %493 = vrot.lane.b32.xlu0 %v176, 12
      %v494 = vpop.permute.xlu0 %493
      %495 = vrot.lane.b32.xlu0 %v177, 12
      %v496 = vpop.permute.xlu0 %495
      %497 = vrot.lane.b32.xlu0 %v178, 12
      %v498 = vpop.permute.xlu0 %497
      %499 = vrot.lane.b32.xlu0 %v179, 12
      %v500 = vpop.permute.xlu0 %499
      %501 = vrot.lane.b32.xlu0 %v180, 12
      %v502 = vpop.permute.xlu0 %501
      %503 = vrot.lane.b32.xlu0 %v181, 12
      %v504 = vpop.permute.xlu0 %503
      %505 = vrot.lane.b32.xlu0 %v182, 12
      %v506 = vpop.permute.xlu0 %505
      %507 = vrot.lane.b32.xlu0 %v183, 12
      %v508 = vpop.permute.xlu0 %507
      %509 = vrot.lane.b32.xlu0 %v184, 12
      %v510 = vpop.permute.xlu0 %509
      %511 = vrot.lane.b32.xlu0 %v185, 12
      %v512 = vpop.permute.xlu0 %511
      %513 = vrot.lane.b32.xlu0 %v186, 12
      %v514 = vpop.permute.xlu0 %513
      %515 = vrot.lane.b32.xlu0 %v187, 12
      %v516 = vpop.permute.xlu0 %515
      %517 = vrot.lane.b32.xlu0 %v188, 12
      %v518 = vpop.permute.xlu0 %517
      %519 = vrot.lane.b32.xlu0 %v189, 12
      %v520 = vpop.permute.xlu0 %519
      %521 = vrot.lane.b32.xlu0 %v190, 12
      %v522 = vpop.permute.xlu0 %521
      %523 = vrot.lane.b32.xlu0 %v191, 12
      %v524 = vpop.permute.xlu0 %523
      %525 = vrot.lane.b32.xlu0 %v192, 12
      %v526 = vpop.permute.xlu0 %525
      %527 = vrot.lane.b32.xlu0 %v193, 12
      %v528 = vpop.permute.xlu0 %527
      %529 = vrot.lane.b32.xlu0 %v194, 12
      %v530 = vpop.permute.xlu0 %529
      %531 = vrot.lane.b32.xlu0 %v195, 12
      %v532 = vpop.permute.xlu0 %531
      %533 = vrot.lane.b32.xlu0 %v196, 12
      %v534 = vpop.permute.xlu0 %533
      %535 = vrot.lane.b32.xlu0 %v197, 12
      %v536 = vpop.permute.xlu0 %535
      %537 = vrot.lane.b32.xlu0 %v198, 12
      %v538 = vpop.permute.xlu0 %537
      %539 = vrot.lane.b32.xlu0 %v199, 12
      %v540 = vpop.permute.xlu0 %539
      %541 = vrot.lane.b32.xlu0 %v200, 12
      %v542 = vpop.permute.xlu0 %541
      %v571 = vrot.slane %v199, 1
      %v572 = vrot.slane %v200, 1
      %v573 = vsel %vm231, %v571, %v572
      %574 = vrot.lane.b32.xlu0 %v237, 16
      %v575 = vpop.permute.xlu0 %574
      %576 = vrot.lane.b32.xlu0 %v236, 16
      %v577 = vpop.permute.xlu0 %576
      %578 = vrot.lane.b32.xlu0 %v240, 16
      %v579 = vpop.permute.xlu0 %578
      %580 = vrot.lane.b32.xlu0 %v239, 16
      %v581 = vpop.permute.xlu0 %580
      %582 = vrot.lane.b32.xlu0 %v243, 16
      %v583 = vpop.permute.xlu0 %582
      %584 = vrot.lane.b32.xlu0 %v242, 16
      %v585 = vpop.permute.xlu0 %584
      %586 = vrot.lane.b32.xlu0 %v246, 16
      %v587 = vpop.permute.xlu0 %586
      %588 = vrot.lane.b32.xlu0 %v245, 16
      %v589 = vpop.permute.xlu0 %588
      %590 = vrot.lane.b32.xlu0 %v249, 16
      %v591 = vpop.permute.xlu0 %590
      %592 = vrot.lane.b32.xlu0 %v248, 16
      %v593 = vpop.permute.xlu0 %592
      %594 = vrot.lane.b32.xlu0 %v252, 16
      %v595 = vpop.permute.xlu0 %594
      %596 = vrot.lane.b32.xlu0 %v251, 16
      %v597 = vpop.permute.xlu0 %596
      %598 = vrot.lane.b32.xlu0 %v255, 16
      %v599 = vpop.permute.xlu0 %598
      %600 = vrot.lane.b32.xlu0 %v254, 16
      %v601 = vpop.permute.xlu0 %600
      %602 = vrot.lane.b32.xlu0 %v258, 16
      %v603 = vpop.permute.xlu0 %602
      %604 = vrot.lane.b32.xlu0 %v257, 16
      %v605 = vpop.permute.xlu0 %604
      %606 = vrot.lane.b32.xlu0 %v261, 16
      %v607 = vpop.permute.xlu0 %606
      %608 = vrot.lane.b32.xlu0 %v260, 16
      %v609 = vpop.permute.xlu0 %608
      %610 = vrot.lane.b32.xlu0 %v264, 16
      %v611 = vpop.permute.xlu0 %610
      %612 = vrot.lane.b32.xlu0 %v263, 16
      %v613 = vpop.permute.xlu0 %612
      %614 = vrot.lane.b32.xlu0 %v267, 16
      %v615 = vpop.permute.xlu0 %614
      %616 = vrot.lane.b32.xlu0 %v266, 16
      %v617 = vpop.permute.xlu0 %616
      %618 = vrot.lane.b32.xlu0 %v270, 16
      %v619 = vpop.permute.xlu0 %618
      %620 = vrot.lane.b32.xlu0 %v269, 16
      %v621 = vpop.permute.xlu0 %620
      %622 = vrot.lane.b32.xlu0 %v273, 16
      %v623 = vpop.permute.xlu0 %622
      %624 = vrot.lane.b32.xlu0 %v272, 16
      %v625 = vpop.permute.xlu0 %624
      %626 = vrot.lane.b32.xlu0 %v573, 16
      %v627 = vpop.permute.xlu0 %626
      %628 = vrot.lane.b32.xlu0 %v572, 16
      %v629 = vpop.permute.xlu0 %628
      %v658 = vrot.slane %v199, 2
      %v659 = vrot.slane %v200, 2
      %v660 = vsel %vm358, %v658, %v659
      %661 = vrot.lane.b32.xlu0 %v364, 20
      %v662 = vpop.permute.xlu0 %661
      %663 = vrot.lane.b32.xlu0 %v363, 20
      %v664 = vpop.permute.xlu0 %663
      %665 = vrot.lane.b32.xlu0 %v367, 20
      %v666 = vpop.permute.xlu0 %665
      %667 = vrot.lane.b32.xlu0 %v366, 20
      %v668 = vpop.permute.xlu0 %667
      %669 = vrot.lane.b32.xlu0 %v370, 20
      %v670 = vpop.permute.xlu0 %669
      %671 = vrot.lane.b32.xlu0 %v369, 20
      %v672 = vpop.permute.xlu0 %671
      %673 = vrot.lane.b32.xlu0 %v373, 20
      %v674 = vpop.permute.xlu0 %673
      %675 = vrot.lane.b32.xlu0 %v372, 20
      %v676 = vpop.permute.xlu0 %675
      %677 = vrot.lane.b32.xlu0 %v376, 20
      %v678 = vpop.permute.xlu0 %677
      %679 = vrot.lane.b32.xlu0 %v375, 20
      %v680 = vpop.permute.xlu0 %679
      %681 = vrot.lane.b32.xlu0 %v379, 20
      %v682 = vpop.permute.xlu0 %681
      %683 = vrot.lane.b32.xlu0 %v378, 20
      %v684 = vpop.permute.xlu0 %683
      %685 = vrot.lane.b32.xlu0 %v382, 20
      %v686 = vpop.permute.xlu0 %685
      %687 = vrot.lane.b32.xlu0 %v381, 20
      %v688 = vpop.permute.xlu0 %687
      %689 = vrot.lane.b32.xlu0 %v385, 20
      %v690 = vpop.permute.xlu0 %689
      %691 = vrot.lane.b32.xlu0 %v384, 20
      %v692 = vpop.permute.xlu0 %691
      %693 = vrot.lane.b32.xlu0 %v388, 20
      %v694 = vpop.permute.xlu0 %693
      %695 = vrot.lane.b32.xlu0 %v387, 20
      %v696 = vpop.permute.xlu0 %695
      %697 = vrot.lane.b32.xlu0 %v391, 20
      %v698 = vpop.permute.xlu0 %697
      %699 = vrot.lane.b32.xlu0 %v390, 20
      %v700 = vpop.permute.xlu0 %699
      %701 = vrot.lane.b32.xlu0 %v394, 20
      %v702 = vpop.permute.xlu0 %701
      %703 = vrot.lane.b32.xlu0 %v393, 20
      %v704 = vpop.permute.xlu0 %703
      %705 = vrot.lane.b32.xlu0 %v397, 20
      %v706 = vpop.permute.xlu0 %705
      %707 = vrot.lane.b32.xlu0 %v396, 20
      %v708 = vpop.permute.xlu0 %707
      %709 = vrot.lane.b32.xlu0 %v400, 20
      %v710 = vpop.permute.xlu0 %709
      %711 = vrot.lane.b32.xlu0 %v399, 20
      %v712 = vpop.permute.xlu0 %711
      %713 = vrot.lane.b32.xlu0 %v660, 20
      %v714 = vpop.permute.xlu0 %713
      %715 = vrot.lane.b32.xlu0 %v659, 20
      %v716 = vpop.permute.xlu0 %715
      %747 = vrot.lane.b32.xlu0 %v175, 24
      %v748 = vpop.permute.xlu0 %747
      %749 = vrot.lane.b32.xlu0 %v176, 24
      %v750 = vpop.permute.xlu0 %749
      %751 = vrot.lane.b32.xlu0 %v177, 24
      %v752 = vpop.permute.xlu0 %751
      %753 = vrot.lane.b32.xlu0 %v178, 24
      %v754 = vpop.permute.xlu0 %753
      %755 = vrot.lane.b32.xlu0 %v179, 24
      %v756 = vpop.permute.xlu0 %755
      %757 = vrot.lane.b32.xlu0 %v180, 24
      %v758 = vpop.permute.xlu0 %757
      %759 = vrot.lane.b32.xlu0 %v181, 24
      %v760 = vpop.permute.xlu0 %759
      %761 = vrot.lane.b32.xlu0 %v182, 24
      %v762 = vpop.permute.xlu0 %761
      %763 = vrot.lane.b32.xlu0 %v183, 24
      %v764 = vpop.permute.xlu0 %763
      %765 = vrot.lane.b32.xlu0 %v184, 24
      %v766 = vpop.permute.xlu0 %765
      %767 = vrot.lane.b32.xlu0 %v185, 24
      %v768 = vpop.permute.xlu0 %767
      %769 = vrot.lane.b32.xlu0 %v186, 24
      %v770 = vpop.permute.xlu0 %769
      %771 = vrot.lane.b32.xlu0 %v187, 24
      %v772 = vpop.permute.xlu0 %771
      %773 = vrot.lane.b32.xlu0 %v188, 24
      %v774 = vpop.permute.xlu0 %773
      %775 = vrot.lane.b32.xlu0 %v189, 24
      %v776 = vpop.permute.xlu0 %775
      %777 = vrot.lane.b32.xlu0 %v190, 24
      %v778 = vpop.permute.xlu0 %777
      %779 = vrot.lane.b32.xlu0 %v191, 24
      %v780 = vpop.permute.xlu0 %779
      %781 = vrot.lane.b32.xlu0 %v192, 24
      %v782 = vpop.permute.xlu0 %781
      %783 = vrot.lane.b32.xlu0 %v193, 24
      %v784 = vpop.permute.xlu0 %783
      %785 = vrot.lane.b32.xlu0 %v194, 24
      %v786 = vpop.permute.xlu0 %785
      %787 = vrot.lane.b32.xlu0 %v195, 24
      %v788 = vpop.permute.xlu0 %787
      %789 = vrot.lane.b32.xlu0 %v196, 24
      %v790 = vpop.permute.xlu0 %789
      %791 = vrot.lane.b32.xlu0 %v197, 24
      %v792 = vpop.permute.xlu0 %791
      %793 = vrot.lane.b32.xlu0 %v198, 24
      %v794 = vpop.permute.xlu0 %793
      %795 = vrot.lane.b32.xlu0 %v199, 24
      %v796 = vpop.permute.xlu0 %795
      %797 = vrot.lane.b32.xlu0 %v200, 24
      %v798 = vpop.permute.xlu0 %797
      %799 = vrot.lane.b32.xlu0 %v201, 24
      %v800 = vpop.permute.xlu0 %799
      %801 = vrot.lane.b32.xlu0 %v202, 24
      %v802 = vpop.permute.xlu0 %801
      %v831 = vrot.slane %v201, 1
      %v832 = vrot.slane %v202, 1
      %v833 = vsel %vm231, %v831, %v832
      %834 = vrot.lane.b32.xlu0 %v240, 28
      %v835 = vpop.permute.xlu0 %834
      %836 = vrot.lane.b32.xlu0 %v239, 28
      %v837 = vpop.permute.xlu0 %836
      %838 = vrot.lane.b32.xlu0 %v243, 28
      %v839 = vpop.permute.xlu0 %838
      %840 = vrot.lane.b32.xlu0 %v242, 28
      %v841 = vpop.permute.xlu0 %840
      %842 = vrot.lane.b32.xlu0 %v246, 28
      %v843 = vpop.permute.xlu0 %842
      %844 = vrot.lane.b32.xlu0 %v245, 28
      %v845 = vpop.permute.xlu0 %844
      %846 = vrot.lane.b32.xlu0 %v249, 28
      %v847 = vpop.permute.xlu0 %846
      %848 = vrot.lane.b32.xlu0 %v248, 28
      %v849 = vpop.permute.xlu0 %848
      %850 = vrot.lane.b32.xlu0 %v252, 28
      %v851 = vpop.permute.xlu0 %850
      %852 = vrot.lane.b32.xlu0 %v251, 28
      %v853 = vpop.permute.xlu0 %852
      %854 = vrot.lane.b32.xlu0 %v255, 28
      %v855 = vpop.permute.xlu0 %854
      %856 = vrot.lane.b32.xlu0 %v254, 28
      %v857 = vpop.permute.xlu0 %856
      %858 = vrot.lane.b32.xlu0 %v258, 28
      %v859 = vpop.permute.xlu0 %858
      %860 = vrot.lane.b32.xlu0 %v257, 28
      %v861 = vpop.permute.xlu0 %860
      %862 = vrot.lane.b32.xlu0 %v261, 28
      %v863 = vpop.permute.xlu0 %862
      %864 = vrot.lane.b32.xlu0 %v260, 28
      %v865 = vpop.permute.xlu0 %864
      %866 = vrot.lane.b32.xlu0 %v264, 28
      %v867 = vpop.permute.xlu0 %866
      %868 = vrot.lane.b32.xlu0 %v263, 28
      %v869 = vpop.permute.xlu0 %868
      %870 = vrot.lane.b32.xlu0 %v267, 28
      %v871 = vpop.permute.xlu0 %870
      %872 = vrot.lane.b32.xlu0 %v266, 28
      %v873 = vpop.permute.xlu0 %872
      %874 = vrot.lane.b32.xlu0 %v270, 28
      %v875 = vpop.permute.xlu0 %874
      %876 = vrot.lane.b32.xlu0 %v269, 28
      %v877 = vpop.permute.xlu0 %876
      %878 = vrot.lane.b32.xlu0 %v273, 28
      %v879 = vpop.permute.xlu0 %878
      %880 = vrot.lane.b32.xlu0 %v272, 28
      %v881 = vpop.permute.xlu0 %880
      %882 = vrot.lane.b32.xlu0 %v573, 28
      %v883 = vpop.permute.xlu0 %882
      %884 = vrot.lane.b32.xlu0 %v572, 28
      %v885 = vpop.permute.xlu0 %884
      %886 = vrot.lane.b32.xlu0 %v833, 28
      %v887 = vpop.permute.xlu0 %886
      %888 = vrot.lane.b32.xlu0 %v832, 28
      %v889 = vpop.permute.xlu0 %888
      %v918 = vrot.slane %v201, 2
      %v919 = vrot.slane %v202, 2
      %v920 = vsel %vm358, %v918, %v919
      %921 = vrot.lane.b32.xlu0 %v367, 32
      %v922 = vpop.permute.xlu0 %921
      %923 = vrot.lane.b32.xlu0 %v366, 32
      %v924 = vpop.permute.xlu0 %923
      %925 = vrot.lane.b32.xlu0 %v370, 32
      %v926 = vpop.permute.xlu0 %925
      %927 = vrot.lane.b32.xlu0 %v369, 32
      %v928 = vpop.permute.xlu0 %927
      %929 = vrot.lane.b32.xlu0 %v373, 32
      %v930 = vpop.permute.xlu0 %929
      %931 = vrot.lane.b32.xlu0 %v372, 32
      %v932 = vpop.permute.xlu0 %931
      %933 = vrot.lane.b32.xlu0 %v376, 32
      %v934 = vpop.permute.xlu0 %933
      %935 = vrot.lane.b32.xlu0 %v375, 32
      %v936 = vpop.permute.xlu0 %935
      %937 = vrot.lane.b32.xlu0 %v379, 32
      %v938 = vpop.permute.xlu0 %937
      %939 = vrot.lane.b32.xlu0 %v378, 32
      %v940 = vpop.permute.xlu0 %939
      %941 = vrot.lane.b32.xlu0 %v382, 32
      %v942 = vpop.permute.xlu0 %941
      %943 = vrot.lane.b32.xlu0 %v381, 32
      %v944 = vpop.permute.xlu0 %943
      %945 = vrot.lane.b32.xlu0 %v385, 32
      %v946 = vpop.permute.xlu0 %945
      %947 = vrot.lane.b32.xlu0 %v384, 32
      %v948 = vpop.permute.xlu0 %947
      %949 = vrot.lane.b32.xlu0 %v388, 32
      %v950 = vpop.permute.xlu0 %949
      %951 = vrot.lane.b32.xlu0 %v387, 32
      %v952 = vpop.permute.xlu0 %951
      %953 = vrot.lane.b32.xlu0 %v391, 32
      %v954 = vpop.permute.xlu0 %953
      %955 = vrot.lane.b32.xlu0 %v390, 32
      %v956 = vpop.permute.xlu0 %955
      %957 = vrot.lane.b32.xlu0 %v394, 32
      %v958 = vpop.permute.xlu0 %957
      %959 = vrot.lane.b32.xlu0 %v393, 32
      %v960 = vpop.permute.xlu0 %959
      %961 = vrot.lane.b32.xlu0 %v397, 32
      %v962 = vpop.permute.xlu0 %961
      %963 = vrot.lane.b32.xlu0 %v396, 32
      %v964 = vpop.permute.xlu0 %963
      %965 = vrot.lane.b32.xlu0 %v400, 32
      %v966 = vpop.permute.xlu0 %965
      %967 = vrot.lane.b32.xlu0 %v399, 32
      %v968 = vpop.permute.xlu0 %967
      %969 = vrot.lane.b32.xlu0 %v660, 32
      %v970 = vpop.permute.xlu0 %969
      %971 = vrot.lane.b32.xlu0 %v659, 32
      %v972 = vpop.permute.xlu0 %971
      %973 = vrot.lane.b32.xlu0 %v920, 32
      %v974 = vpop.permute.xlu0 %973
      %975 = vrot.lane.b32.xlu0 %v919, 32
      %v976 = vpop.permute.xlu0 %975
      %vm1005 = vcmask 31744
      %v1006 = vsel %vm1005, %v171, %v275
      %v1007 = vsel %vm1005, %v172, %v277
      %v1008 = vsel %vm1005, %v173, %v279
      %v1009 = vsel %vm1005, %v174, %v281
      %v1010 = vsel %vm1005, %v175, %v283
      %v1011 = vsel %vm1005, %v176, %v285
      %v1012 = vsel %vm1005, %v177, %v287
      %v1013 = vsel %vm1005, %v178, %v289
      %v1014 = vsel %vm1005, %v179, %v291
      %v1015 = vsel %vm1005, %v180, %v293
      %v1016 = vsel %vm1005, %v181, %v295
      %v1017 = vsel %vm1005, %v182, %v297
      %v1018 = vsel %vm1005, %v183, %v299
      %v1019 = vsel %vm1005, %v184, %v301
      %v1020 = vsel %vm1005, %v185, %v303
      %v1021 = vsel %vm1005, %v186, %v305
      %v1022 = vsel %vm1005, %v187, %v307
      %v1023 = vsel %vm1005, %v188, %v309
      %v1024 = vsel %vm1005, %v189, %v311
      %v1025 = vsel %vm1005, %v190, %v313
      %v1026 = vsel %vm1005, %v191, %v315
      %v1027 = vsel %vm1005, %v192, %v317
      %v1028 = vsel %vm1005, %v193, %v319
      %v1029 = vsel %vm1005, %v194, %v321
      %v1030 = vsel %vm1005, %v195, %v323
      %v1031 = vsel %vm1005, %v196, %v325
      %v1032 = vsel %vm1005, %v197, %v327
      %v1033 = vsel %vm1005, %v198, %v329
      %vm1034 = vcmask 64512
      %v1035 = vsel %vm1034, %v1006, %v402
      %v1036 = vsel %vm1034, %v1007, %v404
      %v1037 = vsel %vm1034, %v1008, %v406
      %v1038 = vsel %vm1034, %v1009, %v408
      %v1039 = vsel %vm1034, %v1010, %v410
      %v1040 = vsel %vm1034, %v1011, %v412
      %v1041 = vsel %vm1034, %v1012, %v414
      %v1042 = vsel %vm1034, %v1013, %v416
      %v1043 = vsel %vm1034, %v1014, %v418
      %v1044 = vsel %vm1034, %v1015, %v420
      %v1045 = vsel %vm1034, %v1016, %v422
      %v1046 = vsel %vm1034, %v1017, %v424
      %v1047 = vsel %vm1034, %v1018, %v426
      %v1048 = vsel %vm1034, %v1019, %v428
      %v1049 = vsel %vm1034, %v1020, %v430
      %v1050 = vsel %vm1034, %v1021, %v432
      %v1051 = vsel %vm1034, %v1022, %v434
      %v1052 = vsel %vm1034, %v1023, %v436
      %v1053 = vsel %vm1034, %v1024, %v438
      %v1054 = vsel %vm1034, %v1025, %v440
      %v1055 = vsel %vm1034, %v1026, %v442
      %v1056 = vsel %vm1034, %v1027, %v444
      %v1057 = vsel %vm1034, %v1028, %v446
      %v1058 = vsel %vm1034, %v1029, %v448
      %v1059 = vsel %vm1034, %v1030, %v450
      %v1060 = vsel %vm1034, %v1031, %v452
      %v1061 = vsel %vm1034, %v1032, %v454
      %v1062 = vsel %vm1034, %v1033, %v456
      %vm1063 = vcmask 97280
      %v1064 = vsel %vm1063, %v1035, %v488
      %v1065 = vsel %vm1063, %v1036, %v490
      %v1066 = vsel %vm1063, %v1037, %v492
      %v1067 = vsel %vm1063, %v1038, %v494
      %v1068 = vsel %vm1063, %v1039, %v496
      %v1069 = vsel %vm1063, %v1040, %v498
      %v1070 = vsel %vm1063, %v1041, %v500
      %v1071 = vsel %vm1063, %v1042, %v502
      %v1072 = vsel %vm1063, %v1043, %v504
      %v1073 = vsel %vm1063, %v1044, %v506
      %v1074 = vsel %vm1063, %v1045, %v508
      %v1075 = vsel %vm1063, %v1046, %v510
      %v1076 = vsel %vm1063, %v1047, %v512
      %v1077 = vsel %vm1063, %v1048, %v514
      %v1078 = vsel %vm1063, %v1049, %v516
      %v1079 = vsel %vm1063, %v1050, %v518
      %v1080 = vsel %vm1063, %v1051, %v520
      %v1081 = vsel %vm1063, %v1052, %v522
      %v1082 = vsel %vm1063, %v1053, %v524
      %v1083 = vsel %vm1063, %v1054, %v526
      %v1084 = vsel %vm1063, %v1055, %v528
      %v1085 = vsel %vm1063, %v1056, %v530
      %v1086 = vsel %vm1063, %v1057, %v532
      %v1087 = vsel %vm1063, %v1058, %v534
      %v1088 = vsel %vm1063, %v1059, %v536
      %v1089 = vsel %vm1063, %v1060, %v538
      %v1090 = vsel %vm1063, %v1061, %v540
      %v1091 = vsel %vm1063, %v1062, %v542
      %vm1092 = vcmask 130048
      %v1093 = vsel %vm1092, %v1064, %v575
      %v1094 = vsel %vm1092, %v1065, %v577
      %v1095 = vsel %vm1092, %v1066, %v579
      %v1096 = vsel %vm1092, %v1067, %v581
      %v1097 = vsel %vm1092, %v1068, %v583
      %v1098 = vsel %vm1092, %v1069, %v585
      %v1099 = vsel %vm1092, %v1070, %v587
      %v1100 = vsel %vm1092, %v1071, %v589
      %v1101 = vsel %vm1092, %v1072, %v591
      %v1102 = vsel %vm1092, %v1073, %v593
      %v1103 = vsel %vm1092, %v1074, %v595
      %v1104 = vsel %vm1092, %v1075, %v597
      %v1105 = vsel %vm1092, %v1076, %v599
      %v1106 = vsel %vm1092, %v1077, %v601
      %v1107 = vsel %vm1092, %v1078, %v603
      %v1108 = vsel %vm1092, %v1079, %v605
      %v1109 = vsel %vm1092, %v1080, %v607
      %v1110 = vsel %vm1092, %v1081, %v609
      %v1111 = vsel %vm1092, %v1082, %v611
      %v1112 = vsel %vm1092, %v1083, %v613
      %v1113 = vsel %vm1092, %v1084, %v615
      %v1114 = vsel %vm1092, %v1085, %v617
      %v1115 = vsel %vm1092, %v1086, %v619
      %v1116 = vsel %vm1092, %v1087, %v621
      %v1117 = vsel %vm1092, %v1088, %v623
      %v1118 = vsel %vm1092, %v1089, %v625
      %v1119 = vsel %vm1092, %v1090, %v627
      %v1120 = vsel %vm1092, %v1091, %v629
      %vm1121 = vcmask 162816
      %v1122 = vsel %vm1121, %v1093, %v662
      %v1123 = vsel %vm1121, %v1094, %v664
      %v1124 = vsel %vm1121, %v1095, %v666
      %v1125 = vsel %vm1121, %v1096, %v668
      %v1126 = vsel %vm1121, %v1097, %v670
      %v1127 = vsel %vm1121, %v1098, %v672
      %v1128 = vsel %vm1121, %v1099, %v674
      %v1129 = vsel %vm1121, %v1100, %v676
      %v1130 = vsel %vm1121, %v1101, %v678
      %v1131 = vsel %vm1121, %v1102, %v680
      %v1132 = vsel %vm1121, %v1103, %v682
      %v1133 = vsel %vm1121, %v1104, %v684
      %v1134 = vsel %vm1121, %v1105, %v686
      %v1135 = vsel %vm1121, %v1106, %v688
      %v1136 = vsel %vm1121, %v1107, %v690
      %v1137 = vsel %vm1121, %v1108, %v692
      %v1138 = vsel %vm1121, %v1109, %v694
      %v1139 = vsel %vm1121, %v1110, %v696
      %v1140 = vsel %vm1121, %v1111, %v698
      %v1141 = vsel %vm1121, %v1112, %v700
      %v1142 = vsel %vm1121, %v1113, %v702
      %v1143 = vsel %vm1121, %v1114, %v704
      %v1144 = vsel %vm1121, %v1115, %v706
      %v1145 = vsel %vm1121, %v1116, %v708
      %v1146 = vsel %vm1121, %v1117, %v710
      %v1147 = vsel %vm1121, %v1118, %v712
      %v1148 = vsel %vm1121, %v1119, %v714
      %v1149 = vsel %vm1121, %v1120, %v716
      %vm1150 = vcmask 195584
      %v1151 = vsel %vm1150, %v1122, %v748
      %v1152 = vsel %vm1150, %v1123, %v750
      %v1153 = vsel %vm1150, %v1124, %v752
      %v1154 = vsel %vm1150, %v1125, %v754
      %v1155 = vsel %vm1150, %v1126, %v756
      %v1156 = vsel %vm1150, %v1127, %v758
      %v1157 = vsel %vm1150, %v1128, %v760
      %v1158 = vsel %vm1150, %v1129, %v762
      %v1159 = vsel %vm1150, %v1130, %v764
      %v1160 = vsel %vm1150, %v1131, %v766
      %v1161 = vsel %vm1150, %v1132, %v768
      %v1162 = vsel %vm1150, %v1133, %v770
      %v1163 = vsel %vm1150, %v1134, %v772
      %v1164 = vsel %vm1150, %v1135, %v774
      %v1165 = vsel %vm1150, %v1136, %v776
      %v1166 = vsel %vm1150, %v1137, %v778
      %v1167 = vsel %vm1150, %v1138, %v780
      %v1168 = vsel %vm1150, %v1139, %v782
      %v1169 = vsel %vm1150, %v1140, %v784
      %v1170 = vsel %vm1150, %v1141, %v786
      %v1171 = vsel %vm1150, %v1142, %v788
      %v1172 = vsel %vm1150, %v1143, %v790
      %v1173 = vsel %vm1150, %v1144, %v792
      %v1174 = vsel %vm1150, %v1145, %v794
      %v1175 = vsel %vm1150, %v1146, %v796
      %v1176 = vsel %vm1150, %v1147, %v798
      %v1177 = vsel %vm1150, %v1148, %v800
      %v1178 = vsel %vm1150, %v1149, %v802
      %vm1179 = vcmask 228352
      %v1180 = vsel %vm1179, %v1151, %v835
      %v1181 = vsel %vm1179, %v1152, %v837
      %v1182 = vsel %vm1179, %v1153, %v839
      %v1183 = vsel %vm1179, %v1154, %v841
      %v1184 = vsel %vm1179, %v1155, %v843
      %v1185 = vsel %vm1179, %v1156, %v845
      %v1186 = vsel %vm1179, %v1157, %v847
      %v1187 = vsel %vm1179, %v1158, %v849
      %v1188 = vsel %vm1179, %v1159, %v851
      %v1189 = vsel %vm1179, %v1160, %v853
      %v1190 = vsel %vm1179, %v1161, %v855
      %v1191 = vsel %vm1179, %v1162, %v857
      %v1192 = vsel %vm1179, %v1163, %v859
      %v1193 = vsel %vm1179, %v1164, %v861
      %v1194 = vsel %vm1179, %v1165, %v863
      %v1195 = vsel %vm1179, %v1166, %v865
      %v1196 = vsel %vm1179, %v1167, %v867
      %v1197 = vsel %vm1179, %v1168, %v869
      %v1198 = vsel %vm1179, %v1169, %v871
      %v1199 = vsel %vm1179, %v1170, %v873
      %v1200 = vsel %vm1179, %v1171, %v875
      %v1201 = vsel %vm1179, %v1172, %v877
      %v1202 = vsel %vm1179, %v1173, %v879
      %v1203 = vsel %vm1179, %v1174, %v881
      %v1204 = vsel %vm1179, %v1175, %v883
      %v1205 = vsel %vm1179, %v1176, %v885
      %v1206 = vsel %vm1179, %v1177, %v887
      %v1207 = vsel %vm1179, %v1178, %v889
      %vm1208 = vcmask 261120
      %v1209 = vsel %vm1208, %v1180, %v922
      %v1210 = vsel %vm1208, %v1181, %v924
      %v1211 = vsel %vm1208, %v1182, %v926
      %v1212 = vsel %vm1208, %v1183, %v928
      %v1213 = vsel %vm1208, %v1184, %v930
      %v1214 = vsel %vm1208, %v1185, %v932
      %v1215 = vsel %vm1208, %v1186, %v934
      %v1216 = vsel %vm1208, %v1187, %v936
      %v1217 = vsel %vm1208, %v1188, %v938
      %v1218 = vsel %vm1208, %v1189, %v940
      %v1219 = vsel %vm1208, %v1190, %v942
      %v1220 = vsel %vm1208, %v1191, %v944
      %v1221 = vsel %vm1208, %v1192, %v946
      %v1222 = vsel %vm1208, %v1193, %v948
      %v1223 = vsel %vm1208, %v1194, %v950
      %v1224 = vsel %vm1208, %v1195, %v952
      %v1225 = vsel %vm1208, %v1196, %v954
      %v1226 = vsel %vm1208, %v1197, %v956
      %v1227 = vsel %vm1208, %v1198, %v958
      %v1228 = vsel %vm1208, %v1199, %v960
      %v1229 = vsel %vm1208, %v1200, %v962
      %v1230 = vsel %vm1208, %v1201, %v964
      %v1231 = vsel %vm1208, %v1202, %v966
      %v1232 = vsel %vm1208, %v1203, %v968
      %v1233 = vsel %vm1208, %v1204, %v970
      %v1234 = vsel %vm1208, %v1205, %v972
      %v1235 = vsel %vm1208, %v1206, %v974
      %v1236 = vsel %vm1208, %v1207, %v976
      %v1265 = vrot.slane %v1209, 2
      %v1266 = vrot.slane %v1209, 4
      %v1267 = vrot.slane %v1209, 6
      %v1268 = vrot.slane %v1210, 2
      %v1269 = vrot.slane %v1210, 4
      %v1270 = vrot.slane %v1211, 2
      %v1271 = vrot.slane %v1211, 4
      %v1272 = vrot.slane %v1211, 6
      %v1273 = vrot.slane %v1212, 2
      %v1274 = vrot.slane %v1212, 4
      %v1275 = vrot.slane %v1213, 2
      %v1276 = vrot.slane %v1213, 4
      %v1277 = vrot.slane %v1213, 6
      %v1278 = vrot.slane %v1214, 2
      %v1279 = vrot.slane %v1214, 4
      %v1280 = vrot.slane %v1215, 2
      %v1281 = vrot.slane %v1215, 4
      %v1282 = vrot.slane %v1215, 6
      %v1283 = vrot.slane %v1216, 2
      %v1284 = vrot.slane %v1216, 4
      %v1285 = vrot.slane %v1217, 2
      %v1286 = vrot.slane %v1217, 4
      %v1287 = vrot.slane %v1217, 6
      %v1288 = vrot.slane %v1218, 2
      %v1289 = vrot.slane %v1218, 4
      %v1290 = vrot.slane %v1219, 2
      %v1291 = vrot.slane %v1219, 4
      %v1292 = vrot.slane %v1219, 6
      %v1293 = vrot.slane %v1220, 2
      %v1294 = vrot.slane %v1220, 4
      %v1295 = vrot.slane %v1221, 2
      %v1296 = vrot.slane %v1221, 4
      %v1297 = vrot.slane %v1221, 6
      %v1298 = vrot.slane %v1222, 2
      %v1299 = vrot.slane %v1222, 4
      %v1300 = vrot.slane %v1223, 2
      %v1301 = vrot.slane %v1223, 4
      %v1302 = vrot.slane %v1223, 6
      %v1303 = vrot.slane %v1224, 2
      %v1304 = vrot.slane %v1224, 4
      %v1305 = vrot.slane %v1225, 2
      %v1306 = vrot.slane %v1225, 4
      %v1307 = vrot.slane %v1225, 6
      %v1308 = vrot.slane %v1226, 2
      %v1309 = vrot.slane %v1226, 4
      %v1310 = vrot.slane %v1227, 2
      %v1311 = vrot.slane %v1227, 4
      %v1312 = vrot.slane %v1227, 6
      %v1313 = vrot.slane %v1228, 2
      %v1314 = vrot.slane %v1228, 4
      %v1315 = vrot.slane %v1229, 2
      %v1316 = vrot.slane %v1229, 4
      %v1317 = vrot.slane %v1229, 6
      %v1318 = vrot.slane %v1230, 2
      %v1319 = vrot.slane %v1230, 4
      %v1320 = vrot.slane %v1231, 2
      %v1321 = vrot.slane %v1231, 4
      %v1322 = vrot.slane %v1231, 6
      %v1323 = vrot.slane %v1232, 2
      %v1324 = vrot.slane %v1232, 4
      %v1325 = vrot.slane %v1233, 2
      %v1326 = vrot.slane %v1233, 4
      %v1327 = vrot.slane %v1233, 6
      %v1328 = vrot.slane %v1234, 2
      %v1329 = vrot.slane %v1234, 4
      %v1330 = vrot.slane %v1235, 2
      %v1331 = vrot.slane %v1235, 4
      %v1332 = vrot.slane %v1235, 6
      %v1333 = vrot.slane %v1236, 2
      %v1334 = vrot.slane %v1236, 4
      %v1335 = vld [vmem:[%s1] sm:$0xff]
      %v1336 = vld [vmem:[%s1 + $0x8] sm:$0xff]
      %v1337 = vld [vmem:[%s1 + $0x10] sm:$0xff]
      %v1338 = vld [vmem:[%s1 + $0x18] sm:$0xff]
      %v1339 = vld [vmem:[%s1 + $0x20] sm:$0xf]
      %v1340 = vld [vmem:[%s2] sm:$0x1]
      %v1342 = vperm.slane %v1340, 0
      %1344 = vst [vmem:[#allocation1] ss:$4 sm:$0xff] %v1209
      %s1345 = scalar_lea.vmem [#allocation1], 1
      %1346 = vst [vmem:[%s1345] ss:$4 sm:$0xff] %v1265
      %s1347 = scalar_lea.vmem [#allocation1], 2
      %1348 = vst [vmem:[%s1347] ss:$4 sm:$0xff] %v1266
      %s1349 = scalar_lea.vmem [#allocation1], 3
      %1350 = vst [vmem:[%s1349] ss:$4 sm:$0xff] %v1267
      %s1351 = scalar_lea.vmem [#allocation1], 32
      %1352 = vst [vmem:[%s1351] ss:$4 sm:$0xff] %v1210
      %s1353 = scalar_lea.vmem [#allocation1], 33
      %1354 = vst [vmem:[%s1353] ss:$4 sm:$0xff] %v1268
      %s1355 = scalar_lea.vmem [#allocation1], 34
      %1356 = vst [vmem:[%s1355] ss:$4 sm:$0xff] %v1269
      %s1357 = scalar_lea.vmem [#allocation1], 35
      %1358 = vst [vmem:[%s1357] ss:$4 sm:$0xff] %v1211
      %v1359 = vld.sshfl [vmem:[#allocation1] sm:$0xff pattern:$0x73625140]
      %v1360 = vld.sshfl [vmem:[#allocation1 + $0x20] sm:$0xff pattern:$0x73625140]
      %1361 = vst [vmem:[#allocation1] ss:$4 sm:$0xff] %v1270
      %1362 = vst [vmem:[%s1345] ss:$4 sm:$0xff] %v1271
      %1363 = vst [vmem:[%s1347] ss:$4 sm:$0xff] %v1272
      %1364 = vst [vmem:[%s1349] ss:$4 sm:$0xff] %v1212
      %1365 = vst [vmem:[%s1351] ss:$4 sm:$0xff] %v1273
      %1366 = vst [vmem:[%s1353] ss:$4 sm:$0xff] %v1274
      %1367 = vst [vmem:[%s1355] ss:$4 sm:$0xff] %v1213
      %1368 = vst [vmem:[%s1357] ss:$4 sm:$0xff] %v1275
      %v1369 = vld.sshfl [vmem:[#allocation1] sm:$0xff pattern:$0x73625140]
      %v1370 = vld.sshfl [vmem:[#allocation1 + $0x20] sm:$0xff pattern:$0x73625140]
      %1371 = vst [vmem:[#allocation1] ss:$4 sm:$0xff] %v1276
      %1372 = vst [vmem:[%s1345] ss:$4 sm:$0xff] %v1277
      %1373 = vst [vmem:[%s1347] ss:$4 sm:$0xff] %v1214
      %1374 = vst [vmem:[%s1349] ss:$4 sm:$0xff] %v1278
      %1375 = vst [vmem:[%s1351] ss:$4 sm:$0xff] %v1279
      %1376 = vst [vmem:[%s1353] ss:$4 sm:$0xff] %v1215
      %1377 = vst [vmem:[%s1355] ss:$4 sm:$0xff] %v1280
      %1378 = vst [vmem:[%s1357] ss:$4 sm:$0xff] %v1281
      %v1379 = vld.sshfl [vmem:[#allocation1] sm:$0xff pattern:$0x73625140]
      %v1380 = vld.sshfl [vmem:[#allocation1 + $0x20] sm:$0xff pattern:$0x73625140]
      %1381 = vst [vmem:[#allocation1] ss:$4 sm:$0xff] %v1282
      %1382 = vst [vmem:[%s1345] ss:$4 sm:$0xff] %v1216
      %1383 = vst [vmem:[%s1347] ss:$4 sm:$0xff] %v1283
      %1384 = vst [vmem:[%s1349] ss:$4 sm:$0xff] %v1284
      %1385 = vst [vmem:[%s1351] ss:$4 sm:$0xff] %v1217
      %1386 = vst [vmem:[%s1353] ss:$4 sm:$0xff] %v1285
      %1387 = vst [vmem:[%s1355] ss:$4 sm:$0xff] %v1286
      %1388 = vst [vmem:[%s1357] ss:$4 sm:$0xff] %v1287
      %v1389 = vld.sshfl [vmem:[#allocation1] sm:$0xff pattern:$0x73625140]
      %v1390 = vld.sshfl [vmem:[#allocation1 + $0x20] sm:$0xff pattern:$0x73625140]
      %1391 = vst [vmem:[#allocation1] ss:$4 sm:$0xff] %v1218
      %1392 = vst [vmem:[%s1345] ss:$4 sm:$0xff] %v1288
      %1393 = vst [vmem:[%s1347] ss:$4 sm:$0xff] %v1289
      %1394 = vst [vmem:[%s1349] ss:$4 sm:$0xff] %v1219
      %1395 = vst [vmem:[%s1351] ss:$4 sm:$0xff] %v1290
      %1396 = vst [vmem:[%s1353] ss:$4 sm:$0xff] %v1291
      %1397 = vst [vmem:[%s1355] ss:$4 sm:$0xff] %v1292
      %1398 = vst [vmem:[%s1357] ss:$4 sm:$0xff] %v1220
      %v1399 = vld.sshfl [vmem:[#allocation1] sm:$0xff pattern:$0x73625140]
      %v1400 = vld.sshfl [vmem:[#allocation1 + $0x20] sm:$0xff pattern:$0x73625140]
      %1401 = vst [vmem:[#allocation1] ss:$4 sm:$0xff] %v1293
      %1402 = vst [vmem:[%s1345] ss:$4 sm:$0xff] %v1294
      %1403 = vst [vmem:[%s1347] ss:$4 sm:$0xff] %v1221
      %1404 = vst [vmem:[%s1349] ss:$4 sm:$0xff] %v1295
      %1405 = vst [vmem:[%s1351] ss:$4 sm:$0xff] %v1296
      %1406 = vst [vmem:[%s1353] ss:$4 sm:$0xff] %v1297
      %1407 = vst [vmem:[%s1355] ss:$4 sm:$0xff] %v1222
      %1408 = vst [vmem:[%s1357] ss:$4 sm:$0xff] %v1298
      %v1409 = vld.sshfl [vmem:[#allocation1] sm:$0xff pattern:$0x73625140]
      %v1410 = vld.sshfl [vmem:[#allocation1 + $0x20] sm:$0xff pattern:$0x73625140]
      %1411 = vst [vmem:[#allocation1] ss:$4 sm:$0xff] %v1299
      %1412 = vst [vmem:[%s1345] ss:$4 sm:$0xff] %v1223
      %1413 = vst [vmem:[%s1347] ss:$4 sm:$0xff] %v1300
      %1414 = vst [vmem:[%s1349] ss:$4 sm:$0xff] %v1301
      %1415 = vst [vmem:[%s1351] ss:$4 sm:$0xff] %v1302
      %1416 = vst [vmem:[%s1353] ss:$4 sm:$0xff] %v1224
      %1417 = vst [vmem:[%s1355] ss:$4 sm:$0xff] %v1303
      %1418 = vst [vmem:[%s1357] ss:$4 sm:$0xff] %v1304
      %v1419 = vld.sshfl [vmem:[#allocation1] sm:$0xff pattern:$0x73625140]
      %v1420 = vld.sshfl [vmem:[#allocation1 + $0x20] sm:$0xff pattern:$0x73625140]
      %1421 = vst [vmem:[#allocation1] ss:$4 sm:$0xff] %v1225
      %1422 = vst [vmem:[%s1345] ss:$4 sm:$0xff] %v1305
      %1423 = vst [vmem:[%s1347] ss:$4 sm:$0xff] %v1306
      %1424 = vst [vmem:[%s1349] ss:$4 sm:$0xff] %v1307
      %1425 = vst [vmem:[%s1351] ss:$4 sm:$0xff] %v1226
      %1426 = vst [vmem:[%s1353] ss:$4 sm:$0xff] %v1308
      %1427 = vst [vmem:[%s1355] ss:$4 sm:$0xff] %v1309
      %1428 = vst [vmem:[%s1357] ss:$4 sm:$0xff] %v1227
      %v1429 = vld.sshfl [vmem:[#allocation1] sm:$0xff pattern:$0x73625140]
      %v1430 = vld.sshfl [vmem:[#allocation1 + $0x20] sm:$0xff pattern:$0x73625140]
      %1431 = vst [vmem:[#allocation1] ss:$4 sm:$0xff] %v1310
      %1432 = vst [vmem:[%s1345] ss:$4 sm:$0xff] %v1311
      %1433 = vst [vmem:[%s1347] ss:$4 sm:$0xff] %v1312
      %1434 = vst [vmem:[%s1349] ss:$4 sm:$0xff] %v1228
      %1435 = vst [vmem:[%s1351] ss:$4 sm:$0xff] %v1313
      %1436 = vst [vmem:[%s1353] ss:$4 sm:$0xff] %v1314
      %1437 = vst [vmem:[%s1355] ss:$4 sm:$0xff] %v1229
      %1438 = vst [vmem:[%s1357] ss:$4 sm:$0xff] %v1315
      %v1439 = vld.sshfl [vmem:[#allocation1] sm:$0xff pattern:$0x73625140]
      %v1440 = vld.sshfl [vmem:[#allocation1 + $0x20] sm:$0xff pattern:$0x73625140]
      %1441 = vst [vmem:[#allocation1] ss:$4 sm:$0xff] %v1316
      %1442 = vst [vmem:[%s1345] ss:$4 sm:$0xff] %v1317
      %1443 = vst [vmem:[%s1347] ss:$4 sm:$0xff] %v1230
      %1444 = vst [vmem:[%s1349] ss:$4 sm:$0xff] %v1318
      %1445 = vst [vmem:[%s1351] ss:$4 sm:$0xff] %v1319
      %1446 = vst [vmem:[%s1353] ss:$4 sm:$0xff] %v1231
      %1447 = vst [vmem:[%s1355] ss:$4 sm:$0xff] %v1320
      %1448 = vst [vmem:[%s1357] ss:$4 sm:$0xff] %v1321
      %v1449 = vld.sshfl [vmem:[#allocation1] sm:$0xff pattern:$0x73625140]
      %v1450 = vld.sshfl [vmem:[#allocation1 + $0x20] sm:$0xff pattern:$0x73625140]
      %1451 = vst [vmem:[#allocation1] ss:$4 sm:$0xff] %v1322
      %1452 = vst [vmem:[%s1345] ss:$4 sm:$0xff] %v1232
      %1453 = vst [vmem:[%s1347] ss:$4 sm:$0xff] %v1323
      %1454 = vst [vmem:[%s1349] ss:$4 sm:$0xff] %v1324
      %1455 = vst [vmem:[%s1351] ss:$4 sm:$0xff] %v1233
      %1456 = vst [vmem:[%s1353] ss:$4 sm:$0xff] %v1325
      %1457 = vst [vmem:[%s1355] ss:$4 sm:$0xff] %v1326
      %1458 = vst [vmem:[%s1357] ss:$4 sm:$0xff] %v1327
      %v1459 = vld.sshfl [vmem:[#allocation1] sm:$0xff pattern:$0x73625140]
      %v1460 = vld.sshfl [vmem:[#allocation1 + $0x20] sm:$0xff pattern:$0x73625140]
      %1461 = vst [vmem:[#allocation1] ss:$4 sm:$0xff] %v1234
      %1462 = vst [vmem:[%s1345] ss:$4 sm:$0xff] %v1328
      %1463 = vst [vmem:[%s1347] ss:$4 sm:$0xff] %v1329
      %1464 = vst [vmem:[%s1349] ss:$4 sm:$0xff] %v1235
      %1465 = vst [vmem:[%s1351] ss:$4 sm:$0xff] %v1330
      %1466 = vst [vmem:[%s1353] ss:$4 sm:$0xff] %v1331
      %1467 = vst [vmem:[%s1355] ss:$4 sm:$0xff] %v1332
      %1468 = vst [vmem:[%s1357] ss:$4 sm:$0xff] %v1236
      %v1469 = vld.sshfl [vmem:[#allocation1] sm:$0xff pattern:$0x73625140]
      %v1470 = vld.sshfl [vmem:[#allocation1 + $0x20] sm:$0xff pattern:$0x73625140]
      %1471 = vst [vmem:[#allocation1] ss:$4 sm:$0xff] %v1333
      %1472 = vst [vmem:[%s1345] ss:$4 sm:$0xff] %v1334
      %v1473 = vld.sshfl [vmem:[#allocation1] sm:$0xff pattern:$0x73625140]
      %vm1474 = vcmask 293888
      %v1475 = vsel %vm1474, %v1359, 0
      %v1477 = vsel %vm1474, %v1360, 0
      %v1479 = vsel %vm1474, %v1369, 0
      %v1481 = vsel %vm1474, %v1370, 0
      %v1483 = vsel %vm1474, %v1379, 0
      %v1485 = vsel %vm1474, %v1380, 0
      %v1487 = vsel %vm1474, %v1389, 0
      %v1489 = vsel %vm1474, %v1390, 0
      %v1491 = vsel %vm1474, %v1399, 0
      %v1493 = vsel %vm1474, %v1400, 0
      %v1495 = vsel %vm1474, %v1409, 0
      %v1497 = vsel %vm1474, %v1410, 0
      %v1499 = vsel %vm1474, %v1419, 0
      %v1501 = vsel %vm1474, %v1420, 0
      %v1503 = vsel %vm1474, %v1429, 0
      %v1505 = vsel %vm1474, %v1430, 0
      %v1507 = vsel %vm1474, %v1439, 0
      %v1509 = vsel %vm1474, %v1440, 0
      %v1511 = vsel %vm1474, %v1449, 0
      %v1513 = vsel %vm1474, %v1450, 0
      %v1515 = vsel %vm1474, %v1459, 0
      %v1517 = vsel %vm1474, %v1460, 0
      %v1519 = vsel %vm1474, %v1469, 0
      %v1521 = vsel %vm1474, %v1470, 0
      %v1523 = vsel %vm1474, %v1473, 0
      %vm1525 = vcmask 1043456
      %v1527 = vsel %vm1525, %v1339, 0
      %1529 = vmatpush.msra.mxu0 0.0
      %1530 = vmatpush.msra.mxu0 0.0
      %1531 = vmatpush.msra.mxu0 0.0
      %1532 = vmatpush.msra.mxu0 0.0
      %1533 = vmatpush.msra.mxu0 0.0
      %1534 = vmatpush.msra.mxu0 0.0
      %1535 = vmatpush.msra.mxu0 0.0
      %1536 = vmatpush.msra.mxu0 0.0
      %1537 = vmatpush.msra.mxu0 0.0
      %1538 = vmatpush.msra.mxu0 0.0
      %1539 = vmatpush.msra.mxu0 0.0
      %1540 = vmatpush.msra.mxu0 %v1527
      %1541 = vmatpush.msra.mxu0 %v1338
      %1542 = vmatpush.msra.mxu0 %v1337
      %1543 = vmatpush.msra.mxu0 %v1336
      %1544 = vmatpush.msra.mxu0 %v1335
      %1545 = vmatmul.f32.gmra.mxu0 %v1475
      %v1546 = vpop.f32.mrf.mxu0
      %v1547 = vadd.f32 %v1342, %v1546
      %1548 = vmatmul.f32.gmra.mxu0 %v1477
      %v1549 = vpop.f32.mrf.mxu0
      %v1550 = vadd.f32 %v1342, %v1549
      %1551 = vmatmul.f32.gmra.mxu0 %v1479
      %v1552 = vpop.f32.mrf.mxu0
      %v1553 = vadd.f32 %v1342, %v1552
      %1554 = vmatmul.f32.gmra.mxu0 %v1481
      %v1555 = vpop.f32.mrf.mxu0
      %v1556 = vadd.f32 %v1342, %v1555
      %1557 = vmatmul.f32.gmra.mxu0 %v1483
      %v1558 = vpop.f32.mrf.mxu0
      %v1559 = vadd.f32 %v1342, %v1558
      %1560 = vmatmul.f32.gmra.mxu0 %v1485
      %v1561 = vpop.f32.mrf.mxu0
      %v1562 = vadd.f32 %v1342, %v1561
      %1563 = vmatmul.f32.gmra.mxu0 %v1487
      %v1564 = vpop.f32.mrf.mxu0
      %v1565 = vadd.f32 %v1342, %v1564
      %1566 = vmatmul.f32.gmra.mxu0 %v1489
      %v1567 = vpop.f32.mrf.mxu0
      %v1568 = vadd.f32 %v1342, %v1567
      %1569 = vmatmul.f32.gmra.mxu0 %v1491
      %v1570 = vpop.f32.mrf.mxu0
      %v1571 = vadd.f32 %v1342, %v1570
      %1572 = vmatmul.f32.gmra.mxu0 %v1493
      %v1573 = vpop.f32.mrf.mxu0
      %v1574 = vadd.f32 %v1342, %v1573
      %1575 = vmatmul.f32.gmra.mxu0 %v1495
      %v1576 = vpop.f32.mrf.mxu0
      %v1577 = vadd.f32 %v1342, %v1576
      %1578 = vmatmul.f32.gmra.mxu0 %v1497
      %v1579 = vpop.f32.mrf.mxu0
      %v1580 = vadd.f32 %v1342, %v1579
      %1581 = vmatmul.f32.gmra.mxu0 %v1499
      %v1582 = vpop.f32.mrf.mxu0
      %v1583 = vadd.f32 %v1342, %v1582
      %1584 = vmatmul.f32.gmra.mxu0 %v1501
      %v1585 = vpop.f32.mrf.mxu0
      %v1586 = vadd.f32 %v1342, %v1585
      %1587 = vmatmul.f32.gmra.mxu0 %v1503
      %v1588 = vpop.f32.mrf.mxu0
      %v1589 = vadd.f32 %v1342, %v1588
      %1590 = vmatmul.f32.gmra.mxu0 %v1505
      %v1591 = vpop.f32.mrf.mxu0
      %v1592 = vadd.f32 %v1342, %v1591
      %1593 = vmatmul.f32.gmra.mxu0 %v1507
      %v1594 = vpop.f32.mrf.mxu0
      %v1595 = vadd.f32 %v1342, %v1594
      %1596 = vmatmul.f32.gmra.mxu0 %v1509
      %v1597 = vpop.f32.mrf.mxu0
      %v1598 = vadd.f32 %v1342, %v1597
      %1599 = vmatmul.f32.gmra.mxu0 %v1511
      %v1600 = vpop.f32.mrf.mxu0
      %v1601 = vadd.f32 %v1342, %v1600
      %1602 = vmatmul.f32.gmra.mxu0 %v1513
      %v1603 = vpop.f32.mrf.mxu0
      %v1604 = vadd.f32 %v1342, %v1603
      %1605 = vmatmul.f32.gmra.mxu0 %v1515
      %v1606 = vpop.f32.mrf.mxu0
      %v1607 = vadd.f32 %v1342, %v1606
      %1608 = vmatmul.f32.gmra.mxu0 %v1517
      %v1609 = vpop.f32.mrf.mxu0
      %v1610 = vadd.f32 %v1342, %v1609
      %1611 = vmatmul.f32.gmra.mxu0 %v1519
      %v1612 = vpop.f32.mrf.mxu0
      %v1613 = vadd.f32 %v1342, %v1612
      %1614 = vmatmul.f32.gmra.mxu0 %v1521
      %v1615 = vpop.f32.mrf.mxu0
      %v1616 = vadd.f32 %v1342, %v1615
      %1617 = vmatmul.f32.gmra.mxu0 %v1523
      %v1618 = vpop.f32.mrf.mxu0
      %v1619 = vadd.f32 %v1342, %v1618
      %1620 = vdwg.mxu0
      %v1621 = vmax.f32 %v1547, 0.0
      %v1622 = vmax.f32 %v1550, 0.0
      %v1623 = vmax.f32 %v1553, 0.0
      %v1624 = vmax.f32 %v1556, 0.0
      %v1625 = vmax.f32 %v1559, 0.0
      %v1626 = vmax.f32 %v1562, 0.0
      %v1627 = vmax.f32 %v1565, 0.0
      %v1628 = vmax.f32 %v1568, 0.0
      %v1629 = vmax.f32 %v1571, 0.0
      %v1630 = vmax.f32 %v1574, 0.0
      %v1631 = vmax.f32 %v1577, 0.0
      %v1632 = vmax.f32 %v1580, 0.0
      %v1633 = vmax.f32 %v1583, 0.0
      %v1634 = vmax.f32 %v1586, 0.0
      %v1635 = vmax.f32 %v1589, 0.0
      %v1636 = vmax.f32 %v1592, 0.0
      %v1637 = vmax.f32 %v1595, 0.0
      %v1638 = vmax.f32 %v1598, 0.0
      %v1639 = vmax.f32 %v1601, 0.0
      %v1640 = vmax.f32 %v1604, 0.0
      %v1641 = vmax.f32 %v1607, 0.0
      %v1642 = vmax.f32 %v1610, 0.0
      %v1643 = vmax.f32 %v1613, 0.0
      %v1644 = vmax.f32 %v1616, 0.0
      %v1645 = vmax.f32 %v1619, 0.0
      %v1671 = vrot.slane %v1621, 2
      %v1672 = vrot.slane %v1621, 4
      %v1673 = vrot.slane %v1621, 6
      %v1674 = vrot.slane %v1622, 2
      %v1675 = vrot.slane %v1622, 4
      %v1676 = vrot.slane %v1622, 6
      %v1677 = vrot.slane %v1623, 2
      %v1678 = vrot.slane %v1623, 4
      %v1679 = vrot.slane %v1623, 6
      %v1680 = vrot.slane %v1624, 2
      %v1681 = vrot.slane %v1624, 4
      %v1682 = vrot.slane %v1624, 6
      %v1683 = vrot.slane %v1625, 2
      %v1684 = vrot.slane %v1625, 4
      %v1685 = vrot.slane %v1625, 6
      %v1686 = vrot.slane %v1626, 2
      %v1687 = vrot.slane %v1626, 4
      %v1688 = vrot.slane %v1626, 6
      %v1689 = vrot.slane %v1627, 2
      %v1690 = vrot.slane %v1627, 4
      %v1691 = vrot.slane %v1627, 6
      %v1692 = vrot.slane %v1628, 2
      %v1693 = vrot.slane %v1628, 4
      %v1694 = vrot.slane %v1628, 6
      %v1695 = vrot.slane %v1629, 2
      %v1696 = vrot.slane %v1629, 4
      %v1697 = vrot.slane %v1629, 6
      %v1698 = vrot.slane %v1630, 2
      %v1699 = vrot.slane %v1630, 4
      %v1700 = vrot.slane %v1630, 6
      %v1701 = vrot.slane %v1631, 2
      %v1702 = vrot.slane %v1631, 4
      %v1703 = vrot.slane %v1631, 6
      %v1704 = vrot.slane %v1632, 2
      %v1705 = vrot.slane %v1632, 4
      %v1706 = vrot.slane %v1632, 6
      %v1707 = vrot.slane %v1633, 2
      %v1708 = vrot.slane %v1633, 4
      %v1709 = vrot.slane %v1633, 6
      %v1710 = vrot.slane %v1634, 2
      %v1711 = vrot.slane %v1634, 4
      %v1712 = vrot.slane %v1634, 6
      %v1713 = vrot.slane %v1635, 2
      %v1714 = vrot.slane %v1635, 4
      %v1715 = vrot.slane %v1635, 6
      %v1716 = vrot.slane %v1636, 2
      %v1717 = vrot.slane %v1636, 4
      %v1718 = vrot.slane %v1636, 6
      %v1719 = vrot.slane %v1637, 2
      %v1720 = vrot.slane %v1637, 4
      %v1721 = vrot.slane %v1637, 6
      %v1722 = vrot.slane %v1638, 2
      %v1723 = vrot.slane %v1638, 4
      %v1724 = vrot.slane %v1638, 6
      %v1725 = vrot.slane %v1639, 2
      %v1726 = vrot.slane %v1639, 4
      %v1727 = vrot.slane %v1639, 6
      %v1728 = vrot.slane %v1640, 2
      %v1729 = vrot.slane %v1640, 4
      %v1730 = vrot.slane %v1640, 6
      %v1731 = vrot.slane %v1641, 2
      %v1732 = vrot.slane %v1641, 4
      %v1733 = vrot.slane %v1641, 6
      %v1734 = vrot.slane %v1642, 2
      %v1735 = vrot.slane %v1642, 4
      %v1736 = vrot.slane %v1642, 6
      %v1737 = vrot.slane %v1643, 2
      %v1738 = vrot.slane %v1643, 4
      %v1739 = vrot.slane %v1643, 6
      %v1740 = vrot.slane %v1644, 2
      %v1741 = vrot.slane %v1644, 4
      %v1742 = vrot.slane %v1644, 6
      %v1743 = vrot.slane %v1645, 2
      %1744 = vst [vmem:[#allocation1] ss:$4 sm:$0xff] %v1621
      %s1745 = scalar_lea.vmem [#allocation1], 1
      %1746 = vst [vmem:[%s1745] ss:$4 sm:$0xff] %v1671
      %s1747 = scalar_lea.vmem [#allocation1], 2
      %1748 = vst [vmem:[%s1747] ss:$4 sm:$0xff] %v1672
      %s1749 = scalar_lea.vmem [#allocation1], 3
      %1750 = vst [vmem:[%s1749] ss:$4 sm:$0xff] %v1673
      %s1751 = scalar_lea.vmem [#allocation1], 32
      %1752 = vst [vmem:[%s1751] ss:$4 sm:$0xff] %v1622
      %s1753 = scalar_lea.vmem [#allocation1], 33
      %1754 = vst [vmem:[%s1753] ss:$4 sm:$0xff] %v1674
      %s1755 = scalar_lea.vmem [#allocation1], 34
      %1756 = vst [vmem:[%s1755] ss:$4 sm:$0xff] %v1675
      %v1757 = vld.sshfl [vmem:[#allocation1] sm:$0xff pattern:$0x73625140]
      %v1758 = vld.sshfl [vmem:[#allocation1 + $0x20] sm:$0xff pattern:$0x73625140]
      %1759 = vst [vmem:[#allocation1] ss:$4 sm:$0xff] %v1676
      %1760 = vst [vmem:[%s1745] ss:$4 sm:$0xff] %v1623
      %1761 = vst [vmem:[%s1747] ss:$4 sm:$0xff] %v1677
      %1762 = vst [vmem:[%s1749] ss:$4 sm:$0xff] %v1678
      %1763 = vst [vmem:[%s1751] ss:$4 sm:$0xff] %v1679
      %1764 = vst [vmem:[%s1753] ss:$4 sm:$0xff] %v1624
      %1765 = vst [vmem:[%s1755] ss:$4 sm:$0xff] %v1680
      %v1766 = vld.sshfl [vmem:[#allocation1] sm:$0xff pattern:$0x73625140]
      %v1767 = vld.sshfl [vmem:[#allocation1 + $0x20] sm:$0xff pattern:$0x73625140]
      %1768 = vst [vmem:[#allocation1] ss:$4 sm:$0xff] %v1681
      %1769 = vst [vmem:[%s1745] ss:$4 sm:$0xff] %v1682
      %1770 = vst [vmem:[%s1747] ss:$4 sm:$0xff] %v1625
      %1771 = vst [vmem:[%s1749] ss:$4 sm:$0xff] %v1683
      %1772 = vst [vmem:[%s1751] ss:$4 sm:$0xff] %v1684
      %1773 = vst [vmem:[%s1753] ss:$4 sm:$0xff] %v1685
      %1774 = vst [vmem:[%s1755] ss:$4 sm:$0xff] %v1626
      %v1775 = vld.sshfl [vmem:[#allocation1] sm:$0xff pattern:$0x73625140]
      %v1776 = vld.sshfl [vmem:[#allocation1 + $0x20] sm:$0xff pattern:$0x73625140]
      %1777 = vst [vmem:[#allocation1] ss:$4 sm:$0xff] %v1686
      %1778 = vst [vmem:[%s1745] ss:$4 sm:$0xff] %v1687
      %1779 = vst [vmem:[%s1747] ss:$4 sm:$0xff] %v1688
      %1780 = vst [vmem:[%s1749] ss:$4 sm:$0xff] %v1627
      %1781 = vst [vmem:[%s1751] ss:$4 sm:$0xff] %v1689
      %1782 = vst [vmem:[%s1753] ss:$4 sm:$0xff] %v1690
      %1783 = vst [vmem:[%s1755] ss:$4 sm:$0xff] %v1691
      %v1784 = vld.sshfl [vmem:[#allocation1] sm:$0xff pattern:$0x73625140]
      %v1785 = vld.sshfl [vmem:[#allocation1 + $0x20] sm:$0xff pattern:$0x73625140]
      %1786 = vst [vmem:[#allocation1] ss:$4 sm:$0xff] %v1628
      %1787 = vst [vmem:[%s1745] ss:$4 sm:$0xff] %v1692
      %1788 = vst [vmem:[%s1747] ss:$4 sm:$0xff] %v1693
      %1789 = vst [vmem:[%s1749] ss:$4 sm:$0xff] %v1694
      %1790 = vst [vmem:[%s1751] ss:$4 sm:$0xff] %v1629
      %1791 = vst [vmem:[%s1753] ss:$4 sm:$0xff] %v1695
      %1792 = vst [vmem:[%s1755] ss:$4 sm:$0xff] %v1696
      %v1793 = vld.sshfl [vmem:[#allocation1] sm:$0xff pattern:$0x73625140]
      %v1794 = vld.sshfl [vmem:[#allocation1 + $0x20] sm:$0xff pattern:$0x73625140]
      %1795 = vst [vmem:[#allocation1] ss:$4 sm:$0xff] %v1697
      %1796 = vst [vmem:[%s1745] ss:$4 sm:$0xff] %v1630
      %1797 = vst [vmem:[%s1747] ss:$4 sm:$0xff] %v1698
      %1798 = vst [vmem:[%s1749] ss:$4 sm:$0xff] %v1699
      %1799 = vst [vmem:[%s1751] ss:$4 sm:$0xff] %v1700
      %1800 = vst [vmem:[%s1753] ss:$4 sm:$0xff] %v1631
      %1801 = vst [vmem:[%s1755] ss:$4 sm:$0xff] %v1701
      %v1802 = vld.sshfl [vmem:[#allocation1] sm:$0xff pattern:$0x73625140]
      %v1803 = vld.sshfl [vmem:[#allocation1 + $0x20] sm:$0xff pattern:$0x73625140]
      %1804 = vst [vmem:[#allocation1] ss:$4 sm:$0xff] %v1702
      %1805 = vst [vmem:[%s1745] ss:$4 sm:$0xff] %v1703
      %1806 = vst [vmem:[%s1747] ss:$4 sm:$0xff] %v1632
      %1807 = vst [vmem:[%s1749] ss:$4 sm:$0xff] %v1704
      %1808 = vst [vmem:[%s1751] ss:$4 sm:$0xff] %v1705
      %1809 = vst [vmem:[%s1753] ss:$4 sm:$0xff] %v1706
      %1810 = vst [vmem:[%s1755] ss:$4 sm:$0xff] %v1633
      %v1811 = vld.sshfl [vmem:[#allocation1] sm:$0xff pattern:$0x73625140]
      %v1812 = vld.sshfl [vmem:[#allocation1 + $0x20] sm:$0xff pattern:$0x73625140]
      %1813 = vst [vmem:[#allocation1] ss:$4 sm:$0xff] %v1707
      %1814 = vst [vmem:[%s1745] ss:$4 sm:$0xff] %v1708
      %1815 = vst [vmem:[%s1747] ss:$4 sm:$0xff] %v1709
      %1816 = vst [vmem:[%s1749] ss:$4 sm:$0xff] %v1634
      %1817 = vst [vmem:[%s1751] ss:$4 sm:$0xff] %v1710
      %1818 = vst [vmem:[%s1753] ss:$4 sm:$0xff] %v1711
      %1819 = vst [vmem:[%s1755] ss:$4 sm:$0xff] %v1712
      %v1820 = vld.sshfl [vmem:[#allocation1] sm:$0xff pattern:$0x73625140]
      %v1821 = vld.sshfl [vmem:[#allocation1 + $0x20] sm:$0xff pattern:$0x73625140]
      %1822 = vst [vmem:[#allocation1] ss:$4 sm:$0xff] %v1635
      %1823 = vst [vmem:[%s1745] ss:$4 sm:$0xff] %v1713
      %1824 = vst [vmem:[%s1747] ss:$4 sm:$0xff] %v1714
      %1825 = vst [vmem:[%s1749] ss:$4 sm:$0xff] %v1715
      %1826 = vst [vmem:[%s1751] ss:$4 sm:$0xff] %v1636
      %1827 = vst [vmem:[%s1753] ss:$4 sm:$0xff] %v1716
      %1828 = vst [vmem:[%s1755] ss:$4 sm:$0xff] %v1717
      %v1829 = vld.sshfl [vmem:[#allocation1] sm:$0xff pattern:$0x73625140]
      %v1830 = vld.sshfl [vmem:[#allocation1 + $0x20] sm:$0xff pattern:$0x73625140]
      %1831 = vst [vmem:[#allocation1] ss:$4 sm:$0xff] %v1718
      %1832 = vst [vmem:[%s1745] ss:$4 sm:$0xff] %v1637
      %1833 = vst [vmem:[%s1747] ss:$4 sm:$0xff] %v1719
      %1834 = vst [vmem:[%s1749] ss:$4 sm:$0xff] %v1720
      %1835 = vst [vmem:[%s1751] ss:$4 sm:$0xff] %v1721
      %1836 = vst [vmem:[%s1753] ss:$4 sm:$0xff] %v1638
      %1837 = vst [vmem:[%s1755] ss:$4 sm:$0xff] %v1722
      %v1838 = vld.sshfl [vmem:[#allocation1] sm:$0xff pattern:$0x73625140]
      %v1839 = vld.sshfl [vmem:[#allocation1 + $0x20] sm:$0xff pattern:$0x73625140]
      %1840 = vst [vmem:[#allocation1] ss:$4 sm:$0xff] %v1723
      %1841 = vst [vmem:[%s1745] ss:$4 sm:$0xff] %v1724
      %1842 = vst [vmem:[%s1747] ss:$4 sm:$0xff] %v1639
      %1843 = vst [vmem:[%s1749] ss:$4 sm:$0xff] %v1725
      %1844 = vst [vmem:[%s1751] ss:$4 sm:$0xff] %v1726
      %1845 = vst [vmem:[%s1753] ss:$4 sm:$0xff] %v1727
      %1846 = vst [vmem:[%s1755] ss:$4 sm:$0xff] %v1640
      %v1847 = vld.sshfl [vmem:[#allocation1] sm:$0xff pattern:$0x73625140]
      %v1848 = vld.sshfl [vmem:[#allocation1 + $0x20] sm:$0xff pattern:$0x73625140]
      %1849 = vst [vmem:[#allocation1] ss:$4 sm:$0xff] %v1728
      %1850 = vst [vmem:[%s1745] ss:$4 sm:$0xff] %v1729
      %1851 = vst [vmem:[%s1747] ss:$4 sm:$0xff] %v1730
      %1852 = vst [vmem:[%s1749] ss:$4 sm:$0xff] %v1641
      %1853 = vst [vmem:[%s1751] ss:$4 sm:$0xff] %v1731
      %1854 = vst [vmem:[%s1753] ss:$4 sm:$0xff] %v1732
      %1855 = vst [vmem:[%s1755] ss:$4 sm:$0xff] %v1733
      %v1856 = vld.sshfl [vmem:[#allocation1] sm:$0xff pattern:$0x73625140]
      %v1857 = vld.sshfl [vmem:[#allocation1 + $0x20] sm:$0xff pattern:$0x73625140]
      %1858 = vst [vmem:[#allocation1] ss:$4 sm:$0xff] %v1642
      %1859 = vst [vmem:[%s1745] ss:$4 sm:$0xff] %v1734
      %1860 = vst [vmem:[%s1747] ss:$4 sm:$0xff] %v1735
      %1861 = vst [vmem:[%s1749] ss:$4 sm:$0xff] %v1736
      %1862 = vst [vmem:[%s1751] ss:$4 sm:$0xff] %v1643
      %1863 = vst [vmem:[%s1753] ss:$4 sm:$0xff] %v1737
      %1864 = vst [vmem:[%s1755] ss:$4 sm:$0xff] %v1738
      %v1865 = vld.sshfl [vmem:[#allocation1] sm:$0xff pattern:$0x73625140]
      %v1866 = vld.sshfl [vmem:[#allocation1 + $0x20] sm:$0xff pattern:$0x73625140]
      %1867 = vst [vmem:[#allocation1] ss:$4 sm:$0xff] %v1739
      %1868 = vst [vmem:[%s1745] ss:$4 sm:$0xff] %v1644
      %1869 = vst [vmem:[%s1747] ss:$4 sm:$0xff] %v1740
      %1870 = vst [vmem:[%s1749] ss:$4 sm:$0xff] %v1741
      %1871 = vst [vmem:[%s1751] ss:$4 sm:$0xff] %v1742
      %1872 = vst [vmem:[%s1753] ss:$4 sm:$0xff] %v1645
      %1873 = vst [vmem:[%s1755] ss:$4 sm:$0xff] %v1743
      %v1874 = vld.sshfl [vmem:[#allocation1] sm:$0xff pattern:$0x73625140]
      %v1875 = vld.sshfl [vmem:[#allocation1 + $0x20] sm:$0xff pattern:$0x73625140]
      %1904 = vst.msk [vmem:[%s170] sm:$0xff] %vm1092, %v1757
      %vm1905 = vcmask 128000
      %1906 = vst.msk [vmem:[%s170 + $0x8] sm:$0x3f] %vm1905, %v1758
      %1907 = vst.msk [vmem:[%s170 + $0x10] sm:$0xff] %vm1092, %v1766
      %1908 = vst.msk [vmem:[%s170 + $0x18] sm:$0x3f] %vm1905, %v1767
      %1909 = vst.msk [vmem:[%s170 + $0x20] sm:$0xff] %vm1092, %v1775
      %1910 = vst.msk [vmem:[%s170 + $0x28] sm:$0x3f] %vm1905, %v1776
      %1911 = vst.msk [vmem:[%s170 + $0x30] sm:$0xff] %vm1092, %v1784
      %1912 = vst.msk [vmem:[%s170 + $0x38] sm:$0x3f] %vm1905, %v1785
      %1913 = vst.msk [vmem:[%s170 + $0x40] sm:$0xff] %vm1092, %v1793
      %1914 = vst.msk [vmem:[%s170 + $0x48] sm:$0x3f] %vm1905, %v1794
      %1915 = vst.msk [vmem:[%s170 + $0x50] sm:$0xff] %vm1092, %v1802
      %1916 = vst.msk [vmem:[%s170 + $0x58] sm:$0x3f] %vm1905, %v1803
      %1917 = vst.msk [vmem:[%s170 + $0x60] sm:$0xff] %vm1092, %v1811
      %1918 = vst.msk [vmem:[%s170 + $0x68] sm:$0x3f] %vm1905, %v1812
      %1919 = vst.msk [vmem:[%s170 + $0x70] sm:$0xff] %vm1092, %v1820
      %1920 = vst.msk [vmem:[%s170 + $0x78] sm:$0x3f] %vm1905, %v1821
      %1921 = vst.msk [vmem:[%s170 + $0x80] sm:$0xff] %vm1092, %v1829
      %1922 = vst.msk [vmem:[%s170 + $0x88] sm:$0x3f] %vm1905, %v1830
      %1923 = vst.msk [vmem:[%s170 + $0x90] sm:$0xff] %vm1092, %v1838
      %1924 = vst.msk [vmem:[%s170 + $0x98] sm:$0x3f] %vm1905, %v1839
      %1925 = vst.msk [vmem:[%s170 + $0xa0] sm:$0xff] %vm1092, %v1847
      %1926 = vst.msk [vmem:[%s170 + $0xa8] sm:$0x3f] %vm1905, %v1848
      %1927 = vst.msk [vmem:[%s170 + $0xb0] sm:$0xff] %vm1092, %v1856
      %1928 = vst.msk [vmem:[%s170 + $0xb8] sm:$0x3f] %vm1905, %v1857
      %1929 = vst.msk [vmem:[%s170 + $0xc0] sm:$0xff] %vm1092, %v1865
      %1930 = vst.msk [vmem:[%s170 + $0xc8] sm:$0x3f] %vm1905, %v1866
      %1931 = vst.msk [vmem:[%s170 + $0xd0] sm:$0xff] %vm1092, %v1874
      %1932 = vst.msk [vmem:[%s170 + $0xd8] sm:$0x3f] %vm1905, %v1875
      %p1933 = scmp.lt.s32.totalorder %s14, 1
      %s1934 = scalar_select %p1933, %s14, 1
      %s1935 = smul.addr %s1934, 28
      %s1936 = smul.addr %s1935, 8
      %s1937 = scalar_lea.vmem %s3, %s1936
      // Predicated region
      $region33: #{conv_model_forward.2} parent=31 // pred_check
        %p1938 = pneg %p100
      $region34: #{conv_model_forward.2} parent=31 // pred_check_branch
        %1940 = sbr.rel (%p1938) target = $region36
      $region35: #{conv_model_forward.2} parent=31 // pred_region
        _
      $region36: #{conv_model_forward.2} parent=31 // pred_fallthru
        _
    $region32: #{conv_model_forward.2} parent=5 // pred_fallthru
      _
    %p1941 = scmp.le.s32.totalorder 2, %s9
    // Predicated region
    $region37: #{conv_model_forward.2} parent=5 // pred_check
      %p1942 = pneg %p1941
    $region38: #{conv_model_forward.2} parent=5 // pred_check_branch
      %1944 = sbr.rel (%p1942) target = $region40
    $region39: #{conv_model_forward.2} parent=5 // pred_region
      %s1945 = ssub.s32 %s9, 2
      // Predicated region
      $region41: #{conv_model_forward.2} parent=39 // pred_check
        %p1946 = pneg %p106
      $region42: #{conv_model_forward.2} parent=39 // pred_check_branch
        %1948 = sbr.rel (%p1946) target = $region44
      $region43: #{conv_model_forward.2} parent=39 // pred_region
        %p1949 = scmp.lt.s32.totalorder %s15, 1
        %s1950 = scalar_select %p1949, %s15, 1
        %s1951 = smul.addr %s1950, 28
        %s1952 = smul.addr %s1951, 8
        %s1953 = scalar_lea.vmem %s3, %s1952
      $region44: #{conv_model_forward.2} parent=39 // pred_fallthru
        _
    $region40: #{conv_model_forward.2} parent=5 // pred_fallthru
      _
  $region6: #{conv_model_forward.2} parent=0 // loop_footer
    %s13 = sadd.s32 1, %s9
  $region7: #{conv_model_forward.2} parent=0 // loop_footer_branch
    %8 = sbr.rel target = $region3
  $region8: #{conv_model_forward.2} parent=0 // loop_exit
    _

</llo_original>
